<compile_context>
chip_gen: v7x
topology: tpu7x:2x2x1
jax: 0.10.0
libtpu: 0.0.40
codegen_flags: <defaults>
</compile_context>

<pallas_src>
import functools
import math

import jax
import jax.numpy as jnp
import numpy as np
from jax.experimental import pallas as pl
from jax.experimental.pallas import tpu as pltpu


def _round_up(x, m):
    return ((x + m - 1) // m) * m


# --------------------------- in-kernel helpers --------------------------------
def _p_model(h, pw1, pb1, pw2, pb2):
    hid = jnp.maximum(
        jnp.dot(h, pw1[...], preferred_element_type=jnp.float32) + pb1[...], 0.0)
    return jnp.dot(hid, pw2[...], preferred_element_type=jnp.float32) + pb2[...]


def _gru_gates(g, h_prev, H):
    # g columns packed as [r | z | n_x | n_h]; PyTorch GRUCell semantics.
    r = jax.nn.sigmoid(g[:, 0:H])
    z = jax.nn.sigmoid(g[:, H:2 * H])
    n = jnp.tanh(g[:, 2 * H:3 * H] + r * g[:, 3 * H:4 * H])
    return (1.0 - z) * n + z * h_prev


# ------------------------------ the fused kernel --------------------------------
def _forward_kernel(
        # scalar prefetch (SMEM)
        nsteps_ref, flags_ref,
        # inputs (VMEM, constant index_map except the last three)
        cov_ref, cw1, cb1, cw2, cb2,
        pw1, pb1, pw2, pb2,
        wgx, wgh, bg,
        wp0, wp1, wp2, wp3, bprep, eexp,
        wgdp, wgdm, wgdh, bgd,
        sel_ref, x_ref, m_ref,
        # outputs
        h_out, loss_out,
        # scratch
        h_sc, p_sc, loss_sc,
        *, D, H, impute, log_noise, mixing, pre_w):
    e = pl.program_id(0)
    last = pl.num_programs(0) - 1

    # ---- event 0: covariates_map -> h0, p_model -> p0, zero the loss accumulators ----
    @pl.when(e == 0)
    def _init():
        hc = jnp.maximum(
            jnp.dot(cov_ref[...], cw1[...], preferred_element_type=jnp.float32) + cb1[...],
            0.0)
        h0 = jnp.tanh(jnp.dot(hc, cw2[...], preferred_element_type=jnp.float32) + cb2[...])
        h_sc[...] = h0
        p_sc[...] = _p_model(h0, pw1, pb1, pw2, pb2)
        loss_sc[0] = jnp.float32(0.0)   # loss_1a (Gaussian, Bayes events)
        loss_sc[1] = jnp.float32(0.0)   # loss_1b (Gaussian, plain events)
        loss_sc[2] = jnp.float32(0.0)   # loss_2  (KL, Bayes events)

    # ---- Euler integration to this event's time: runtime trip-count fori_loop ----
    # Weights are loaded once per event and carried in vregs across the loop.
    WGH = wgh[...]
    BG = bg[...]
    PW1, PB1, PW2, PB2 = pw1[...], pb1[...], pw2[...], pb2[...]
    if impute:
        WGX = wgx[...]

    def step(_, carry):
        h, p = carry
        g = jnp.dot(h, WGH, preferred_element_type=jnp.float32) + BG
        if impute:
            g = g + jnp.dot(p, WGX, preferred_element_type=jnp.float32)
        # else: reference zeroes p -> the x matmul is compiled out entirely.
        h_new = _gru_gates(g, h, H)
        hid = jnp.maximum(jnp.dot(h_new, PW1, preferred_element_type=jnp.float32) + PB1, 0.0)
        p_new = jnp.dot(hid, PW2, preferred_element_type=jnp.float32) + PB2
        return h_new, p_new

    h, p = jax.lax.fori_loop(0, nsteps_ref[e], step, (h_sc[...], p_sc[...]))
    h_sc[...] = h
    p_sc[...] = p

    # ---- observation processing (p_to_pred + GaussianLoss, gather by one-hot matmul) ----
    sel = sel_ref[...]                                   # (No, B_pad)
    x = x_ref[...]                                       # (No, D)
    m = m_ref[...]                                       # (No, D)

    p_obs = jnp.dot(sel, p, preferred_element_type=jnp.float32)
    mean = p_obs[:, 0:D]
    logstd = p_obs[:, D:2 * D]
    x2 = jnp.where(jnp.isnan(x), mean, x)                # NaN imputation as in p_to_pred
    delta = x2 - mean
    dnorm = delta * jnp.exp(-logstd)
    gauss = 0.5 * jnp.sum((dnorm * dnorm + 2.0 * logstd) * m)

    is_bayes = flags_ref[e] != 0

    @pl.when(jnp.logical_not(is_bayes))
    def _plain():
        loss_sc[1] = loss_sc[1] + gauss

    @pl.when(is_bayes)
    def _bayes():
        loss_sc[0] = loss_sc[0] + gauss

        # GRUBayes prep: per-feature block-diagonal matmuls (no concat), then ReLU, mask.
        prep = jnp.maximum(
            jnp.dot(mean, wp0[...], preferred_element_type=jnp.float32)
            + jnp.dot(logstd, wp1[...], preferred_element_type=jnp.float32)
            + jnp.dot(delta, wp2[...], preferred_element_type=jnp.float32)
            + jnp.dot(dnorm, wp3[...], preferred_element_type=jnp.float32)
            + bprep[...], 0.0)                                           # (No, D*P)
        m_rep = jnp.dot(m, eexp[...], preferred_element_type=jnp.float32)
        gin = prep * m_rep

        # GRU-D cell on the gathered hidden rows (split weights -> no concat).
        h_obs = jnp.dot(sel, h, preferred_element_type=jnp.float32)
        g = (jnp.dot(gin, wgdp[...], preferred_element_type=jnp.float32)
             + jnp.dot(m, wgdm[...], preferred_element_type=jnp.float32)
             + jnp.dot(h_obs, wgdh[...], preferred_element_type=jnp.float32)
             + bgd[...])
        h_obs_new = _gru_gates(g, h_obs, H)

        # scatter temp[i_obs] = updated rows (transposed-contraction matmuls on sel)
        scat = jnp.einsum('ob,oh->bh', sel, h_obs_new,
                          preferred_element_type=jnp.float32)            # (B_pad, H)
        row_upd = jnp.einsum('ob,oc->bc', sel, jnp.ones_like(m[:, :1]),
                             preferred_element_type=jnp.float32)         # (B_pad, 1)
        h_new = h * (1.0 - row_upd) + scat
        p_new = _p_model(h_new, pw1, pb1, pw2, pb2)
        h_sc[...] = h_new
        p_sc[...] = p_new

        # re-predict + KL loss against obs_noise_std (reference gaussian_KL, no -0.5 term)
        p_obs2 = jnp.dot(sel, p_new, preferred_element_type=jnp.float32)
        mean2 = p_obs2[:, 0:D]
        logstd2 = p_obs2[:, D:2 * D]
        kl = (logstd2 - log_noise
              + (math.exp(2.0 * log_noise) + (x2 - mean2) ** 2)
              * 0.5 * jnp.exp(-2.0 * logstd2))
        loss_sc[2] = loss_sc[2] + jnp.sum(kl * m)

    # ---- finalize: write h once, emit losses + mixed total as SMEM scalars ----
    @pl.when(e == last)
    def _fin():
        h_out[...] = h_sc[...]
        l1a = loss_sc[0]
        l1b = loss_sc[1]
        l2 = loss_sc[2]
        loss_out[0] = l1a
        loss_out[1] = l1b
        loss_out[2] = l2
        loss_out[3] = pre_w * (l1a + mixing * l2) + l1b


# --------------------------- pallas_call wrapper -------------------------------
def _full_spec(shape):
    nd = len(shape)
    return pl.BlockSpec(shape, lambda e, ns, fl, _nd=nd: (0,) * _nd)


@functools.partial(jax.jit,
                   static_argnames=("impute", "log_noise", "mixing", "pre_w", "D", "H"))
def _fused_forward(nsteps, flags, cov, q, sel, X, M, *,
                   impute, log_noise, mixing, pre_w, D, H):
    E1, No, B_pad = sel.shape
    weights = (q["cov_w1"], q["cov_b1"], q["cov_w2"], q["cov_b2"],
               q["p_w1"], q["p_b1"], q["p_w2"], q["p_b2"],
               q["gru_wx"], q["gru_wh"], q["gru_b"],
               q["w_prep_0"], q["w_prep_1"], q["w_prep_2"], q["w_prep_3"],
               q["bias_prep_flat"], q["mask_expand"],
               q["grud_wp"], q["grud_wm"], q["grud_wh"], q["grud_b"])

    in_specs = ([_full_spec(cov.shape)]
                + [_full_spec(w.shape) for w in weights]
                + [pl.BlockSpec((None, No, B_pad), lambda e, ns, fl: (e, 0, 0)),
                   pl.BlockSpec((None, No, D), lambda e, ns, fl: (e, 0, 0)),
                   pl.BlockSpec((None, No, D), lambda e, ns, fl: (e, 0, 0))])

    grid_spec = pltpu.PrefetchScalarGridSpec(
        num_scalar_prefetch=2,
        grid=(E1,),
        in_specs=in_specs,
        out_specs=(pl.BlockSpec((B_pad, H), lambda e, ns, fl: (0, 0)),
                   pl.BlockSpec(memory_space=pltpu.MemorySpace.SMEM)),
        scratch_shapes=[pltpu.VMEM((B_pad, H), jnp.float32),
                        pltpu.VMEM((B_pad, 2 * D), jnp.float32),
                        pltpu.SMEM((3,), jnp.float32)])

    kernel = functools.partial(_forward_kernel, D=D, H=H, impute=impute,
                               log_noise=log_noise, mixing=mixing, pre_w=pre_w)

    return pl.pallas_call(
        kernel,
        grid_spec=grid_spec,
        out_shape=(jax.ShapeDtypeStruct((B_pad, H), jnp.float32),
                   jax.ShapeDtypeStruct((4,), jnp.float32)),
        compiler_params=pltpu.CompilerParams(dimension_semantics=("arbitrary",)),
    )(nsteps, flags, cov, *weights, sel, X, M)


# ---------------------------- parameter construction ----------------------------
def _xavier_uniform(key, fan_in, fan_out):
    limit = math.sqrt(6.0 / (fan_in + fan_out))
    return jax.random.uniform(key, (fan_in, fan_out), jnp.float32, -limit, limit)


def _gru_params(key, in_size, hidden):
    k = 1.0 / math.sqrt(hidden)
    k1, k2, k3, k4 = jax.random.split(key, 4)
    wih = jax.random.uniform(k1, (in_size, 3 * hidden), jnp.float32, -k, k)
    whh = jax.random.uniform(k2, (hidden, 3 * hidden), jnp.float32, -k, k)
    bih = jax.random.uniform(k3, (1, 3 * hidden), jnp.float32, -k, k)
    bhh = jax.random.uniform(k4, (1, 3 * hidden), jnp.float32, -k, k)
    return wih, whh, bih, bhh


def _split_packed_gru(wih, whh, bih, bhh):
    """PyTorch GRUCell weights -> split packed form:
       wx (in,4H), wh (H,4H) with columns [r | z | n_x | n_h], bias (1,4H)."""
    H = whh.shape[0]
    in_size = wih.shape[0]
    wx = jnp.concatenate([wih[:, :2 * H], wih[:, 2 * H:3 * H],
                          jnp.zeros((in_size, H), jnp.float32)], axis=1)
    wh = jnp.concatenate([whh[:, :2 * H], jnp.zeros((H, H), jnp.float32),
                          whh[:, 2 * H:3 * H]], axis=1)
    b = jnp.concatenate([bih[:, :2 * H] + bhh[:, :2 * H],
                         bih[:, 2 * H:3 * H], bhh[:, 2 * H:3 * H]], axis=1)
    return wx, wh, b


class Conf:
    def __init__(self):
        self.input_size = 3
        self.hidden_size = 32
        self.p_hidden_size = 16
        self.prep_hidden_size = 4
        self.cov_size = 5
        self.cov_hidden = 8
        self.dropout_rate = 0.0
        self.loss = "L2"
        self.impute = True
        self.mixing = 0.1
        self.pre_forecast_weight = 1.0
        self.obs_noise_std = 0.01


class DiscretizedGRU:
    def __init__(self, conf, key):
        self.conf = conf
        D, H = conf.input_size, conf.hidden_size
        PH, P = conf.p_hidden_size, conf.prep_hidden_size
        keys = jax.random.split(key, 10)
        q = {}
        # covariates_map (Linear -> ReLU -> Dropout(id) -> Linear -> Tanh)
        q["cov_w1"] = _xavier_uniform(keys[0], conf.cov_size, conf.cov_hidden)
        q["cov_b1"] = jnp.zeros((1, conf.cov_hidden), jnp.float32)
        q["cov_w2"] = _xavier_uniform(keys[1], conf.cov_hidden, H)
        q["cov_b2"] = jnp.zeros((1, H), jnp.float32)
        # p_model (Linear -> ReLU -> Dropout(id) -> Linear)
        q["p_w1"] = _xavier_uniform(keys[2], H, PH)
        q["p_b1"] = jnp.zeros((1, PH), jnp.float32)
        q["p_w2"] = _xavier_uniform(keys[3], PH, 2 * D)
        q["p_b2"] = jnp.zeros((1, 2 * D), jnp.float32)
        # main GRUCell(2D, H) -> split packed form (no in-kernel concat)
        wih, whh, bih, bhh = _gru_params(keys[4], 2 * D, H)
        q["gru_wx"], q["gru_wh"], q["gru_b"] = _split_packed_gru(wih, whh, bih, bhh)
        # GRUBayes GRUCell((P+1)*D, H): permute input rows to slab order [prep | mask],
        # then split into prep / mask / hidden weight blocks.
        wih_d, whh_d, bih_d, bhh_d = _gru_params(keys[5], (P + 1) * D, H)
        perm = ([d * (P + 1) + k for d in range(D) for k in range(P)]
                + [d * (P + 1) + P for d in range(D)])
        wih_d = wih_d[np.asarray(perm, np.int32), :]
        wxd, whd, bd = _split_packed_gru(wih_d, whh_d, bih_d, bhh_d)
        q["grud_wp"] = wxd[:D * P]
        q["grud_wm"] = wxd[D * P:]
        q["grud_wh"] = whd
        q["grud_b"] = bd
        # w_prep (D,4,P) -> one block-diagonal (D, D*P) matrix per feature; bias flattened.
        std = math.sqrt(2.0 / (4 + P))
        wp = np.asarray(std * jax.random.normal(keys[6], (D, 4, P), jnp.float32))
        for k in range(4):
            Wk = np.zeros((D, D * P), np.float32)
            for d in range(D):
                Wk[d, d * P:(d + 1) * P] = wp[d, k, :]
            q[f"w_prep_{k}"] = jnp.asarray(Wk)
        E_mat = np.zeros((D, D * P), np.float32)
        for d in range(D):
            E_mat[d, d * P:(d + 1) * P] = 1.0
        q["mask_expand"] = jnp.asarray(E_mat)
        q["bias_prep_flat"] = 0.1 + jnp.zeros((1, D * P), jnp.float32)
        self.params = q

    # ------------------------------- forward ---------------------------------
    def forward(self, times, time_ptr, X, M, obs_idx, dt, Tmax, cov, return_path=False):
        conf, q = self.conf, self.params
        assert conf.loss == "L2"           # TODO(synk): LaplaceLoss path not ported
        assert not return_path             # TODO(synk): return_path not ported
        D, H = conf.input_size, conf.hidden_size
        B = cov.shape[0]
        B_pad = _round_up(B, 8)
        E = len(times)
        assert len(times) + 1 == len(time_ptr)
        assert E == 0 or float(times[-1]) <= Tmax

        # ----- host-side schedule tables (exact replica of reference while-loops) -----
        nsteps = np.zeros(E + 1, np.int32)
        flags = np.zeros(E + 1, np.int32)
        counter, current_time = 0, 0.0
        for i in range(E):
            t = float(times[i])
            s = 0
            while current_time < t - 0.001 * dt:
                counter += 1
                current_time = counter * dt
                s += 1
            nsteps[i] = s
            flags[i] = 1 if t < 0.001 * dt else 0
        s = 0
        while current_time < Tmax - 0.001 * dt:
            counter += 1
            current_time = counter * dt
            s += 1
        nsteps[E] = s          # tail integration to Tmax (dummy event with zero mask)

        # ----- per-event observation slabs, padded to (No, 8-sublane) -----
        n_per_event = [int(time_ptr[i + 1]) - int(time_ptr[i]) for i in range(E)]
        No = _round_up(max(n_per_event + [1]), 8)
        sel = np.zeros((E + 1, No, B_pad), np.float32)
        Xe = np.zeros((E + 1, No, D), np.float32)
        Me = np.zeros((E + 1, No, D), np.float32)
        Xh = np.asarray(X, np.float32)
        Mh = np.asarray(M, np.float32)
        idx = np.asarray(obs_idx, np.int64)
        for i in range(E):
            s0, e0 = int(time_ptr[i]), int(time_ptr[i + 1])
            n = e0 - s0
            Xe[i, :n] = Xh[s0:e0]
            Me[i, :n] = Mh[s0:e0]
            for j in range(n):
                sel[i, j, int(idx[s0 + j])] = 1.0

        cov_p = np.zeros((B_pad, conf.cov_size), np.float32)
        cov_p[:B] = np.asarray(cov, np.float32)

        h_pad, losses = _fused_forward(
            jnp.asarray(nsteps), jnp.asarray(flags), jnp.asarray(cov_p), q,
            jnp.asarray(sel), jnp.asarray(Xe), jnp.asarray(Me),
            impute=bool(conf.impute),
            log_noise=float(math.log(conf.obs_noise_std)),
            mixing=float(conf.mixing),
            pre_w=float(conf.pre_forecast_weight),
            D=D, H=H)
        return h_pad[:B], losses[3]


# ----------------------------------- demo ----------------------------------------
if __name__ == "__main__":
    conf = Conf()
    key = jax.random.PRNGKey(0)
    kmodel, kcov, kX, kM = jax.random.split(key, 4)

    model = DiscretizedGRU(conf, kmodel)

    batch = 4
    cov = jax.random.normal(kcov, (batch, conf.cov_size), jnp.float32)

    # three observation times; the first (t=0) exercises the GRUBayes branch
    times = np.array([0.0, 0.3, 0.6], dtype=np.float64)
    time_ptr = np.array([0, 2, 4, 6], dtype=np.int32)
    obs_idx = np.array([0, 1, 1, 2, 0, 3], dtype=np.int32)
    dt = 0.1
    Tmax = 1.0

    X = jax.random.normal(kX, (6, conf.input_size), jnp.float32)
    M = (jax.random.uniform(kM, (6, conf.input_size)) > 0.3).astype(jnp.float32)
    # exercise the NaN-imputation path of p_to_pred at an unobserved, non-Bayes entry
    M = M.at[3, 1].set(0.0)
    X = X.at[3, 1].set(jnp.nan)

    h, loss = model.forward(times, time_ptr, X, M, obs_idx, dt, Tmax, cov)
    h = jax.block_until_ready(h)
    loss = jax.block_until_ready(loss)
    assert h.shape == (batch, conf.hidden_size)
    assert bool(jnp.isfinite(loss))

    # different dt -> different runtime step counts, SAME compiled kernel (no recompile)
    h2, loss2 = model.forward(times, time_ptr, X, M, obs_idx, 0.05, Tmax, cov)
    h2 = jax.block_until_ready(h2)
    loss2 = jax.block_until_ready(loss2)
    assert h2.shape == (batch, conf.hidden_size)
    assert bool(jnp.isfinite(loss2))

    print("KERNEL_OK")
</pallas_src>

<mosaic_0001>
module attributes {stable_mosaic.version = 11 : i64} {
  func.func @_forward_kernel(%arg0: i32, %arg1: memref<4xi32, #tpu.memory_space<smem>>, %arg2: memref<4xi32, #tpu.memory_space<smem>>, %arg3: memref<8x5xf32, #tpu.memory_space<vmem>>, %arg4: memref<5x8xf32, #tpu.memory_space<vmem>>, %arg5: memref<1x8xf32, #tpu.memory_space<vmem>>, %arg6: memref<8x32xf32, #tpu.memory_space<vmem>>, %arg7: memref<1x32xf32, #tpu.memory_space<vmem>>, %arg8: memref<32x16xf32, #tpu.memory_space<vmem>>, %arg9: memref<1x16xf32, #tpu.memory_space<vmem>>, %arg10: memref<16x6xf32, #tpu.memory_space<vmem>>, %arg11: memref<1x6xf32, #tpu.memory_space<vmem>>, %arg12: memref<6x128xf32, #tpu.memory_space<vmem>>, %arg13: memref<32x128xf32, #tpu.memory_space<vmem>>, %arg14: memref<1x128xf32, #tpu.memory_space<vmem>>, %arg15: memref<3x12xf32, #tpu.memory_space<vmem>>, %arg16: memref<3x12xf32, #tpu.memory_space<vmem>>, %arg17: memref<3x12xf32, #tpu.memory_space<vmem>>, %arg18: memref<3x12xf32, #tpu.memory_space<vmem>>, %arg19: memref<1x12xf32, #tpu.memory_space<vmem>>, %arg20: memref<3x12xf32, #tpu.memory_space<vmem>>, %arg21: memref<12x128xf32, #tpu.memory_space<vmem>>, %arg22: memref<3x128xf32, #tpu.memory_space<vmem>>, %arg23: memref<32x128xf32, #tpu.memory_space<vmem>>, %arg24: memref<1x128xf32, #tpu.memory_space<vmem>>, %arg25: memref<1x8x8xf32, #tpu.memory_space<vmem>>, %arg26: memref<1x8x3xf32, #tpu.memory_space<vmem>>, %arg27: memref<1x8x3xf32, #tpu.memory_space<vmem>>, %arg28: memref<8x32xf32, #tpu.memory_space<vmem>>, %arg29: memref<4xf32, #tpu.memory_space<smem>>, %arg30: memref<8x32xf32, #tpu.memory_space<vmem>>, %arg31: memref<8x6xf32, #tpu.memory_space<vmem>>, %arg32: memref<3xf32, #tpu.memory_space<smem>>) attributes {dimension_semantics = [#tpu.dimension_semantics<arbitrary>], iteration_bounds = array<i64: 4>, scalar_prefetch = 2 : i64, scratch_operands = 3 : i64, tpu.core_type = #tpu.core_type<tc>, window_params = [{pipeline_mode = #tpu.pipeline_mode<synchronous>, transform_indices = @transform_0, window_bounds = array<i64: 8, 5>}, {pipeline_mode = #tpu.pipeline_mode<synchronous>, transform_indices = @transform_1, window_bounds = array<i64: 5, 8>}, {pipeline_mode = #tpu.pipeline_mode<synchronous>, transform_indices = @transform_2, window_bounds = array<i64: 1, 8>}, {pipeline_mode = #tpu.pipeline_mode<synchronous>, transform_indices = @transform_3, window_bounds = array<i64: 8, 32>}, {pipeline_mode = #tpu.pipeline_mode<synchronous>, transform_indices = @transform_4, window_bounds = array<i64: 1, 32>}, {pipeline_mode = #tpu.pipeline_mode<synchronous>, transform_indices = @transform_5, window_bounds = array<i64: 32, 16>}, {pipeline_mode = #tpu.pipeline_mode<synchronous>, transform_indices = @transform_6, window_bounds = array<i64: 1, 16>}, {pipeline_mode = #tpu.pipeline_mode<synchronous>, transform_indices = @transform_7, window_bounds = array<i64: 16, 6>}, {pipeline_mode = #tpu.pipeline_mode<synchronous>, transform_indices = @transform_8, window_bounds = array<i64: 1, 6>}, {pipeline_mode = #tpu.pipeline_mode<synchronous>, transform_indices = @transform_9, window_bounds = array<i64: 6, 128>}, {pipeline_mode = #tpu.pipeline_mode<synchronous>, transform_indices = @transform_10, window_bounds = array<i64: 32, 128>}, {pipeline_mode = #tpu.pipeline_mode<synchronous>, transform_indices = @transform_11, window_bounds = array<i64: 1, 128>}, {pipeline_mode = #tpu.pipeline_mode<synchronous>, transform_indices = @transform_12, window_bounds = array<i64: 3, 12>}, {pipeline_mode = #tpu.pipeline_mode<synchronous>, transform_indices = @transform_13, window_bounds = array<i64: 3, 12>}, {pipeline_mode = #tpu.pipeline_mode<synchronous>, transform_indices = @transform_14, window_bounds = array<i64: 3, 12>}, {pipeline_mode = #tpu.pipeline_mode<synchronous>, transform_indices = @transform_15, window_bounds = array<i64: 3, 12>}, {pipeline_mode = #tpu.pipeline_mode<synchronous>, transform_indices = @transform_16, window_bounds = array<i64: 1, 12>}, {pipeline_mode = #tpu.pipeline_mode<synchronous>, transform_indices = @transform_17, window_bounds = array<i64: 3, 12>}, {pipeline_mode = #tpu.pipeline_mode<synchronous>, transform_indices = @transform_18, window_bounds = array<i64: 12, 128>}, {pipeline_mode = #tpu.pipeline_mode<synchronous>, transform_indices = @transform_19, window_bounds = array<i64: 3, 128>}, {pipeline_mode = #tpu.pipeline_mode<synchronous>, transform_indices = @transform_20, window_bounds = array<i64: 32, 128>}, {pipeline_mode = #tpu.pipeline_mode<synchronous>, transform_indices = @transform_21, window_bounds = array<i64: 1, 128>}, {transform_indices = @transform_22, window_bounds = array<i64: 1, 8, 8>}, {transform_indices = @transform_23, window_bounds = array<i64: 1, 8, 3>}, {transform_indices = @transform_24, window_bounds = array<i64: 1, 8, 3>}, {pipeline_mode = #tpu.pipeline_mode<synchronous>, transform_indices = @transform_25, window_bounds = array<i64: 8, 32>}, {transform_indices = @transform_26, window_bounds = array<i64: 4>}]} {
    %c0_i32 = arith.constant 0 : i32
    %0 = arith.cmpi eq, %arg0, %c0_i32 : i32
    %1 = arith.extui %0 : i1 to i32
    %c0_i32_0 = arith.constant 0 : i32
    %2 = arith.cmpi ne, %1, %c0_i32_0 : i32
    scf.if %2 {
      %c0_40 = arith.constant 0 : index
      %c0_41 = arith.constant 0 : index
      %56 = vector.load %arg3[%c0_40, %c0_41] : memref<8x5xf32, #tpu.memory_space<vmem>>, vector<8x5xf32>
      %c0_42 = arith.constant 0 : index
      %c0_43 = arith.constant 0 : index
      %57 = vector.load %arg4[%c0_42, %c0_43] : memref<5x8xf32, #tpu.memory_space<vmem>>, vector<5x8xf32>
      %cst_44 = arith.constant dense<0.000000e+00> : vector<8x8xf32>
      %58 = tpu.matmul %56, %57, %cst_44 {dimension_numbers = #tpu.dot_dimension_numbers<[1], [0], [0], [1], [0, 0, 1, 1], [], []>} : vector<8x5xf32>, vector<5x8xf32>, vector<8x8xf32> -> vector<8x8xf32>
      %c0_45 = arith.constant 0 : index
      %c0_46 = arith.constant 0 : index
      %59 = vector.load %arg5[%c0_45, %c0_46] : memref<1x8xf32, #tpu.memory_space<vmem>>, vector<1x8xf32>
      %60 = vector.broadcast %59 : vector<1x8xf32> to vector<8x8xf32>
      %61 = arith.addf %58, %60 : vector<8x8xf32>
      %cst_47 = arith.constant 0.000000e+00 : f32
      %62 = vector.broadcast %cst_47 : f32 to vector<8x8xf32>
      %63 = arith.maximumf %61, %62 : vector<8x8xf32>
      %c0_48 = arith.constant 0 : index
      %c0_49 = arith.constant 0 : index
      %64 = vector.load %arg6[%c0_48, %c0_49] : memref<8x32xf32, #tpu.memory_space<vmem>>, vector<8x32xf32>
      %cst_50 = arith.constant dense<0.000000e+00> : vector<8x32xf32>
      %65 = tpu.matmul %63, %64, %cst_50 {dimension_numbers = #tpu.dot_dimension_numbers<[1], [0], [0], [1], [0, 0, 1, 1], [], []>} : vector<8x8xf32>, vector<8x32xf32>, vector<8x32xf32> -> vector<8x32xf32>
      %c0_51 = arith.constant 0 : index
      %c0_52 = arith.constant 0 : index
      %66 = vector.load %arg7[%c0_51, %c0_52] : memref<1x32xf32, #tpu.memory_space<vmem>>, vector<1x32xf32>
      %67 = vector.broadcast %66 : vector<1x32xf32> to vector<8x32xf32>
      %68 = arith.addf %65, %67 : vector<8x32xf32>
      %69 = math.tanh %68 : vector<8x32xf32>
      %c0_53 = arith.constant 0 : index
      %c0_54 = arith.constant 0 : index
      %70 = vector.load %arg30[%c0_53, %c0_54] : memref<8x32xf32, #tpu.memory_space<vmem>>, vector<8x32xf32>
      tpu.vector_store %arg30[%c0_53, %c0_54], %69 {strides = array<i32>} : memref<8x32xf32, #tpu.memory_space<vmem>>, vector<8x32xf32>,
      %c0_55 = arith.constant 0 : index
      %c0_56 = arith.constant 0 : index
      %71 = vector.load %arg8[%c0_55, %c0_56] : memref<32x16xf32, #tpu.memory_space<vmem>>, vector<32x16xf32>
      %cst_57 = arith.constant dense<0.000000e+00> : vector<8x16xf32>
      %72 = tpu.matmul %69, %71, %cst_57 {dimension_numbers = #tpu.dot_dimension_numbers<[1], [0], [0], [1], [0, 0, 1, 1], [], []>} : vector<8x32xf32>, vector<32x16xf32>, vector<8x16xf32> -> vector<8x16xf32>
      %c0_58 = arith.constant 0 : index
      %c0_59 = arith.constant 0 : index
      %73 = vector.load %arg9[%c0_58, %c0_59] : memref<1x16xf32, #tpu.memory_space<vmem>>, vector<1x16xf32>
      %74 = vector.broadcast %73 : vector<1x16xf32> to vector<8x16xf32>
      %75 = arith.addf %72, %74 : vector<8x16xf32>
      %cst_60 = arith.constant 0.000000e+00 : f32
      %76 = vector.broadcast %cst_60 : f32 to vector<8x16xf32>
      %77 = arith.maximumf %75, %76 : vector<8x16xf32>
      %c0_61 = arith.constant 0 : index
      %c0_62 = arith.constant 0 : index
      %78 = vector.load %arg10[%c0_61, %c0_62] : memref<16x6xf32, #tpu.memory_space<vmem>>, vector<16x6xf32>
      %cst_63 = arith.constant dense<0.000000e+00> : vector<8x6xf32>
      %79 = tpu.matmul %77, %78, %cst_63 {dimension_numbers = #tpu.dot_dimension_numbers<[1], [0], [0], [1], [0, 0, 1, 1], [], []>} : vector<8x16xf32>, vector<16x6xf32>, vector<8x6xf32> -> vector<8x6xf32>
      %c0_64 = arith.constant 0 : index
      %c0_65 = arith.constant 0 : index
      %80 = vector.load %arg11[%c0_64, %c0_65] : memref<1x6xf32, #tpu.memory_space<vmem>>, vector<1x6xf32>
      %81 = vector.broadcast %80 : vector<1x6xf32> to vector<8x6xf32>
      %82 = arith.addf %79, %81 : vector<8x6xf32>
      %c0_66 = arith.constant 0 : index
      %c0_67 = arith.constant 0 : index
      %83 = vector.load %arg31[%c0_66, %c0_67] : memref<8x6xf32, #tpu.memory_space<vmem>>, vector<8x6xf32>
      tpu.vector_store %arg31[%c0_66, %c0_67], %82 {strides = array<i32>} : memref<8x6xf32, #tpu.memory_space<vmem>>, vector<8x6xf32>,
      %cst_68 = arith.constant 0.000000e+00 : f32
      %c0_69 = arith.constant 0 : index
      %84 = memref.load %arg32[%c0_69] : memref<3xf32, #tpu.memory_space<smem>>
      memref.store %cst_68, %arg32[%c0_69] : memref<3xf32, #tpu.memory_space<smem>>
      %cst_70 = arith.constant 0.000000e+00 : f32
      %c1 = arith.constant 1 : index
      %85 = memref.load %arg32[%c1] : memref<3xf32, #tpu.memory_space<smem>>
      memref.store %cst_70, %arg32[%c1] : memref<3xf32, #tpu.memory_space<smem>>
      %cst_71 = arith.constant 0.000000e+00 : f32
      %c2 = arith.constant 2 : index
      %86 = memref.load %arg32[%c2] : memref<3xf32, #tpu.memory_space<smem>>
      memref.store %cst_71, %arg32[%c2] : memref<3xf32, #tpu.memory_space<smem>>
    } else {
    }
    %c0 = arith.constant 0 : index
    %c0_1 = arith.constant 0 : index
    %3 = vector.load %arg13[%c0, %c0_1] : memref<32x128xf32, #tpu.memory_space<vmem>>, vector<32x128xf32>
    %c0_2 = arith.constant 0 : index
    %c0_3 = arith.constant 0 : index
    %4 = vector.load %arg14[%c0_2, %c0_3] : memref<1x128xf32, #tpu.memory_space<vmem>>, vector<1x128xf32>
    %c0_4 = arith.constant 0 : index
    %c0_5 = arith.constant 0 : index
    %5 = vector.load %arg8[%c0_4, %c0_5] : memref<32x16xf32, #tpu.memory_space<vmem>>, vector<32x16xf32>
    %c0_6 = arith.constant 0 : index
    %c0_7 = arith.constant 0 : index
    %6 = vector.load %arg9[%c0_6, %c0_7] : memref<1x16xf32, #tpu.memory_space<vmem>>, vector<1x16xf32>
    %c0_8 = arith.constant 0 : index
    %c0_9 = arith.constant 0 : index
    %7 = vector.load %arg10[%c0_8, %c0_9] : memref<16x6xf32, #tpu.memory_space<vmem>>, vector<16x6xf32>
    %c0_10 = arith.constant 0 : index
    %c0_11 = arith.constant 0 : index
    %8 = vector.load %arg11[%c0_10, %c0_11] : memref<1x6xf32, #tpu.memory_space<vmem>>, vector<1x6xf32>
    %c0_12 = arith.constant 0 : index
    %c0_13 = arith.constant 0 : index
    %9 = vector.load %arg12[%c0_12, %c0_13] : memref<6x128xf32, #tpu.memory_space<vmem>>, vector<6x128xf32>
    %10 = arith.index_cast %arg0 : i32 to index
    %11 = memref.load %arg1[%10] : memref<4xi32, #tpu.memory_space<smem>>
    %c0_14 = arith.constant 0 : index
    %c0_15 = arith.constant 0 : index
    %12 = vector.load %arg30[%c0_14, %c0_15] : memref<8x32xf32, #tpu.memory_space<vmem>>, vector<8x32xf32>
    %c0_16 = arith.constant 0 : index
    %c0_17 = arith.constant 0 : index
    %13 = vector.load %arg31[%c0_16, %c0_17] : memref<8x6xf32, #tpu.memory_space<vmem>>, vector<8x6xf32>
    %c0_i32_18 = arith.constant 0 : i32
    %14 = arith.subi %11, %c0_i32_18 : i32
    %15 = arith.addi %c0_i32_18, %14 : i32
    %c1_i32 = arith.constant 1 : i32
    %16:2 = scf.for %arg33 = %c0_i32_18 to %15 step %c1_i32 iter_args(%arg34 = %12, %arg35 = %13) -> (vector<8x32xf32>, vector<8x6xf32>)  : i32 {
      %cst_40 = arith.constant dense<0.000000e+00> : vector<8x128xf32>
      %56 = tpu.matmul %arg34, %3, %cst_40 {dimension_numbers = #tpu.dot_dimension_numbers<[1], [0], [0], [1], [0, 0, 1, 1], [], []>} : vector<8x32xf32>, vector<32x128xf32>, vector<8x128xf32> -> vector<8x128xf32>
      %57 = vector.broadcast %4 : vector<1x128xf32> to vector<8x128xf32>
      %58 = arith.addf %56, %57 : vector<8x128xf32>
      %cst_41 = arith.constant dense<0.000000e+00> : vector<8x128xf32>
      %59 = tpu.matmul %arg35, %9, %cst_41 {dimension_numbers = #tpu.dot_dimension_numbers<[1], [0], [0], [1], [0, 0, 1, 1], [], []>} : vector<8x6xf32>, vector<6x128xf32>, vector<8x128xf32> -> vector<8x128xf32>
      %60 = arith.addf %58, %59 : vector<8x128xf32>
      %61 = vector.extract_strided_slice %60 {offsets = [0, 0], sizes = [8, 32], strides = [1, 1]} : vector<8x128xf32> to vector<8x32xf32>
      %62 = arith.negf %61 : vector<8x32xf32>
      %63 = math.exp %62 : vector<8x32xf32>
      %cst_42 = arith.constant 1.000000e+00 : f32
      %64 = vector.broadcast %cst_42 : f32 to vector<8x32xf32>
      %65 = arith.addf %64, %63 : vector<8x32xf32>
      %66 = arith.divf %64, %65 : vector<8x32xf32>
      %67 = vector.extract_strided_slice %60 {offsets = [0, 32], sizes = [8, 32], strides = [1, 1]} : vector<8x128xf32> to vector<8x32xf32>
      %68 = arith.negf %67 : vector<8x32xf32>
      %69 = math.exp %68 : vector<8x32xf32>
      %cst_43 = arith.constant 1.000000e+00 : f32
      %70 = vector.broadcast %cst_43 : f32 to vector<8x32xf32>
      %71 = arith.addf %70, %69 : vector<8x32xf32>
      %72 = arith.divf %70, %71 : vector<8x32xf32>
      %73 = vector.extract_strided_slice %60 {offsets = [0, 64], sizes = [8, 32], strides = [1, 1]} : vector<8x128xf32> to vector<8x32xf32>
      %74 = vector.extract_strided_slice %60 {offsets = [0, 96], sizes = [8, 32], strides = [1, 1]} : vector<8x128xf32> to vector<8x32xf32>
      %75 = arith.mulf %66, %74 : vector<8x32xf32>
      %76 = arith.addf %73, %75 : vector<8x32xf32>
      %77 = math.tanh %76 : vector<8x32xf32>
      %cst_44 = arith.constant 1.000000e+00 : f32
      %78 = vector.broadcast %cst_44 : f32 to vector<8x32xf32>
      %79 = arith.subf %78, %72 : vector<8x32xf32>
      %80 = arith.mulf %79, %77 : vector<8x32xf32>
      %81 = arith.mulf %72, %arg34 : vector<8x32xf32>
      %82 = arith.addf %80, %81 : vector<8x32xf32>
      %cst_45 = arith.constant dense<0.000000e+00> : vector<8x16xf32>
      %83 = tpu.matmul %82, %5, %cst_45 {dimension_numbers = #tpu.dot_dimension_numbers<[1], [0], [0], [1], [0, 0, 1, 1], [], []>} : vector<8x32xf32>, vector<32x16xf32>, vector<8x16xf32> -> vector<8x16xf32>
      %84 = vector.broadcast %6 : vector<1x16xf32> to vector<8x16xf32>
      %85 = arith.addf %83, %84 : vector<8x16xf32>
      %cst_46 = arith.constant 0.000000e+00 : f32
      %86 = vector.broadcast %cst_46 : f32 to vector<8x16xf32>
      %87 = arith.maximumf %85, %86 : vector<8x16xf32>
      %cst_47 = arith.constant dense<0.000000e+00> : vector<8x6xf32>
      %88 = tpu.matmul %87, %7, %cst_47 {dimension_numbers = #tpu.dot_dimension_numbers<[1], [0], [0], [1], [0, 0, 1, 1], [], []>} : vector<8x16xf32>, vector<16x6xf32>, vector<8x6xf32> -> vector<8x6xf32>
      %89 = vector.broadcast %8 : vector<1x6xf32> to vector<8x6xf32>
      %90 = arith.addf %88, %89 : vector<8x6xf32>
      scf.yield %82, %90 : vector<8x32xf32>, vector<8x6xf32>
    }
    %c0_19 = arith.constant 0 : index
    %c0_20 = arith.constant 0 : index
    %17 = vector.load %arg30[%c0_19, %c0_20] : memref<8x32xf32, #tpu.memory_space<vmem>>, vector<8x32xf32>
    tpu.vector_store %arg30[%c0_19, %c0_20], %16#0 {strides = array<i32>} : memref<8x32xf32, #tpu.memory_space<vmem>>, vector<8x32xf32>,
    %c0_21 = arith.constant 0 : index
    %c0_22 = arith.constant 0 : index
    %18 = vector.load %arg31[%c0_21, %c0_22] : memref<8x6xf32, #tpu.memory_space<vmem>>, vector<8x6xf32>
    tpu.vector_store %arg31[%c0_21, %c0_22], %16#1 {strides = array<i32>} : memref<8x6xf32, #tpu.memory_space<vmem>>, vector<8x6xf32>,
    %c0_23 = arith.constant 0 : index
    %c0_24 = arith.constant 0 : index
    %c0_25 = arith.constant 0 : index
    %19 = vector.load %arg25[%c0_23, %c0_24, %c0_25] : memref<1x8x8xf32, #tpu.memory_space<vmem>>, vector<1x8x8xf32>
    %20 = vector.shape_cast %19 : vector<1x8x8xf32> to vector<8x8xf32>
    %c0_26 = arith.constant 0 : index
    %c0_27 = arith.constant 0 : index
    %c0_28 = arith.constant 0 : index
    %21 = vector.load %arg26[%c0_26, %c0_27, %c0_28] : memref<1x8x3xf32, #tpu.memory_space<vmem>>, vector<1x8x3xf32>
    %22 = vector.shape_cast %21 : vector<1x8x3xf32> to vector<8x3xf32>
    %c0_29 = arith.constant 0 : index
    %c0_30 = arith.constant 0 : index
    %c0_31 = arith.constant 0 : index
    %23 = vector.load %arg27[%c0_29, %c0_30, %c0_31] : memref<1x8x3xf32, #tpu.memory_space<vmem>>, vector<1x8x3xf32>
    %24 = vector.shape_cast %23 : vector<1x8x3xf32> to vector<8x3xf32>
    %cst = arith.constant dense<0.000000e+00> : vector<8x6xf32>
    %25 = tpu.matmul %20, %16#1, %cst {dimension_numbers = #tpu.dot_dimension_numbers<[1], [0], [0], [1], [0, 0, 1, 1], [], []>} : vector<8x8xf32>, vector<8x6xf32>, vector<8x6xf32> -> vector<8x6xf32>
    %26 = vector.extract_strided_slice %25 {offsets = [0, 0], sizes = [8, 3], strides = [1, 1]} : vector<8x6xf32> to vector<8x3xf32>
    %27 = vector.extract_strided_slice %25 {offsets = [0, 3], sizes = [8, 3], strides = [1, 1]} : vector<8x6xf32> to vector<8x3xf32>
    %28 = arith.cmpf one, %22, %22 : vector<8x3xf32>
    %29 = arith.select %28, %26, %22 : vector<8x3xi1>, vector<8x3xf32>
    %30 = arith.subf %29, %26 : vector<8x3xf32>
    %cst_32 = arith.constant 0.000000e+00 : f32
    %31 = vector.broadcast %cst_32 : f32 to vector<8x3xf32>
    %32 = arith.subf %31, %27 : vector<8x3xf32>
    %33 = math.exp %32 : vector<8x3xf32>
    %34 = arith.mulf %30, %33 : vector<8x3xf32>
    %35 = arith.mulf %34, %34 : vector<8x3xf32>
    %cst_33 = arith.constant 2.000000e+00 : f32
    %36 = vector.broadcast %cst_33 : f32 to vector<8x3xf32>
    %37 = arith.mulf %36, %27 : vector<8x3xf32>
    %38 = arith.addf %35, %37 : vector<8x3xf32>
    %39 = arith.mulf %38, %24 : vector<8x3xf32>
    %40 = vector.shape_cast %39 : vector<8x3xf32> to vector<1x8x3xf32>
    %cst_34 = arith.constant dense<0.000000e+00> : vector<1xf32>
    %41 = vector.multi_reduction <add>, %40, %cst_34 [1, 2] : vector<1x8x3xf32> to vector<1xf32>
    %42 = vector.shape_cast %41 : vector<1xf32> to vector<1x1x1xf32>
    %43 = vector.extract %42[0, 0, 0] : f32 from vector<1x1x1xf32>
    %cst_35 = arith.constant 5.000000e-01 : f32
    %44 = arith.mulf %cst_35, %43 : f32
    %45 = arith.index_cast %arg0 : i32 to index
    %46 = memref.load %arg2[%45] : memref<4xi32, #tpu.memory_space<smem>>
    %c0_i32_36 = arith.constant 0 : i32
    %47 = arith.cmpi ne, %46, %c0_i32_36 : i32
    %true = arith.constant true
    %48 = arith.xori %47, %true : i1
    %49 = arith.extui %48 : i1 to i32
    %c0_i32_37 = arith.constant 0 : i32
    %50 = arith.cmpi ne, %49, %c0_i32_37 : i32
    scf.if %50 {
      %c1 = arith.constant 1 : index
      %56 = memref.load %arg32[%c1] : memref<3xf32, #tpu.memory_space<smem>>
      %57 = arith.addf %56, %44 : f32
      %c1_40 = arith.constant 1 : index
      %58 = memref.load %arg32[%c1_40] : memref<3xf32, #tpu.memory_space<smem>>
      memref.store %57, %arg32[%c1_40] : memref<3xf32, #tpu.memory_space<smem>>
    } else {
    }
    %51 = arith.extui %47 : i1 to i32
    %c0_i32_38 = arith.constant 0 : i32
    %52 = arith.cmpi ne, %51, %c0_i32_38 : i32
    scf.if %52 {
      %c0_40 = arith.constant 0 : index
      %56 = memref.load %arg32[%c0_40] : memref<3xf32, #tpu.memory_space<smem>>
      %57 = arith.addf %56, %44 : f32
      %c0_41 = arith.constant 0 : index
      %58 = memref.load %arg32[%c0_41] : memref<3xf32, #tpu.memory_space<smem>>
      memref.store %57, %arg32[%c0_41] : memref<3xf32, #tpu.memory_space<smem>>
      %c0_42 = arith.constant 0 : index
      %c0_43 = arith.constant 0 : index
      %59 = vector.load %arg15[%c0_42, %c0_43] : memref<3x12xf32, #tpu.memory_space<vmem>>, vector<3x12xf32>
      %cst_44 = arith.constant dense<0.000000e+00> : vector<8x12xf32>
      %60 = tpu.matmul %26, %59, %cst_44 {dimension_numbers = #tpu.dot_dimension_numbers<[1], [0], [0], [1], [0, 0, 1, 1], [], []>} : vector<8x3xf32>, vector<3x12xf32>, vector<8x12xf32> -> vector<8x12xf32>
      %c0_45 = arith.constant 0 : index
      %c0_46 = arith.constant 0 : index
      %61 = vector.load %arg16[%c0_45, %c0_46] : memref<3x12xf32, #tpu.memory_space<vmem>>, vector<3x12xf32>
      %cst_47 = arith.constant dense<0.000000e+00> : vector<8x12xf32>
      %62 = tpu.matmul %27, %61, %cst_47 {dimension_numbers = #tpu.dot_dimension_numbers<[1], [0], [0], [1], [0, 0, 1, 1], [], []>} : vector<8x3xf32>, vector<3x12xf32>, vector<8x12xf32> -> vector<8x12xf32>
      %63 = arith.addf %60, %62 : vector<8x12xf32>
      %c0_48 = arith.constant 0 : index
      %c0_49 = arith.constant 0 : index
      %64 = vector.load %arg17[%c0_48, %c0_49] : memref<3x12xf32, #tpu.memory_space<vmem>>, vector<3x12xf32>
      %cst_50 = arith.constant dense<0.000000e+00> : vector<8x12xf32>
      %65 = tpu.matmul %30, %64, %cst_50 {dimension_numbers = #tpu.dot_dimension_numbers<[1], [0], [0], [1], [0, 0, 1, 1], [], []>} : vector<8x3xf32>, vector<3x12xf32>, vector<8x12xf32> -> vector<8x12xf32>
      %66 = arith.addf %63, %65 : vector<8x12xf32>
      %c0_51 = arith.constant 0 : index
      %c0_52 = arith.constant 0 : index
      %67 = vector.load %arg18[%c0_51, %c0_52] : memref<3x12xf32, #tpu.memory_space<vmem>>, vector<3x12xf32>
      %cst_53 = arith.constant dense<0.000000e+00> : vector<8x12xf32>
      %68 = tpu.matmul %34, %67, %cst_53 {dimension_numbers = #tpu.dot_dimension_numbers<[1], [0], [0], [1], [0, 0, 1, 1], [], []>} : vector<8x3xf32>, vector<3x12xf32>, vector<8x12xf32> -> vector<8x12xf32>
      %69 = arith.addf %66, %68 : vector<8x12xf32>
      %c0_54 = arith.constant 0 : index
      %c0_55 = arith.constant 0 : index
      %70 = vector.load %arg19[%c0_54, %c0_55] : memref<1x12xf32, #tpu.memory_space<vmem>>, vector<1x12xf32>
      %71 = vector.broadcast %70 : vector<1x12xf32> to vector<8x12xf32>
      %72 = arith.addf %69, %71 : vector<8x12xf32>
      %cst_56 = arith.constant 0.000000e+00 : f32
      %73 = vector.broadcast %cst_56 : f32 to vector<8x12xf32>
      %74 = arith.maximumf %72, %73 : vector<8x12xf32>
      %c0_57 = arith.constant 0 : index
      %c0_58 = arith.constant 0 : index
      %75 = vector.load %arg20[%c0_57, %c0_58] : memref<3x12xf32, #tpu.memory_space<vmem>>, vector<3x12xf32>
      %cst_59 = arith.constant dense<0.000000e+00> : vector<8x12xf32>
      %76 = tpu.matmul %24, %75, %cst_59 {dimension_numbers = #tpu.dot_dimension_numbers<[1], [0], [0], [1], [0, 0, 1, 1], [], []>} : vector<8x3xf32>, vector<3x12xf32>, vector<8x12xf32> -> vector<8x12xf32>
      %77 = arith.mulf %74, %76 : vector<8x12xf32>
      %cst_60 = arith.constant dense<0.000000e+00> : vector<8x32xf32>
      %78 = tpu.matmul %20, %16#0, %cst_60 {dimension_numbers = #tpu.dot_dimension_numbers<[1], [0], [0], [1], [0, 0, 1, 1], [], []>} : vector<8x8xf32>, vector<8x32xf32>, vector<8x32xf32> -> vector<8x32xf32>
      %c0_61 = arith.constant 0 : index
      %c0_62 = arith.constant 0 : index
      %79 = vector.load %arg21[%c0_61, %c0_62] : memref<12x128xf32, #tpu.memory_space<vmem>>, vector<12x128xf32>
      %cst_63 = arith.constant dense<0.000000e+00> : vector<8x128xf32>
      %80 = tpu.matmul %77, %79, %cst_63 {dimension_numbers = #tpu.dot_dimension_numbers<[1], [0], [0], [1], [0, 0, 1, 1], [], []>} : vector<8x12xf32>, vector<12x128xf32>, vector<8x128xf32> -> vector<8x128xf32>
      %c0_64 = arith.constant 0 : index
      %c0_65 = arith.constant 0 : index
      %81 = vector.load %arg22[%c0_64, %c0_65] : memref<3x128xf32, #tpu.memory_space<vmem>>, vector<3x128xf32>
      %cst_66 = arith.constant dense<0.000000e+00> : vector<8x128xf32>
      %82 = tpu.matmul %24, %81, %cst_66 {dimension_numbers = #tpu.dot_dimension_numbers<[1], [0], [0], [1], [0, 0, 1, 1], [], []>} : vector<8x3xf32>, vector<3x128xf32>, vector<8x128xf32> -> vector<8x128xf32>
      %83 = arith.addf %80, %82 : vector<8x128xf32>
      %c0_67 = arith.constant 0 : index
      %c0_68 = arith.constant 0 : index
      %84 = vector.load %arg23[%c0_67, %c0_68] : memref<32x128xf32, #tpu.memory_space<vmem>>, vector<32x128xf32>
      %cst_69 = arith.constant dense<0.000000e+00> : vector<8x128xf32>
      %85 = tpu.matmul %78, %84, %cst_69 {dimension_numbers = #tpu.dot_dimension_numbers<[1], [0], [0], [1], [0, 0, 1, 1], [], []>} : vector<8x32xf32>, vector<32x128xf32>, vector<8x128xf32> -> vector<8x128xf32>
      %86 = arith.addf %83, %85 : vector<8x128xf32>
      %c0_70 = arith.constant 0 : index
      %c0_71 = arith.constant 0 : index
      %87 = vector.load %arg24[%c0_70, %c0_71] : memref<1x128xf32, #tpu.memory_space<vmem>>, vector<1x128xf32>
      %88 = vector.broadcast %87 : vector<1x128xf32> to vector<8x128xf32>
      %89 = arith.addf %86, %88 : vector<8x128xf32>
      %90 = vector.extract_strided_slice %89 {offsets = [0, 0], sizes = [8, 32], strides = [1, 1]} : vector<8x128xf32> to vector<8x32xf32>
      %91 = arith.negf %90 : vector<8x32xf32>
      %92 = math.exp %91 : vector<8x32xf32>
      %cst_72 = arith.constant 1.000000e+00 : f32
      %93 = vector.broadcast %cst_72 : f32 to vector<8x32xf32>
      %94 = arith.addf %93, %92 : vector<8x32xf32>
      %95 = arith.divf %93, %94 : vector<8x32xf32>
      %96 = vector.extract_strided_slice %89 {offsets = [0, 32], sizes = [8, 32], strides = [1, 1]} : vector<8x128xf32> to vector<8x32xf32>
      %97 = arith.negf %96 : vector<8x32xf32>
      %98 = math.exp %97 : vector<8x32xf32>
      %cst_73 = arith.constant 1.000000e+00 : f32
      %99 = vector.broadcast %cst_73 : f32 to vector<8x32xf32>
      %100 = arith.addf %99, %98 : vector<8x32xf32>
      %101 = arith.divf %99, %100 : vector<8x32xf32>
      %102 = vector.extract_strided_slice %89 {offsets = [0, 64], sizes = [8, 32], strides = [1, 1]} : vector<8x128xf32> to vector<8x32xf32>
      %103 = vector.extract_strided_slice %89 {offsets = [0, 96], sizes = [8, 32], strides = [1, 1]} : vector<8x128xf32> to vector<8x32xf32>
      %104 = arith.mulf %95, %103 : vector<8x32xf32>
      %105 = arith.addf %102, %104 : vector<8x32xf32>
      %106 = math.tanh %105 : vector<8x32xf32>
      %cst_74 = arith.constant 1.000000e+00 : f32
      %107 = vector.broadcast %cst_74 : f32 to vector<8x32xf32>
      %108 = arith.subf %107, %101 : vector<8x32xf32>
      %109 = arith.mulf %108, %106 : vector<8x32xf32>
      %110 = arith.mulf %101, %78 : vector<8x32xf32>
      %111 = arith.addf %109, %110 : vector<8x32xf32>
      "tpu.trace_start"() <{level = 10 : i32, message = "ob,oh->bh"}> : () -> ()
      %cst_75 = arith.constant dense<0.000000e+00> : vector<8x32xf32>
      %112 = tpu.matmul %20, %111, %cst_75 {dimension_numbers = #tpu.dot_dimension_numbers<[0], [0], [1], [1], [0, 1, 1, 1], [], []>} : vector<8x8xf32>, vector<8x32xf32>, vector<8x32xf32> -> vector<8x32xf32>
      %cst_76 = arith.constant 1.000000e+00 : f32
      "tpu.trace_stop"() : () -> ()
      %113 = vector.broadcast %cst_76 : f32 to vector<8x1xf32>
      "tpu.trace_start"() <{level = 10 : i32, message = "ob,oc->bc"}> : () -> ()
      %cst_77 = arith.constant dense<0.000000e+00> : vector<8x1xf32>
      %114 = tpu.matmul %20, %113, %cst_77 {dimension_numbers = #tpu.dot_dimension_numbers<[0], [0], [1], [1], [0, 1, 1, 1], [], []>} : vector<8x8xf32>, vector<8x1xf32>, vector<8x1xf32> -> vector<8x1xf32>
      "tpu.trace_stop"() : () -> ()
      %cst_78 = arith.constant 1.000000e+00 : f32
      %115 = vector.broadcast %cst_78 : f32 to vector<8x1xf32>
      %116 = arith.subf %115, %114 : vector<8x1xf32>
      %117 = vector.broadcast %116 : vector<8x1xf32> to vector<8x32xf32>
      %118 = arith.mulf %16#0, %117 : vector<8x32xf32>
      %119 = arith.addf %118, %112 : vector<8x32xf32>
      %c0_79 = arith.constant 0 : index
      %c0_80 = arith.constant 0 : index
      %120 = vector.load %arg8[%c0_79, %c0_80] : memref<32x16xf32, #tpu.memory_space<vmem>>, vector<32x16xf32>
      %cst_81 = arith.constant dense<0.000000e+00> : vector<8x16xf32>
      %121 = tpu.matmul %119, %120, %cst_81 {dimension_numbers = #tpu.dot_dimension_numbers<[1], [0], [0], [1], [0, 0, 1, 1], [], []>} : vector<8x32xf32>, vector<32x16xf32>, vector<8x16xf32> -> vector<8x16xf32>
      %c0_82 = arith.constant 0 : index
      %c0_83 = arith.constant 0 : index
      %122 = vector.load %arg9[%c0_82, %c0_83] : memref<1x16xf32, #tpu.memory_space<vmem>>, vector<1x16xf32>
      %123 = vector.broadcast %122 : vector<1x16xf32> to vector<8x16xf32>
      %124 = arith.addf %121, %123 : vector<8x16xf32>
      %cst_84 = arith.constant 0.000000e+00 : f32
      %125 = vector.broadcast %cst_84 : f32 to vector<8x16xf32>
      %126 = arith.maximumf %124, %125 : vector<8x16xf32>
      %c0_85 = arith.constant 0 : index
      %c0_86 = arith.constant 0 : index
      %127 = vector.load %arg10[%c0_85, %c0_86] : memref<16x6xf32, #tpu.memory_space<vmem>>, vector<16x6xf32>
      %cst_87 = arith.constant dense<0.000000e+00> : vector<8x6xf32>
      %128 = tpu.matmul %126, %127, %cst_87 {dimension_numbers = #tpu.dot_dimension_numbers<[1], [0], [0], [1], [0, 0, 1, 1], [], []>} : vector<8x16xf32>, vector<16x6xf32>, vector<8x6xf32> -> vector<8x6xf32>
      %c0_88 = arith.constant 0 : index
      %c0_89 = arith.constant 0 : index
      %129 = vector.load %arg11[%c0_88, %c0_89] : memref<1x6xf32, #tpu.memory_space<vmem>>, vector<1x6xf32>
      %130 = vector.broadcast %129 : vector<1x6xf32> to vector<8x6xf32>
      %131 = arith.addf %128, %130 : vector<8x6xf32>
      %c0_90 = arith.constant 0 : index
      %c0_91 = arith.constant 0 : index
      %132 = vector.load %arg30[%c0_90, %c0_91] : memref<8x32xf32, #tpu.memory_space<vmem>>, vector<8x32xf32>
      tpu.vector_store %arg30[%c0_90, %c0_91], %119 {strides = array<i32>} : memref<8x32xf32, #tpu.memory_space<vmem>>, vector<8x32xf32>,
      %c0_92 = arith.constant 0 : index
      %c0_93 = arith.constant 0 : index
      %133 = vector.load %arg31[%c0_92, %c0_93] : memref<8x6xf32, #tpu.memory_space<vmem>>, vector<8x6xf32>
      tpu.vector_store %arg31[%c0_92, %c0_93], %131 {strides = array<i32>} : memref<8x6xf32, #tpu.memory_space<vmem>>, vector<8x6xf32>,
      %cst_94 = arith.constant dense<0.000000e+00> : vector<8x6xf32>
      %134 = tpu.matmul %20, %131, %cst_94 {dimension_numbers = #tpu.dot_dimension_numbers<[1], [0], [0], [1], [0, 0, 1, 1], [], []>} : vector<8x8xf32>, vector<8x6xf32>, vector<8x6xf32> -> vector<8x6xf32>
      %135 = vector.extract_strided_slice %134 {offsets = [0, 0], sizes = [8, 3], strides = [1, 1]} : vector<8x6xf32> to vector<8x3xf32>
      %136 = vector.extract_strided_slice %134 {offsets = [0, 3], sizes = [8, 3], strides = [1, 1]} : vector<8x6xf32> to vector<8x3xf32>
      %cst_95 = arith.constant -4.60517025 : f32
      %137 = vector.broadcast %cst_95 : f32 to vector<8x3xf32>
      %138 = arith.subf %136, %137 : vector<8x3xf32>
      %139 = arith.subf %29, %135 : vector<8x3xf32>
      %140 = arith.mulf %139, %139 : vector<8x3xf32>
      %cst_96 = arith.constant 9.99999974E-5 : f32
      %141 = vector.broadcast %cst_96 : f32 to vector<8x3xf32>
      %142 = arith.addf %141, %140 : vector<8x3xf32>
      %cst_97 = arith.constant 5.000000e-01 : f32
      %143 = vector.broadcast %cst_97 : f32 to vector<8x3xf32>
      %144 = arith.mulf %142, %143 : vector<8x3xf32>
      %cst_98 = arith.constant -2.000000e+00 : f32
      %145 = vector.broadcast %cst_98 : f32 to vector<8x3xf32>
      %146 = arith.mulf %145, %136 : vector<8x3xf32>
      %147 = math.exp %146 : vector<8x3xf32>
      %148 = arith.mulf %144, %147 : vector<8x3xf32>
      %149 = arith.addf %138, %148 : vector<8x3xf32>
      %c2 = arith.constant 2 : index
      %150 = memref.load %arg32[%c2] : memref<3xf32, #tpu.memory_space<smem>>
      %151 = arith.mulf %149, %24 : vector<8x3xf32>
      %152 = vector.shape_cast %151 : vector<8x3xf32> to vector<1x8x3xf32>
      %cst_99 = arith.constant dense<0.000000e+00> : vector<1xf32>
      %153 = vector.multi_reduction <add>, %152, %cst_99 [1, 2] : vector<1x8x3xf32> to vector<1xf32>
      %154 = vector.shape_cast %153 : vector<1xf32> to vector<1x1x1xf32>
      %155 = vector.extract %154[0, 0, 0] : f32 from vector<1x1x1xf32>
      %156 = arith.addf %150, %155 : f32
      %c2_100 = arith.constant 2 : index
      %157 = memref.load %arg32[%c2_100] : memref<3xf32, #tpu.memory_space<smem>>
      memref.store %156, %arg32[%c2_100] : memref<3xf32, #tpu.memory_space<smem>>
    } else {
    }
    %c3_i32 = arith.constant 3 : i32
    %53 = arith.cmpi eq, %arg0, %c3_i32 : i32
    %54 = arith.extui %53 : i1 to i32
    %c0_i32_39 = arith.constant 0 : i32
    %55 = arith.cmpi ne, %54, %c0_i32_39 : i32
    scf.if %55 {
      %c0_40 = arith.constant 0 : index
      %c0_41 = arith.constant 0 : index
      %56 = vector.load %arg30[%c0_40, %c0_41] : memref<8x32xf32, #tpu.memory_space<vmem>>, vector<8x32xf32>
      %c0_42 = arith.constant 0 : index
      %c0_43 = arith.constant 0 : index
      %57 = vector.load %arg28[%c0_42, %c0_43] : memref<8x32xf32, #tpu.memory_space<vmem>>, vector<8x32xf32>
      tpu.vector_store %arg28[%c0_42, %c0_43], %56 {strides = array<i32>} : memref<8x32xf32, #tpu.memory_space<vmem>>, vector<8x32xf32>,
      %c0_44 = arith.constant 0 : index
      %58 = memref.load %arg32[%c0_44] : memref<3xf32, #tpu.memory_space<smem>>
      %c1 = arith.constant 1 : index
      %59 = memref.load %arg32[%c1] : memref<3xf32, #tpu.memory_space<smem>>
      %c2 = arith.constant 2 : index
      %60 = memref.load %arg32[%c2] : memref<3xf32, #tpu.memory_space<smem>>
      %c0_45 = arith.constant 0 : index
      %61 = memref.load %arg29[%c0_45] : memref<4xf32, #tpu.memory_space<smem>>
      memref.store %58, %arg29[%c0_45] : memref<4xf32, #tpu.memory_space<smem>>
      %c1_46 = arith.constant 1 : index
      %62 = memref.load %arg29[%c1_46] : memref<4xf32, #tpu.memory_space<smem>>
      memref.store %59, %arg29[%c1_46] : memref<4xf32, #tpu.memory_space<smem>>
      %c2_47 = arith.constant 2 : index
      %63 = memref.load %arg29[%c2_47] : memref<4xf32, #tpu.memory_space<smem>>
      memref.store %60, %arg29[%c2_47] : memref<4xf32, #tpu.memory_space<smem>>
      %cst_48 = arith.constant 1.000000e-01 : f32
      %64 = arith.mulf %cst_48, %60 : f32
      %65 = arith.addf %58, %64 : f32
      %cst_49 = arith.constant 1.000000e+00 : f32
      %66 = arith.mulf %cst_49, %65 : f32
      %67 = arith.addf %66, %59 : f32
      %c3 = arith.constant 3 : index
      %68 = memref.load %arg29[%c3] : memref<4xf32, #tpu.memory_space<smem>>
      memref.store %67, %arg29[%c3] : memref<4xf32, #tpu.memory_space<smem>>
    } else {
    }
    return
  }
  func.func @transform_0(%arg0: i32, %arg1: memref<4xi32, #tpu.memory_space<smem>>, %arg2: memref<4xi32, #tpu.memory_space<smem>>) -> (i32, i32) {
    %c0_i32 = arith.constant 0 : i32
    %c0_i32_0 = arith.constant 0 : i32
    %c0_i32_1 = arith.constant 0 : i32
    return %c0_i32, %c0_i32_0 : i32, i32
  }
  func.func @transform_1(%arg0: i32, %arg1: memref<4xi32, #tpu.memory_space<smem>>, %arg2: memref<4xi32, #tpu.memory_space<smem>>) -> (i32, i32) {
    %c0_i32 = arith.constant 0 : i32
    %c0_i32_0 = arith.constant 0 : i32
    %c0_i32_1 = arith.constant 0 : i32
    return %c0_i32, %c0_i32_0 : i32, i32
  }
  func.func @transform_2(%arg0: i32, %arg1: memref<4xi32, #tpu.memory_space<smem>>, %arg2: memref<4xi32, #tpu.memory_space<smem>>) -> (i32, i32) {
    %c0_i32 = arith.constant 0 : i32
    %c0_i32_0 = arith.constant 0 : i32
    %c0_i32_1 = arith.constant 0 : i32
    return %c0_i32, %c0_i32_0 : i32, i32
  }
  func.func @transform_3(%arg0: i32, %arg1: memref<4xi32, #tpu.memory_space<smem>>, %arg2: memref<4xi32, #tpu.memory_space<smem>>) -> (i32, i32) {
    %c0_i32 = arith.constant 0 : i32
    %c0_i32_0 = arith.constant 0 : i32
    %c0_i32_1 = arith.constant 0 : i32
    return %c0_i32, %c0_i32_0 : i32, i32
  }
  func.func @transform_4(%arg0: i32, %arg1: memref<4xi32, #tpu.memory_space<smem>>, %arg2: memref<4xi32, #tpu.memory_space<smem>>) -> (i32, i32) {
    %c0_i32 = arith.constant 0 : i32
    %c0_i32_0 = arith.constant 0 : i32
    %c0_i32_1 = arith.constant 0 : i32
    return %c0_i32, %c0_i32_0 : i32, i32
  }
  func.func @transform_5(%arg0: i32, %arg1: memref<4xi32, #tpu.memory_space<smem>>, %arg2: memref<4xi32, #tpu.memory_space<smem>>) -> (i32, i32) {
    %c0_i32 = arith.constant 0 : i32
    %c0_i32_0 = arith.constant 0 : i32
    %c0_i32_1 = arith.constant 0 : i32
    return %c0_i32, %c0_i32_0 : i32, i32
  }
  func.func @transform_6(%arg0: i32, %arg1: memref<4xi32, #tpu.memory_space<smem>>, %arg2: memref<4xi32, #tpu.memory_space<smem>>) -> (i32, i32) {
    %c0_i32 = arith.constant 0 : i32
    %c0_i32_0 = arith.constant 0 : i32
    %c0_i32_1 = arith.constant 0 : i32
    return %c0_i32, %c0_i32_0 : i32, i32
  }
  func.func @transform_7(%arg0: i32, %arg1: memref<4xi32, #tpu.memory_space<smem>>, %arg2: memref<4xi32, #tpu.memory_space<smem>>) -> (i32, i32) {
    %c0_i32 = arith.constant 0 : i32
    %c0_i32_0 = arith.constant 0 : i32
    %c0_i32_1 = arith.constant 0 : i32
    return %c0_i32, %c0_i32_0 : i32, i32
  }
  func.func @transform_8(%arg0: i32, %arg1: memref<4xi32, #tpu.memory_space<smem>>, %arg2: memref<4xi32, #tpu.memory_space<smem>>) -> (i32, i32) {
    %c0_i32 = arith.constant 0 : i32
    %c0_i32_0 = arith.constant 0 : i32
    %c0_i32_1 = arith.constant 0 : i32
    return %c0_i32, %c0_i32_0 : i32, i32
  }
  func.func @transform_9(%arg0: i32, %arg1: memref<4xi32, #tpu.memory_space<smem>>, %arg2: memref<4xi32, #tpu.memory_space<smem>>) -> (i32, i32) {
    %c0_i32 = arith.constant 0 : i32
    %c0_i32_0 = arith.constant 0 : i32
    %c0_i32_1 = arith.constant 0 : i32
    return %c0_i32, %c0_i32_0 : i32, i32
  }
  func.func @transform_10(%arg0: i32, %arg1: memref<4xi32, #tpu.memory_space<smem>>, %arg2: memref<4xi32, #tpu.memory_space<smem>>) -> (i32, i32) {
    %c0_i32 = arith.constant 0 : i32
    %c0_i32_0 = arith.constant 0 : i32
    %c0_i32_1 = arith.constant 0 : i32
    return %c0_i32, %c0_i32_0 : i32, i32
  }
  func.func @transform_11(%arg0: i32, %arg1: memref<4xi32, #tpu.memory_space<smem>>, %arg2: memref<4xi32, #tpu.memory_space<smem>>) -> (i32, i32) {
    %c0_i32 = arith.constant 0 : i32
    %c0_i32_0 = arith.constant 0 : i32
    %c0_i32_1 = arith.constant 0 : i32
    return %c0_i32, %c0_i32_0 : i32, i32
  }
  func.func @transform_12(%arg0: i32, %arg1: memref<4xi32, #tpu.memory_space<smem>>, %arg2: memref<4xi32, #tpu.memory_space<smem>>) -> (i32, i32) {
    %c0_i32 = arith.constant 0 : i32
    %c0_i32_0 = arith.constant 0 : i32
    %c0_i32_1 = arith.constant 0 : i32
    return %c0_i32, %c0_i32_0 : i32, i32
  }
  func.func @transform_13(%arg0: i32, %arg1: memref<4xi32, #tpu.memory_space<smem>>, %arg2: memref<4xi32, #tpu.memory_space<smem>>) -> (i32, i32) {
    %c0_i32 = arith.constant 0 : i32
    %c0_i32_0 = arith.constant 0 : i32
    %c0_i32_1 = arith.constant 0 : i32
    return %c0_i32, %c0_i32_0 : i32, i32
  }
  func.func @transform_14(%arg0: i32, %arg1: memref<4xi32, #tpu.memory_space<smem>>, %arg2: memref<4xi32, #tpu.memory_space<smem>>) -> (i32, i32) {
    %c0_i32 = arith.constant 0 : i32
    %c0_i32_0 = arith.constant 0 : i32
    %c0_i32_1 = arith.constant 0 : i32
    return %c0_i32, %c0_i32_0 : i32, i32
  }
  func.func @transform_15(%arg0: i32, %arg1: memref<4xi32, #tpu.memory_space<smem>>, %arg2: memref<4xi32, #tpu.memory_space<smem>>) -> (i32, i32) {
    %c0_i32 = arith.constant 0 : i32
    %c0_i32_0 = arith.constant 0 : i32
    %c0_i32_1 = arith.constant 0 : i32
    return %c0_i32, %c0_i32_0 : i32, i32
  }
  func.func @transform_16(%arg0: i32, %arg1: memref<4xi32, #tpu.memory_space<smem>>, %arg2: memref<4xi32, #tpu.memory_space<smem>>) -> (i32, i32) {
    %c0_i32 = arith.constant 0 : i32
    %c0_i32_0 = arith.constant 0 : i32
    %c0_i32_1 = arith.constant 0 : i32
    return %c0_i32, %c0_i32_0 : i32, i32
  }
  func.func @transform_17(%arg0: i32, %arg1: memref<4xi32, #tpu.memory_space<smem>>, %arg2: memref<4xi32, #tpu.memory_space<smem>>) -> (i32, i32) {
    %c0_i32 = arith.constant 0 : i32
    %c0_i32_0 = arith.constant 0 : i32
    %c0_i32_1 = arith.constant 0 : i32
    return %c0_i32, %c0_i32_0 : i32, i32
  }
  func.func @transform_18(%arg0: i32, %arg1: memref<4xi32, #tpu.memory_space<smem>>, %arg2: memref<4xi32, #tpu.memory_space<smem>>) -> (i32, i32) {
    %c0_i32 = arith.constant 0 : i32
    %c0_i32_0 = arith.constant 0 : i32
    %c0_i32_1 = arith.constant 0 : i32
    return %c0_i32, %c0_i32_0 : i32, i32
  }
  func.func @transform_19(%arg0: i32, %arg1: memref<4xi32, #tpu.memory_space<smem>>, %arg2: memref<4xi32, #tpu.memory_space<smem>>) -> (i32, i32) {
    %c0_i32 = arith.constant 0 : i32
    %c0_i32_0 = arith.constant 0 : i32
    %c0_i32_1 = arith.constant 0 : i32
    return %c0_i32, %c0_i32_0 : i32, i32
  }
  func.func @transform_20(%arg0: i32, %arg1: memref<4xi32, #tpu.memory_space<smem>>, %arg2: memref<4xi32, #tpu.memory_space<smem>>) -> (i32, i32) {
    %c0_i32 = arith.constant 0 : i32
    %c0_i32_0 = arith.constant 0 : i32
    %c0_i32_1 = arith.constant 0 : i32
    return %c0_i32, %c0_i32_0 : i32, i32
  }
  func.func @transform_21(%arg0: i32, %arg1: memref<4xi32, #tpu.memory_space<smem>>, %arg2: memref<4xi32, #tpu.memory_space<smem>>) -> (i32, i32) {
    %c0_i32 = arith.constant 0 : i32
    %c0_i32_0 = arith.constant 0 : i32
    %c0_i32_1 = arith.constant 0 : i32
    return %c0_i32, %c0_i32_0 : i32, i32
  }
  func.func @transform_22(%arg0: i32, %arg1: memref<4xi32, #tpu.memory_space<smem>>, %arg2: memref<4xi32, #tpu.memory_space<smem>>) -> (i32, i32, i32) {
    %c0_i32 = arith.constant 0 : i32
    %c0_i32_0 = arith.constant 0 : i32
    %c0_i32_1 = arith.constant 0 : i32
    return %arg0, %c0_i32, %c0_i32_0 : i32, i32, i32
  }
  func.func @transform_23(%arg0: i32, %arg1: memref<4xi32, #tpu.memory_space<smem>>, %arg2: memref<4xi32, #tpu.memory_space<smem>>) -> (i32, i32, i32) {
    %c0_i32 = arith.constant 0 : i32
    %c0_i32_0 = arith.constant 0 : i32
    %c0_i32_1 = arith.constant 0 : i32
    return %arg0, %c0_i32, %c0_i32_0 : i32, i32, i32
  }
  func.func @transform_24(%arg0: i32, %arg1: memref<4xi32, #tpu.memory_space<smem>>, %arg2: memref<4xi32, #tpu.memory_space<smem>>) -> (i32, i32, i32) {
    %c0_i32 = arith.constant 0 : i32
    %c0_i32_0 = arith.constant 0 : i32
    %c0_i32_1 = arith.constant 0 : i32
    return %arg0, %c0_i32, %c0_i32_0 : i32, i32, i32
  }
  func.func @transform_25(%arg0: i32, %arg1: memref<4xi32, #tpu.memory_space<smem>>, %arg2: memref<4xi32, #tpu.memory_space<smem>>) -> (i32, i32) {
    %c0_i32 = arith.constant 0 : i32
    %c0_i32_0 = arith.constant 0 : i32
    %c0_i32_1 = arith.constant 0 : i32
    return %c0_i32, %c0_i32_0 : i32, i32
  }
  func.func @transform_26(%arg0: i32, %arg1: memref<4xi32, #tpu.memory_space<smem>>, %arg2: memref<4xi32, #tpu.memory_space<smem>>) -> i32 {
    %c0_i32 = arith.constant 0 : i32
    %c0_i32_0 = arith.constant 0 : i32
    return %c0_i32 : i32
  }
}

</mosaic_0001>

<llo_original>
// kernel: _fused_forward.1
$region0: #{_fused_forward.1}
  #allocation0 [shape = 'u32[]', space=smem, size = 0x4, offset = 0x4, fixed_abs, tag = 'smem constant byte address 0x4 - core index']
  #allocation1 [shape = 'u32[144,128]{1,0:T(1,128)}', space=vmem, size = 0x12000, scoped, tag = 'internal scratch']
  #allocation2 [shape = 'f32[8,32]{1,0:T(8,128)}', space=vmem, size = 0x1000, scoped, tag = 'scratch operand']
  #allocation3 [shape = 'f32[8,6]{1,0:T(8,128)}', space=vmem, size = 0x1000, scoped, tag = 'scratch operand']
  #allocation4 [shape = 'f32[3]{0:T(128)}', space=smem, size = 0x200, scoped, tag = 'scratch operand']
  #allocation5 [shape = 's32[1]{0}', space=sflag, size = 0x4, scoped, tag = 'scoped memory for _fused_forward.1']
  #allocation6 [shape = 'u8[512]{0}', space=smem, size = 0x200, scoped, tag = 'prefetched SMEM operand 0']
  #allocation7 [shape = 'u8[512]{0}', space=smem, size = 0x200, scoped, tag = 'prefetched SMEM operand 1']
  %s0 = inlined_call_operand.vmem [shape: s32[4], index: 0, kind: input, shape index: {}]
  %s1 = inlined_call_operand.hbm [shape: s32[4], index: 1, kind: input, shape index: {}]
  %s2 = inlined_call_operand.vmem [shape: f32[8,5], index: 2, kind: input, shape index: {}]
  %s3 = inlined_call_operand.vmem [shape: f32[5,8], index: 3, kind: input, shape index: {}]
  %s4 = inlined_call_operand.hbm [shape: f32[1,8], index: 4, kind: input, shape index: {}]
  %s5 = inlined_call_operand.vmem [shape: f32[8,32], index: 5, kind: input, shape index: {}]
  %s6 = inlined_call_operand.hbm [shape: f32[1,32], index: 6, kind: input, shape index: {}]
  %s7 = inlined_call_operand.vmem [shape: f32[32,16], index: 7, kind: input, shape index: {}]
  %s8 = inlined_call_operand.vmem [shape: f32[1,16], index: 8, kind: input, shape index: {}]
  %s9 = inlined_call_operand.vmem [shape: f32[16,6], index: 9, kind: input, shape index: {}]
  %s10 = inlined_call_operand.vmem [shape: f32[1,6], index: 10, kind: input, shape index: {}]
  %s11 = inlined_call_operand.vmem [shape: f32[6,128], index: 11, kind: input, shape index: {}]
  %s12 = inlined_call_operand.vmem [shape: f32[32,128], index: 12, kind: input, shape index: {}]
  %s13 = inlined_call_operand.hbm [shape: f32[1,128], index: 13, kind: input, shape index: {}]
  %s14 = inlined_call_operand.vmem [shape: f32[3,12], index: 14, kind: input, shape index: {}]
  %s15 = inlined_call_operand.vmem [shape: f32[3,12], index: 15, kind: input, shape index: {}]
  %s16 = inlined_call_operand.vmem [shape: f32[3,12], index: 16, kind: input, shape index: {}]
  %s17 = inlined_call_operand.vmem [shape: f32[3,12], index: 17, kind: input, shape index: {}]
  %s18 = inlined_call_operand.hbm [shape: f32[1,12], index: 18, kind: input, shape index: {}]
  %s19 = inlined_call_operand.vmem [shape: f32[3,12], index: 19, kind: input, shape index: {}]
  %s20 = inlined_call_operand.vmem [shape: f32[12,128], index: 20, kind: input, shape index: {}]
  %s21 = inlined_call_operand.hbm [shape: f32[3,128], index: 21, kind: input, shape index: {}]
  %s22 = inlined_call_operand.vmem [shape: f32[32,128], index: 22, kind: input, shape index: {}]
  %s23 = inlined_call_operand.hbm [shape: f32[1,128], index: 23, kind: input, shape index: {}]
  %s24 = inlined_call_operand.vmem [shape: f32[4,8,8], index: 24, kind: input, shape index: {}]
  %s25 = inlined_call_operand.vmem [shape: f32[4,8,3], index: 25, kind: input, shape index: {}]
  %s26 = inlined_call_operand.vmem [shape: f32[4,8,3], index: 26, kind: input, shape index: {}]
  %s27 = inlined_call_operand.hbm [shape: f32[8,32], index: 27, kind: output, shape index: {0}]
  %s28 = inlined_call_operand.hbm [shape: f32[4], index: 28, kind: output, shape index: {1}]
  %29 = xla_tuple %s27, %s28
  %s30 = sld [smem:[#allocation0]]
  $region188: #{_fused_forward.1} parent=0
    _
  %s32 = ssub.s32 1, %s30
  %s33 = scalar_select 0, %s32, %s30
  %s34 = sshll.u32 %s0, 4
  %s35 = int_to_ptr.vmem [resolvable:$true] %s34
  %37 = dma.vmem_to_smem %s35, 16, [#allocation6], [#allocation5]
  %39 = dma.hbm_to_smem %s1, 16, [#allocation7], [#allocation5]
  %40 = dma.done [#allocation5], 32
  %41 = sfence
  $region1: #{_fused_forward.1} parent=0
    #allocation8 [shape = 'u8[512]{0}', space=vmem, size = 0x400, scoped, tag = 'input window, operand 4, single buffered']
    #allocation9 [shape = 's32[2]{0}', space=sflag, size = 0x8, scoped, tag = 'scoped memory for _fused_forward.1']
    #allocation10 [shape = 's32[2]{0}', space=sflag, size = 0x8, scoped, tag = 'scoped memory for _fused_forward.1']
    #allocation11 [shape = 's32[2]{0}', space=sflag, size = 0x8, scoped, tag = 'scoped memory for _fused_forward.1']
    #allocation12 [shape = 'u8[512]{0}', space=vmem, size = 0x400, scoped, tag = 'input window, operand 6, single buffered']
    #allocation13 [shape = 's32[1]{0}', space=sflag, size = 0x4, scoped, tag = 'scoped memory for _fused_forward.1']
    #allocation14 [shape = 'u8[512]{0}', space=vmem, size = 0x400, scoped, tag = 'input window, operand 13, single buffered']
    #allocation15 [shape = 'u8[512]{0}', space=vmem, size = 0x400, scoped, tag = 'input window, operand 18, single buffered']
    #allocation16 [shape = 's32[1]{0}', space=sflag, size = 0x4, scoped, tag = 'scoped memory for _fused_forward.1']
    #allocation17 [shape = 'u8[2048]{0}', space=vmem, size = 0x800, scoped, tag = 'input window, operand 21, single buffered']
    #allocation18 [shape = 'u8[512]{0}', space=vmem, size = 0x400, scoped, tag = 'input window, operand 23, single buffered']
    #allocation19 [shape = 's32[1]{0}', space=sflag, size = 0x4, scoped, tag = 'scoped memory for _fused_forward.1']
    #allocation20 [shape = 'u8[4096]{0}', space=vmem, size = 0x1000, scoped, tag = 'output window, operand 0, single buffered']
    #allocation21 [shape = 'u8[512]{0}', space=smem, size = 0x200, scoped, tag = 'output window, operand 1, single buffered']
    %42 = vsyncpa [#allocation9], 0
    %43 = vsyncpa [#allocation13], 0
    %44 = vsyncpa [#allocation16], 0
    %45 = vsyncpa [#allocation19], 0
    %46 = vsyncpa [#allocation10], 0
    %47 = vsyncpa [#allocation11], 0
    loop: start=0, step=1, limit=6
    $region2: #{_fused_forward.1} parent=1 // loop_pre_header
      _
    $region3: #{_fused_forward.1} parent=1 // loop_header
      %s49 = sphi 0, %s53
      %p50 = scmp.ge.s32.totalorder %s49, 6
      %s57 = sphi 0, %s57
      %s59 = sphi 0, %s57
      %s60 = sphi 0, %s59
      %s74 = sphi 0, %s60
      %s78 = sphi 0, %s78
      %s80 = sphi 0, %s78
      %s81 = sphi 0, %s80
      %s95 = sphi 0, %s81
      %s99 = sphi 0, %s99
      %s101 = sphi 0, %s99
      %s102 = sphi 0, %s101
      %s116 = sphi 0, %s102
      %s120 = sphi 0, %s120
      %s122 = sphi 0, %s120
      %s123 = sphi 0, %s122
      %s137 = sphi 0, %s123
      %s141 = sphi 0, %s141
      %s143 = sphi 0, %s141
      %s144 = sphi 0, %s143
      %s158 = sphi 0, %s144
      %s162 = sphi 0, %s162
      %s164 = sphi 0, %s162
      %s165 = sphi 0, %s164
      %s179 = sphi 0, %s165
      %s183 = sphi 0, %s183
      %s185 = sphi 0, %s183
      %s186 = sphi 0, %s185
      %s200 = sphi 0, %s186
      %s204 = sphi 0, %s204
      %s206 = sphi 0, %s204
      %s207 = sphi 0, %s206
      %s221 = sphi 0, %s207
      %s225 = sphi 0, %s225
      %s227 = sphi 0, %s225
      %s228 = sphi 0, %s227
      %s242 = sphi 0, %s228
      %s246 = sphi 0, %s246
      %s248 = sphi 0, %s246
      %s249 = sphi 0, %s248
      %s263 = sphi 0, %s249
      %s267 = sphi 0, %s267
      %s269 = sphi 0, %s267
      %s270 = sphi 0, %s269
      %s284 = sphi 0, %s270
      %s288 = sphi 0, %s288
      %s290 = sphi 0, %s288
      %s291 = sphi 0, %s290
      %s305 = sphi 0, %s291
      %s309 = sphi 0, %s309
      %s311 = sphi 0, %s309
      %s312 = sphi 0, %s311
      %s326 = sphi 0, %s312
      %s330 = sphi 0, %s330
      %s332 = sphi 0, %s330
      %s333 = sphi 0, %s332
      %s347 = sphi 0, %s333
      %s351 = sphi 0, %s351
      %s353 = sphi 0, %s351
      %s354 = sphi 0, %s353
      %s368 = sphi 0, %s354
      %s372 = sphi 0, %s372
      %s374 = sphi 0, %s372
      %s375 = sphi 0, %s374
      %s389 = sphi 0, %s375
      %s393 = sphi 0, %s393
      %s395 = sphi 0, %s393
      %s396 = sphi 0, %s395
      %s410 = sphi 0, %s396
      %s414 = sphi 0, %s414
      %s416 = sphi 0, %s414
      %s417 = sphi 0, %s416
      %s431 = sphi 0, %s417
      %s435 = sphi 0, %s435
      %s437 = sphi 0, %s435
      %s438 = sphi 0, %s437
      %s452 = sphi 0, %s438
      %s456 = sphi 0, %s456
      %s458 = sphi 0, %s456
      %s459 = sphi 0, %s458
      %s473 = sphi 0, %s459
      %s477 = sphi 0, %s477
      %s479 = sphi 0, %s477
      %s480 = sphi 0, %s479
      %s494 = sphi 0, %s480
      %s498 = sphi 0, %s498
      %s500 = sphi 0, %s498
      %s501 = sphi 0, %s500
      %s515 = sphi 0, %s501
      %s521 = sphi 0, %s523
      %s524 = sphi 0, %s521
      %s525 = sphi 0, %s524
      %s541 = sphi 0, %s525
      %s547 = sphi 0, %s549
      %s550 = sphi 0, %s547
      %s551 = sphi 0, %s550
      %s567 = sphi 0, %s551
      %s573 = sphi 0, %s575
      %s576 = sphi 0, %s573
      %s577 = sphi 0, %s576
      %s593 = sphi 0, %s577
      %s597 = sphi 0, %s597
      %s599 = sphi 0, %s597
      %s600 = sphi 0, %s599
      %s614 = sphi 0, %s600
      %s618 = sphi 0, %s618
      %s620 = sphi 0, %s618
      %s621 = sphi 0, %s620
      %s635 = sphi 0, %s621
    $region4: #{_fused_forward.1} parent=1 // loop_header_branch
      %52 = sbr.rel (%p50) target = $region8
    $region5: #{_fused_forward.1} parent=1 // loop_body
      %s54 = ssub.s32 %s49, 1
      %s55 = ssub.s32 %s49, 2
      %s56 = sadd.s32 %s49, 1
      %s58 = sadd.s32 %s57, 1
      %p61 = scmp.eq.s32.totalorder %s49, 3
      %p62 = scmp.ne.s32.totalorder %s57, %s59
      %p63 = scmp.eq.s32.totalorder %s49, 0
      %p64 = por %p62, %p63
      %p65 = scmp.ne.s32.totalorder %s57, %s59
      %p66 = scmp.eq.s32.totalorder %s54, 3
      %p67 = por %p65, %p66
      %p68 = scmp.ne.s32.totalorder %s59, %s60
      %p69 = scmp.eq.s32.totalorder %s54, 0
      %p70 = por %p68, %p69
      %p71 = scmp.ne.s32.totalorder %s59, %s60
      %p72 = scmp.eq.s32.totalorder %s55, 3
      %p73 = por %p71, %p72
      %p75 = scmp.ne.s32.totalorder %s60, %s74
      %p76 = scmp.eq.s32.totalorder %s55, 0
      %p77 = por %p75, %p76
      %s79 = sadd.s32 %s78, 1
      %p82 = scmp.eq.s32.totalorder %s49, 3
      %p83 = scmp.ne.s32.totalorder %s78, %s80
      %p84 = scmp.eq.s32.totalorder %s49, 0
      %p85 = por %p83, %p84
      %p86 = scmp.ne.s32.totalorder %s78, %s80
      %p87 = scmp.eq.s32.totalorder %s54, 3
      %p88 = por %p86, %p87
      %p89 = scmp.ne.s32.totalorder %s80, %s81
      %p90 = scmp.eq.s32.totalorder %s54, 0
      %p91 = por %p89, %p90
      %p92 = scmp.ne.s32.totalorder %s80, %s81
      %p93 = scmp.eq.s32.totalorder %s55, 3
      %p94 = por %p92, %p93
      %p96 = scmp.ne.s32.totalorder %s81, %s95
      %p97 = scmp.eq.s32.totalorder %s55, 0
      %p98 = por %p96, %p97
      %s100 = sadd.s32 %s99, 1
      %p103 = scmp.eq.s32.totalorder %s49, 3
      %p104 = scmp.ne.s32.totalorder %s99, %s101
      %p105 = scmp.eq.s32.totalorder %s49, 0
      %p106 = por %p104, %p105
      %p107 = scmp.ne.s32.totalorder %s99, %s101
      %p108 = scmp.eq.s32.totalorder %s54, 3
      %p109 = por %p107, %p108
      %p110 = scmp.ne.s32.totalorder %s101, %s102
      %p111 = scmp.eq.s32.totalorder %s54, 0
      %p112 = por %p110, %p111
      %p113 = scmp.ne.s32.totalorder %s101, %s102
      %p114 = scmp.eq.s32.totalorder %s55, 3
      %p115 = por %p113, %p114
      %p117 = scmp.ne.s32.totalorder %s102, %s116
      %p118 = scmp.eq.s32.totalorder %s55, 0
      %p119 = por %p117, %p118
      %s121 = sadd.s32 %s120, 1
      %p124 = scmp.eq.s32.totalorder %s49, 3
      %p125 = scmp.ne.s32.totalorder %s120, %s122
      %p126 = scmp.eq.s32.totalorder %s49, 0
      %p127 = por %p125, %p126
      %p128 = scmp.ne.s32.totalorder %s120, %s122
      %p129 = scmp.eq.s32.totalorder %s54, 3
      %p130 = por %p128, %p129
      %p131 = scmp.ne.s32.totalorder %s122, %s123
      %p132 = scmp.eq.s32.totalorder %s54, 0
      %p133 = por %p131, %p132
      %p134 = scmp.ne.s32.totalorder %s122, %s123
      %p135 = scmp.eq.s32.totalorder %s55, 3
      %p136 = por %p134, %p135
      %p138 = scmp.ne.s32.totalorder %s123, %s137
      %p139 = scmp.eq.s32.totalorder %s55, 0
      %p140 = por %p138, %p139
      %s142 = sadd.s32 %s141, 1
      %p145 = scmp.eq.s32.totalorder %s49, 3
      %p146 = scmp.ne.s32.totalorder %s141, %s143
      %p147 = scmp.eq.s32.totalorder %s49, 0
      %p148 = por %p146, %p147
      %p149 = scmp.ne.s32.totalorder %s141, %s143
      %p150 = scmp.eq.s32.totalorder %s54, 3
      %p151 = por %p149, %p150
      %p152 = scmp.ne.s32.totalorder %s143, %s144
      %p153 = scmp.eq.s32.totalorder %s54, 0
      %p154 = por %p152, %p153
      %p155 = scmp.ne.s32.totalorder %s143, %s144
      %p156 = scmp.eq.s32.totalorder %s55, 3
      %p157 = por %p155, %p156
      %p159 = scmp.ne.s32.totalorder %s144, %s158
      %p160 = scmp.eq.s32.totalorder %s55, 0
      %p161 = por %p159, %p160
      %s163 = sadd.s32 %s162, 1
      %p166 = scmp.eq.s32.totalorder %s49, 3
      %p167 = scmp.ne.s32.totalorder %s162, %s164
      %p168 = scmp.eq.s32.totalorder %s49, 0
      %p169 = por %p167, %p168
      %p170 = scmp.ne.s32.totalorder %s162, %s164
      %p171 = scmp.eq.s32.totalorder %s54, 3
      %p172 = por %p170, %p171
      %p173 = scmp.ne.s32.totalorder %s164, %s165
      %p174 = scmp.eq.s32.totalorder %s54, 0
      %p175 = por %p173, %p174
      %p176 = scmp.ne.s32.totalorder %s164, %s165
      %p177 = scmp.eq.s32.totalorder %s55, 3
      %p178 = por %p176, %p177
      %p180 = scmp.ne.s32.totalorder %s165, %s179
      %p181 = scmp.eq.s32.totalorder %s55, 0
      %p182 = por %p180, %p181
      %s184 = sadd.s32 %s183, 1
      %p187 = scmp.eq.s32.totalorder %s49, 3
      %p188 = scmp.ne.s32.totalorder %s183, %s185
      %p189 = scmp.eq.s32.totalorder %s49, 0
      %p190 = por %p188, %p189
      %p191 = scmp.ne.s32.totalorder %s183, %s185
      %p192 = scmp.eq.s32.totalorder %s54, 3
      %p193 = por %p191, %p192
      %p194 = scmp.ne.s32.totalorder %s185, %s186
      %p195 = scmp.eq.s32.totalorder %s54, 0
      %p196 = por %p194, %p195
      %p197 = scmp.ne.s32.totalorder %s185, %s186
      %p198 = scmp.eq.s32.totalorder %s55, 3
      %p199 = por %p197, %p198
      %p201 = scmp.ne.s32.totalorder %s186, %s200
      %p202 = scmp.eq.s32.totalorder %s55, 0
      %p203 = por %p201, %p202
      %s205 = sadd.s32 %s204, 1
      %p208 = scmp.eq.s32.totalorder %s49, 3
      %p209 = scmp.ne.s32.totalorder %s204, %s206
      %p210 = scmp.eq.s32.totalorder %s49, 0
      %p211 = por %p209, %p210
      %p212 = scmp.ne.s32.totalorder %s204, %s206
      %p213 = scmp.eq.s32.totalorder %s54, 3
      %p214 = por %p212, %p213
      %p215 = scmp.ne.s32.totalorder %s206, %s207
      %p216 = scmp.eq.s32.totalorder %s54, 0
      %p217 = por %p215, %p216
      %p218 = scmp.ne.s32.totalorder %s206, %s207
      %p219 = scmp.eq.s32.totalorder %s55, 3
      %p220 = por %p218, %p219
      %p222 = scmp.ne.s32.totalorder %s207, %s221
      %p223 = scmp.eq.s32.totalorder %s55, 0
      %p224 = por %p222, %p223
      %s226 = sadd.s32 %s225, 1
      %p229 = scmp.eq.s32.totalorder %s49, 3
      %p230 = scmp.ne.s32.totalorder %s225, %s227
      %p231 = scmp.eq.s32.totalorder %s49, 0
      %p232 = por %p230, %p231
      %p233 = scmp.ne.s32.totalorder %s225, %s227
      %p234 = scmp.eq.s32.totalorder %s54, 3
      %p235 = por %p233, %p234
      %p236 = scmp.ne.s32.totalorder %s227, %s228
      %p237 = scmp.eq.s32.totalorder %s54, 0
      %p238 = por %p236, %p237
      %p239 = scmp.ne.s32.totalorder %s227, %s228
      %p240 = scmp.eq.s32.totalorder %s55, 3
      %p241 = por %p239, %p240
      %p243 = scmp.ne.s32.totalorder %s228, %s242
      %p244 = scmp.eq.s32.totalorder %s55, 0
      %p245 = por %p243, %p244
      %s247 = sadd.s32 %s246, 1
      %p250 = scmp.eq.s32.totalorder %s49, 3
      %p251 = scmp.ne.s32.totalorder %s246, %s248
      %p252 = scmp.eq.s32.totalorder %s49, 0
      %p253 = por %p251, %p252
      %p254 = scmp.ne.s32.totalorder %s246, %s248
      %p255 = scmp.eq.s32.totalorder %s54, 3
      %p256 = por %p254, %p255
      %p257 = scmp.ne.s32.totalorder %s248, %s249
      %p258 = scmp.eq.s32.totalorder %s54, 0
      %p259 = por %p257, %p258
      %p260 = scmp.ne.s32.totalorder %s248, %s249
      %p261 = scmp.eq.s32.totalorder %s55, 3
      %p262 = por %p260, %p261
      %p264 = scmp.ne.s32.totalorder %s249, %s263
      %p265 = scmp.eq.s32.totalorder %s55, 0
      %p266 = por %p264, %p265
      %s268 = sadd.s32 %s267, 1
      %p271 = scmp.eq.s32.totalorder %s49, 3
      %p272 = scmp.ne.s32.totalorder %s267, %s269
      %p273 = scmp.eq.s32.totalorder %s49, 0
      %p274 = por %p272, %p273
      %p275 = scmp.ne.s32.totalorder %s267, %s269
      %p276 = scmp.eq.s32.totalorder %s54, 3
      %p277 = por %p275, %p276
      %p278 = scmp.ne.s32.totalorder %s269, %s270
      %p279 = scmp.eq.s32.totalorder %s54, 0
      %p280 = por %p278, %p279
      %p281 = scmp.ne.s32.totalorder %s269, %s270
      %p282 = scmp.eq.s32.totalorder %s55, 3
      %p283 = por %p281, %p282
      %p285 = scmp.ne.s32.totalorder %s270, %s284
      %p286 = scmp.eq.s32.totalorder %s55, 0
      %p287 = por %p285, %p286
      %s289 = sadd.s32 %s288, 1
      %p292 = scmp.eq.s32.totalorder %s49, 3
      %p293 = scmp.ne.s32.totalorder %s288, %s290
      %p294 = scmp.eq.s32.totalorder %s49, 0
      %p295 = por %p293, %p294
      %p296 = scmp.ne.s32.totalorder %s288, %s290
      %p297 = scmp.eq.s32.totalorder %s54, 3
      %p298 = por %p296, %p297
      %p299 = scmp.ne.s32.totalorder %s290, %s291
      %p300 = scmp.eq.s32.totalorder %s54, 0
      %p301 = por %p299, %p300
      %p302 = scmp.ne.s32.totalorder %s290, %s291
      %p303 = scmp.eq.s32.totalorder %s55, 3
      %p304 = por %p302, %p303
      %p306 = scmp.ne.s32.totalorder %s291, %s305
      %p307 = scmp.eq.s32.totalorder %s55, 0
      %p308 = por %p306, %p307
      %s310 = sadd.s32 %s309, 1
      %p313 = scmp.eq.s32.totalorder %s49, 3
      %p314 = scmp.ne.s32.totalorder %s309, %s311
      %p315 = scmp.eq.s32.totalorder %s49, 0
      %p316 = por %p314, %p315
      %p317 = scmp.ne.s32.totalorder %s309, %s311
      %p318 = scmp.eq.s32.totalorder %s54, 3
      %p319 = por %p317, %p318
      %p320 = scmp.ne.s32.totalorder %s311, %s312
      %p321 = scmp.eq.s32.totalorder %s54, 0
      %p322 = por %p320, %p321
      %p323 = scmp.ne.s32.totalorder %s311, %s312
      %p324 = scmp.eq.s32.totalorder %s55, 3
      %p325 = por %p323, %p324
      %p327 = scmp.ne.s32.totalorder %s312, %s326
      %p328 = scmp.eq.s32.totalorder %s55, 0
      %p329 = por %p327, %p328
      %s331 = sadd.s32 %s330, 1
      %p334 = scmp.eq.s32.totalorder %s49, 3
      %p335 = scmp.ne.s32.totalorder %s330, %s332
      %p336 = scmp.eq.s32.totalorder %s49, 0
      %p337 = por %p335, %p336
      %p338 = scmp.ne.s32.totalorder %s330, %s332
      %p339 = scmp.eq.s32.totalorder %s54, 3
      %p340 = por %p338, %p339
      %p341 = scmp.ne.s32.totalorder %s332, %s333
      %p342 = scmp.eq.s32.totalorder %s54, 0
      %p343 = por %p341, %p342
      %p344 = scmp.ne.s32.totalorder %s332, %s333
      %p345 = scmp.eq.s32.totalorder %s55, 3
      %p346 = por %p344, %p345
      %p348 = scmp.ne.s32.totalorder %s333, %s347
      %p349 = scmp.eq.s32.totalorder %s55, 0
      %p350 = por %p348, %p349
      %s352 = sadd.s32 %s351, 1
      %p355 = scmp.eq.s32.totalorder %s49, 3
      %p356 = scmp.ne.s32.totalorder %s351, %s353
      %p357 = scmp.eq.s32.totalorder %s49, 0
      %p358 = por %p356, %p357
      %p359 = scmp.ne.s32.totalorder %s351, %s353
      %p360 = scmp.eq.s32.totalorder %s54, 3
      %p361 = por %p359, %p360
      %p362 = scmp.ne.s32.totalorder %s353, %s354
      %p363 = scmp.eq.s32.totalorder %s54, 0
      %p364 = por %p362, %p363
      %p365 = scmp.ne.s32.totalorder %s353, %s354
      %p366 = scmp.eq.s32.totalorder %s55, 3
      %p367 = por %p365, %p366
      %p369 = scmp.ne.s32.totalorder %s354, %s368
      %p370 = scmp.eq.s32.totalorder %s55, 0
      %p371 = por %p369, %p370
      %s373 = sadd.s32 %s372, 1
      %p376 = scmp.eq.s32.totalorder %s49, 3
      %p377 = scmp.ne.s32.totalorder %s372, %s374
      %p378 = scmp.eq.s32.totalorder %s49, 0
      %p379 = por %p377, %p378
      %p380 = scmp.ne.s32.totalorder %s372, %s374
      %p381 = scmp.eq.s32.totalorder %s54, 3
      %p382 = por %p380, %p381
      %p383 = scmp.ne.s32.totalorder %s374, %s375
      %p384 = scmp.eq.s32.totalorder %s54, 0
      %p385 = por %p383, %p384
      %p386 = scmp.ne.s32.totalorder %s374, %s375
      %p387 = scmp.eq.s32.totalorder %s55, 3
      %p388 = por %p386, %p387
      %p390 = scmp.ne.s32.totalorder %s375, %s389
      %p391 = scmp.eq.s32.totalorder %s55, 0
      %p392 = por %p390, %p391
      %s394 = sadd.s32 %s393, 1
      %p397 = scmp.eq.s32.totalorder %s49, 3
      %p398 = scmp.ne.s32.totalorder %s393, %s395
      %p399 = scmp.eq.s32.totalorder %s49, 0
      %p400 = por %p398, %p399
      %p401 = scmp.ne.s32.totalorder %s393, %s395
      %p402 = scmp.eq.s32.totalorder %s54, 3
      %p403 = por %p401, %p402
      %p404 = scmp.ne.s32.totalorder %s395, %s396
      %p405 = scmp.eq.s32.totalorder %s54, 0
      %p406 = por %p404, %p405
      %p407 = scmp.ne.s32.totalorder %s395, %s396
      %p408 = scmp.eq.s32.totalorder %s55, 3
      %p409 = por %p407, %p408
      %p411 = scmp.ne.s32.totalorder %s396, %s410
      %p412 = scmp.eq.s32.totalorder %s55, 0
      %p413 = por %p411, %p412
      %s415 = sadd.s32 %s414, 1
      %p418 = scmp.eq.s32.totalorder %s49, 3
      %p419 = scmp.ne.s32.totalorder %s414, %s416
      %p420 = scmp.eq.s32.totalorder %s49, 0
      %p421 = por %p419, %p420
      %p422 = scmp.ne.s32.totalorder %s414, %s416
      %p423 = scmp.eq.s32.totalorder %s54, 3
      %p424 = por %p422, %p423
      %p425 = scmp.ne.s32.totalorder %s416, %s417
      %p426 = scmp.eq.s32.totalorder %s54, 0
      %p427 = por %p425, %p426
      %p428 = scmp.ne.s32.totalorder %s416, %s417
      %p429 = scmp.eq.s32.totalorder %s55, 3
      %p430 = por %p428, %p429
      %p432 = scmp.ne.s32.totalorder %s417, %s431
      %p433 = scmp.eq.s32.totalorder %s55, 0
      %p434 = por %p432, %p433
      %s436 = sadd.s32 %s435, 1
      %p439 = scmp.eq.s32.totalorder %s49, 3
      %p440 = scmp.ne.s32.totalorder %s435, %s437
      %p441 = scmp.eq.s32.totalorder %s49, 0
      %p442 = por %p440, %p441
      %p443 = scmp.ne.s32.totalorder %s435, %s437
      %p444 = scmp.eq.s32.totalorder %s54, 3
      %p445 = por %p443, %p444
      %p446 = scmp.ne.s32.totalorder %s437, %s438
      %p447 = scmp.eq.s32.totalorder %s54, 0
      %p448 = por %p446, %p447
      %p449 = scmp.ne.s32.totalorder %s437, %s438
      %p450 = scmp.eq.s32.totalorder %s55, 3
      %p451 = por %p449, %p450
      %p453 = scmp.ne.s32.totalorder %s438, %s452
      %p454 = scmp.eq.s32.totalorder %s55, 0
      %p455 = por %p453, %p454
      %s457 = sadd.s32 %s456, 1
      %p460 = scmp.eq.s32.totalorder %s49, 3
      %p461 = scmp.ne.s32.totalorder %s456, %s458
      %p462 = scmp.eq.s32.totalorder %s49, 0
      %p463 = por %p461, %p462
      %p464 = scmp.ne.s32.totalorder %s456, %s458
      %p465 = scmp.eq.s32.totalorder %s54, 3
      %p466 = por %p464, %p465
      %p467 = scmp.ne.s32.totalorder %s458, %s459
      %p468 = scmp.eq.s32.totalorder %s54, 0
      %p469 = por %p467, %p468
      %p470 = scmp.ne.s32.totalorder %s458, %s459
      %p471 = scmp.eq.s32.totalorder %s55, 3
      %p472 = por %p470, %p471
      %p474 = scmp.ne.s32.totalorder %s459, %s473
      %p475 = scmp.eq.s32.totalorder %s55, 0
      %p476 = por %p474, %p475
      %s478 = sadd.s32 %s477, 1
      %p481 = scmp.eq.s32.totalorder %s49, 3
      %p482 = scmp.ne.s32.totalorder %s477, %s479
      %p483 = scmp.eq.s32.totalorder %s49, 0
      %p484 = por %p482, %p483
      %p485 = scmp.ne.s32.totalorder %s477, %s479
      %p486 = scmp.eq.s32.totalorder %s54, 3
      %p487 = por %p485, %p486
      %p488 = scmp.ne.s32.totalorder %s479, %s480
      %p489 = scmp.eq.s32.totalorder %s54, 0
      %p490 = por %p488, %p489
      %p491 = scmp.ne.s32.totalorder %s479, %s480
      %p492 = scmp.eq.s32.totalorder %s55, 3
      %p493 = por %p491, %p492
      %p495 = scmp.ne.s32.totalorder %s480, %s494
      %p496 = scmp.eq.s32.totalorder %s55, 0
      %p497 = por %p495, %p496
      %s499 = sadd.s32 %s498, 1
      %p502 = scmp.eq.s32.totalorder %s49, 3
      %p503 = scmp.ne.s32.totalorder %s498, %s500
      %p504 = scmp.eq.s32.totalorder %s49, 0
      %p505 = por %p503, %p504
      %p506 = scmp.ne.s32.totalorder %s498, %s500
      %p507 = scmp.eq.s32.totalorder %s54, 3
      %p508 = por %p506, %p507
      %p509 = scmp.ne.s32.totalorder %s500, %s501
      %p510 = scmp.eq.s32.totalorder %s54, 0
      %p511 = por %p509, %p510
      %p512 = scmp.ne.s32.totalorder %s500, %s501
      %p513 = scmp.eq.s32.totalorder %s55, 3
      %p514 = por %p512, %p513
      %p516 = scmp.ne.s32.totalorder %s501, %s515
      %p517 = scmp.eq.s32.totalorder %s55, 0
      %p518 = por %p516, %p517
      %s519 = ssub.s32 %s49, %s56
      %p520 = scmp.eq.s32.totalorder %s519, 0
      %s522 = sadd.s32 %s521, 1
      %s523 = scalar_select %p520, %s521, %s522
      %p526 = pneg %p520
      %p527 = scmp.eq.s32.totalorder %s49, 3
      %p528 = por %p526, %p527
      %p529 = scmp.ne.s32.totalorder %s521, %s524
      %p530 = scmp.eq.s32.totalorder %s49, 0
      %p531 = por %p529, %p530
      %p532 = scmp.ne.s32.totalorder %s521, %s524
      %p533 = scmp.eq.s32.totalorder %s54, 3
      %p534 = por %p532, %p533
      %p535 = scmp.ne.s32.totalorder %s524, %s525
      %p536 = scmp.eq.s32.totalorder %s54, 0
      %p537 = por %p535, %p536
      %p538 = scmp.ne.s32.totalorder %s524, %s525
      %p539 = scmp.eq.s32.totalorder %s55, 3
      %p540 = por %p538, %p539
      %p542 = scmp.ne.s32.totalorder %s525, %s541
      %p543 = scmp.eq.s32.totalorder %s55, 0
      %p544 = por %p542, %p543
      %s545 = ssub.s32 %s49, %s56
      %p546 = scmp.eq.s32.totalorder %s545, 0
      %s548 = sadd.s32 %s547, 1
      %s549 = scalar_select %p546, %s547, %s548
      %p552 = pneg %p546
      %p553 = scmp.eq.s32.totalorder %s49, 3
      %p554 = por %p552, %p553
      %p555 = scmp.ne.s32.totalorder %s547, %s550
      %p556 = scmp.eq.s32.totalorder %s49, 0
      %p557 = por %p555, %p556
      %p558 = scmp.ne.s32.totalorder %s547, %s550
      %p559 = scmp.eq.s32.totalorder %s54, 3
      %p560 = por %p558, %p559
      %p561 = scmp.ne.s32.totalorder %s550, %s551
      %p562 = scmp.eq.s32.totalorder %s54, 0
      %p563 = por %p561, %p562
      %p564 = scmp.ne.s32.totalorder %s550, %s551
      %p565 = scmp.eq.s32.totalorder %s55, 3
      %p566 = por %p564, %p565
      %p568 = scmp.ne.s32.totalorder %s551, %s567
      %p569 = scmp.eq.s32.totalorder %s55, 0
      %p570 = por %p568, %p569
      %s571 = ssub.s32 %s49, %s56
      %p572 = scmp.eq.s32.totalorder %s571, 0
      %s574 = sadd.s32 %s573, 1
      %s575 = scalar_select %p572, %s573, %s574
      %p578 = pneg %p572
      %p579 = scmp.eq.s32.totalorder %s49, 3
      %p580 = por %p578, %p579
      %p581 = scmp.ne.s32.totalorder %s573, %s576
      %p582 = scmp.eq.s32.totalorder %s49, 0
      %p583 = por %p581, %p582
      %p584 = scmp.ne.s32.totalorder %s573, %s576
      %p585 = scmp.eq.s32.totalorder %s54, 3
      %p586 = por %p584, %p585
      %p587 = scmp.ne.s32.totalorder %s576, %s577
      %p588 = scmp.eq.s32.totalorder %s54, 0
      %p589 = por %p587, %p588
      %p590 = scmp.ne.s32.totalorder %s576, %s577
      %p591 = scmp.eq.s32.totalorder %s55, 3
      %p592 = por %p590, %p591
      %p594 = scmp.ne.s32.totalorder %s577, %s593
      %p595 = scmp.eq.s32.totalorder %s55, 0
      %p596 = por %p594, %p595
      %s598 = sadd.s32 %s597, 1
      %p601 = scmp.eq.s32.totalorder %s49, 3
      %p602 = scmp.ne.s32.totalorder %s597, %s599
      %p603 = scmp.eq.s32.totalorder %s49, 0
      %p604 = por %p602, %p603
      %p605 = scmp.ne.s32.totalorder %s597, %s599
      %p606 = scmp.eq.s32.totalorder %s54, 3
      %p607 = por %p605, %p606
      %p608 = scmp.ne.s32.totalorder %s599, %s600
      %p609 = scmp.eq.s32.totalorder %s54, 0
      %p610 = por %p608, %p609
      %p611 = scmp.ne.s32.totalorder %s599, %s600
      %p612 = scmp.eq.s32.totalorder %s55, 3
      %p613 = por %p611, %p612
      %p615 = scmp.ne.s32.totalorder %s600, %s614
      %p616 = scmp.eq.s32.totalorder %s55, 0
      %p617 = por %p615, %p616
      %s619 = sadd.s32 %s618, 1
      %p622 = scmp.eq.s32.totalorder %s49, 3
      %p623 = scmp.ne.s32.totalorder %s618, %s620
      %p624 = scmp.eq.s32.totalorder %s49, 0
      %p625 = por %p623, %p624
      %p626 = scmp.ne.s32.totalorder %s618, %s620
      %p627 = scmp.eq.s32.totalorder %s54, 3
      %p628 = por %p626, %p627
      %p629 = scmp.ne.s32.totalorder %s620, %s621
      %p630 = scmp.eq.s32.totalorder %s54, 0
      %p631 = por %p629, %p630
      %p632 = scmp.ne.s32.totalorder %s620, %s621
      %p633 = scmp.eq.s32.totalorder %s55, 3
      %p634 = por %p632, %p633
      %p636 = scmp.ne.s32.totalorder %s621, %s635
      %p637 = scmp.eq.s32.totalorder %s55, 0
      %p638 = por %p636, %p637
      %p639 = scmp.le.s32.totalorder 1, %s49
      %p640 = scmp.lt.s32.totalorder %s49, 5
      %p641 = pnand %p639, %p640
      %p642 = pneg %p641
      // Predicated region
      $region9: #{_fused_forward.1} parent=5 // pred_check
        _
      $region10: #{_fused_forward.1} parent=5 // pred_check_branch
        %644 = sbr.rel (%p641) target = $region12
      $region11: #{_fused_forward.1} parent=5 // pred_region
        %s645 = ssub.s32 %s49, 1
        // Predicated region
        $region13: #{_fused_forward.1} parent=11 // pred_check
          %p646 = pneg %p70
        $region14: #{_fused_forward.1} parent=11 // pred_check_branch
          %648 = sbr.rel (%p646) target = $region16
        $region15: #{_fused_forward.1} parent=11 // pred_region
          _
        $region16: #{_fused_forward.1} parent=11 // pred_fallthru
          _
        // Predicated region
        $region17: #{_fused_forward.1} parent=11 // pred_check
          %p649 = pneg %p91
        $region18: #{_fused_forward.1} parent=11 // pred_check_branch
          %651 = sbr.rel (%p649) target = $region20
        $region19: #{_fused_forward.1} parent=11 // pred_region
          _
        $region20: #{_fused_forward.1} parent=11 // pred_fallthru
          _
        // Predicated region
        $region21: #{_fused_forward.1} parent=11 // pred_check
          %p652 = pneg %p112
        $region22: #{_fused_forward.1} parent=11 // pred_check_branch
          %654 = sbr.rel (%p652) target = $region24
        $region23: #{_fused_forward.1} parent=11 // pred_region
          %s656 = ssub.s32 16, 16
          %657 = vsyncadd [#allocation9], %s656
          %s659 = sshll.u32 [#allocation8], 4
          %s660 = int_to_ptr.vmem [resolvable:$true] %s659
          %662 = dma.hbm_to_vmem [thread:$0]  %s4, 16, %s660, [#allocation9]
        $region24: #{_fused_forward.1} parent=11 // pred_fallthru
          _
        // Predicated region
        $region25: #{_fused_forward.1} parent=11 // pred_check
          %p663 = pneg %p133
        $region26: #{_fused_forward.1} parent=11 // pred_check_branch
          %665 = sbr.rel (%p663) target = $region28
        $region27: #{_fused_forward.1} parent=11 // pred_region
          _
        $region28: #{_fused_forward.1} parent=11 // pred_fallthru
          _
        // Predicated region
        $region29: #{_fused_forward.1} parent=11 // pred_check
          %p666 = pneg %p154
        $region30: #{_fused_forward.1} parent=11 // pred_check_branch
          %668 = sbr.rel (%p666) target = $region32
        $region31: #{_fused_forward.1} parent=11 // pred_region
          %s670 = ssub.s32 16, 16
          %671 = vsyncadd [#allocation13], %s670
          %s673 = sshll.u32 [#allocation12], 4
          %s674 = int_to_ptr.vmem [resolvable:$true] %s673
          %676 = dma.hbm_to_vmem [thread:$0]  %s6, 16, %s674, [#allocation13]
        $region32: #{_fused_forward.1} parent=11 // pred_fallthru
          _
        // Predicated region
        $region33: #{_fused_forward.1} parent=11 // pred_check
          %p677 = pneg %p175
        $region34: #{_fused_forward.1} parent=11 // pred_check_branch
          %679 = sbr.rel (%p677) target = $region36
        $region35: #{_fused_forward.1} parent=11 // pred_region
          _
        $region36: #{_fused_forward.1} parent=11 // pred_fallthru
          _
        // Predicated region
        $region37: #{_fused_forward.1} parent=11 // pred_check
          %p680 = pneg %p196
        $region38: #{_fused_forward.1} parent=11 // pred_check_branch
          %682 = sbr.rel (%p680) target = $region40
        $region39: #{_fused_forward.1} parent=11 // pred_region
          _
        $region40: #{_fused_forward.1} parent=11 // pred_fallthru
          _
        // Predicated region
        $region41: #{_fused_forward.1} parent=11 // pred_check
          %p683 = pneg %p217
        $region42: #{_fused_forward.1} parent=11 // pred_check_branch
          %685 = sbr.rel (%p683) target = $region44
        $region43: #{_fused_forward.1} parent=11 // pred_region
          _
        $region44: #{_fused_forward.1} parent=11 // pred_fallthru
          _
        // Predicated region
        $region45: #{_fused_forward.1} parent=11 // pred_check
          %p686 = pneg %p238
        $region46: #{_fused_forward.1} parent=11 // pred_check_branch
          %688 = sbr.rel (%p686) target = $region48
        $region47: #{_fused_forward.1} parent=11 // pred_region
          _
        $region48: #{_fused_forward.1} parent=11 // pred_fallthru
          _
        // Predicated region
        $region49: #{_fused_forward.1} parent=11 // pred_check
          %p689 = pneg %p259
        $region50: #{_fused_forward.1} parent=11 // pred_check_branch
          %691 = sbr.rel (%p689) target = $region52
        $region51: #{_fused_forward.1} parent=11 // pred_region
          _
        $region52: #{_fused_forward.1} parent=11 // pred_fallthru
          _
        // Predicated region
        $region53: #{_fused_forward.1} parent=11 // pred_check
          %p692 = pneg %p280
        $region54: #{_fused_forward.1} parent=11 // pred_check_branch
          %694 = sbr.rel (%p692) target = $region56
        $region55: #{_fused_forward.1} parent=11 // pred_region
          _
        $region56: #{_fused_forward.1} parent=11 // pred_fallthru
          _
        // Predicated region
        $region57: #{_fused_forward.1} parent=11 // pred_check
          %p695 = pneg %p301
        $region58: #{_fused_forward.1} parent=11 // pred_check_branch
          %697 = sbr.rel (%p695) target = $region60
        $region59: #{_fused_forward.1} parent=11 // pred_region
          %s699 = ssub.s32 16, 16
          %700 = vsyncadd [#allocation13], %s699
          %s702 = sshll.u32 [#allocation14], 4
          %s703 = int_to_ptr.vmem [resolvable:$true] %s702
          %705 = dma.hbm_to_vmem [thread:$0]  %s13, 16, %s703, [#allocation13]
        $region60: #{_fused_forward.1} parent=11 // pred_fallthru
          _
        // Predicated region
        $region61: #{_fused_forward.1} parent=11 // pred_check
          %p706 = pneg %p322
        $region62: #{_fused_forward.1} parent=11 // pred_check_branch
          %708 = sbr.rel (%p706) target = $region64
        $region63: #{_fused_forward.1} parent=11 // pred_region
          _
        $region64: #{_fused_forward.1} parent=11 // pred_fallthru
          _
        // Predicated region
        $region65: #{_fused_forward.1} parent=11 // pred_check
          %p709 = pneg %p343
        $region66: #{_fused_forward.1} parent=11 // pred_check_branch
          %711 = sbr.rel (%p709) target = $region68
        $region67: #{_fused_forward.1} parent=11 // pred_region
          _
        $region68: #{_fused_forward.1} parent=11 // pred_fallthru
          _
        // Predicated region
        $region69: #{_fused_forward.1} parent=11 // pred_check
          %p712 = pneg %p364
        $region70: #{_fused_forward.1} parent=11 // pred_check_branch
          %714 = sbr.rel (%p712) target = $region72
        $region71: #{_fused_forward.1} parent=11 // pred_region
          _
        $region72: #{_fused_forward.1} parent=11 // pred_fallthru
          _
        // Predicated region
        $region73: #{_fused_forward.1} parent=11 // pred_check
          %p715 = pneg %p385
        $region74: #{_fused_forward.1} parent=11 // pred_check_branch
          %717 = sbr.rel (%p715) target = $region76
        $region75: #{_fused_forward.1} parent=11 // pred_region
          _
        $region76: #{_fused_forward.1} parent=11 // pred_fallthru
          _
        // Predicated region
        $region77: #{_fused_forward.1} parent=11 // pred_check
          %p718 = pneg %p406
        $region78: #{_fused_forward.1} parent=11 // pred_check_branch
          %720 = sbr.rel (%p718) target = $region80
        $region79: #{_fused_forward.1} parent=11 // pred_region
          %s722 = ssub.s32 16, 16
          %723 = vsyncadd [#allocation16], %s722
          %s725 = sshll.u32 [#allocation15], 4
          %s726 = int_to_ptr.vmem [resolvable:$true] %s725
          %728 = dma.hbm_to_vmem [thread:$0]  %s18, 16, %s726, [#allocation16]
        $region80: #{_fused_forward.1} parent=11 // pred_fallthru
          _
        // Predicated region
        $region81: #{_fused_forward.1} parent=11 // pred_check
          %p729 = pneg %p427
        $region82: #{_fused_forward.1} parent=11 // pred_check_branch
          %731 = sbr.rel (%p729) target = $region84
        $region83: #{_fused_forward.1} parent=11 // pred_region
          _
        $region84: #{_fused_forward.1} parent=11 // pred_fallthru
          _
        // Predicated region
        $region85: #{_fused_forward.1} parent=11 // pred_check
          %p732 = pneg %p448
        $region86: #{_fused_forward.1} parent=11 // pred_check_branch
          %734 = sbr.rel (%p732) target = $region88
        $region87: #{_fused_forward.1} parent=11 // pred_region
          _
        $region88: #{_fused_forward.1} parent=11 // pred_fallthru
          _
        // Predicated region
        $region89: #{_fused_forward.1} parent=11 // pred_check
          %p735 = pneg %p469
        $region90: #{_fused_forward.1} parent=11 // pred_check_branch
          %737 = sbr.rel (%p735) target = $region92
        $region91: #{_fused_forward.1} parent=11 // pred_region
          %s739 = ssub.s32 64, 64
          %740 = vsyncadd [#allocation16], %s739
          %s742 = sshll.u32 [#allocation17], 4
          %s743 = int_to_ptr.vmem [resolvable:$true] %s742
          %745 = dma.hbm_to_vmem [thread:$0]  %s21, 64, %s743, [#allocation16]
        $region92: #{_fused_forward.1} parent=11 // pred_fallthru
          _
        // Predicated region
        $region93: #{_fused_forward.1} parent=11 // pred_check
          %p746 = pneg %p490
        $region94: #{_fused_forward.1} parent=11 // pred_check_branch
          %748 = sbr.rel (%p746) target = $region96
        $region95: #{_fused_forward.1} parent=11 // pred_region
          _
        $region96: #{_fused_forward.1} parent=11 // pred_fallthru
          _
        // Predicated region
        $region97: #{_fused_forward.1} parent=11 // pred_check
          %p749 = pneg %p511
        $region98: #{_fused_forward.1} parent=11 // pred_check_branch
          %751 = sbr.rel (%p749) target = $region100
        $region99: #{_fused_forward.1} parent=11 // pred_region
          %s753 = ssub.s32 16, 16
          %754 = vsyncadd [#allocation19], %s753
          %s756 = sshll.u32 [#allocation18], 4
          %s757 = int_to_ptr.vmem [resolvable:$true] %s756
          %759 = dma.hbm_to_vmem [thread:$0]  %s23, 16, %s757, [#allocation19]
        $region100: #{_fused_forward.1} parent=11 // pred_fallthru
          _
      $region12: #{_fused_forward.1} parent=5 // pred_fallthru
        _
      %p760 = scmp.lt.s32.totalorder %s49, 4
      // Predicated region
      $region101: #{_fused_forward.1} parent=5 // pred_check
        %p761 = pneg %p760
      $region102: #{_fused_forward.1} parent=5 // pred_check_branch
        %763 = sbr.rel (%p761) target = $region104
      $region103: #{_fused_forward.1} parent=5 // pred_region
        // Predicated region
        $region105: #{_fused_forward.1} parent=103 // pred_check
          %p764 = pneg %p531
        $region106: #{_fused_forward.1} parent=103 // pred_check_branch
          %766 = sbr.rel (%p764) target = $region108
        $region107: #{_fused_forward.1} parent=103 // pred_region
          %p767 = scmp.lt.s32.totalorder %s49, 3
          %s768 = scalar_select %p767, %s49, 3
          %s769 = smul.addr %s768, 8
          %s770 = scalar_lea.vmem %s24, %s769
        $region108: #{_fused_forward.1} parent=103 // pred_fallthru
          _
        // Predicated region
        $region109: #{_fused_forward.1} parent=103 // pred_check
          %p771 = pneg %p557
        $region110: #{_fused_forward.1} parent=103 // pred_check_branch
          %773 = sbr.rel (%p771) target = $region112
        $region111: #{_fused_forward.1} parent=103 // pred_region
          %p774 = scmp.lt.s32.totalorder %s49, 3
          %s775 = scalar_select %p774, %s49, 3
          %s776 = smul.addr %s775, 8
          %s777 = scalar_lea.vmem %s25, %s776
        $region112: #{_fused_forward.1} parent=103 // pred_fallthru
          _
        // Predicated region
        $region113: #{_fused_forward.1} parent=103 // pred_check
          %p778 = pneg %p583
        $region114: #{_fused_forward.1} parent=103 // pred_check_branch
          %780 = sbr.rel (%p778) target = $region116
        $region115: #{_fused_forward.1} parent=103 // pred_region
          %p781 = scmp.lt.s32.totalorder %s49, 3
          %s782 = scalar_select %p781, %s49, 3
          %s783 = smul.addr %s782, 8
          %s784 = scalar_lea.vmem %s26, %s783
        $region116: #{_fused_forward.1} parent=103 // pred_fallthru
          _
      $region104: #{_fused_forward.1} parent=5 // pred_fallthru
        _
      %p785 = scmp.le.s32.totalorder 1, %s49
      %p786 = scmp.lt.s32.totalorder %s49, 5
      %p787 = pnand %p785, %p786
      %p788 = pneg %p787
      // Predicated region
      $region117: #{_fused_forward.1} parent=5 // pred_check
        _
      $region118: #{_fused_forward.1} parent=5 // pred_check_branch
        %790 = sbr.rel (%p787) target = $region120
      $region119: #{_fused_forward.1} parent=5 // pred_region
        %s791 = ssub.s32 %s49, 1
        // Predicated region
        $region121: #{_fused_forward.1} parent=119 // pred_check
          %p792 = pneg %p112
        $region122: #{_fused_forward.1} parent=119 // pred_check_branch
          %794 = sbr.rel (%p792) target = $region124
        $region123: #{_fused_forward.1} parent=119 // pred_region
          %795 = dma.done [#allocation9], 16
        $region124: #{_fused_forward.1} parent=119 // pred_fallthru
          _
        // Predicated region
        $region125: #{_fused_forward.1} parent=119 // pred_check
          %p796 = pneg %p154
        $region126: #{_fused_forward.1} parent=119 // pred_check_branch
          %798 = sbr.rel (%p796) target = $region128
        $region127: #{_fused_forward.1} parent=119 // pred_region
          %799 = dma.done [#allocation13], 16
        $region128: #{_fused_forward.1} parent=119 // pred_fallthru
          _
        // Predicated region
        $region129: #{_fused_forward.1} parent=119 // pred_check
          %p800 = pneg %p301
        $region130: #{_fused_forward.1} parent=119 // pred_check_branch
          %802 = sbr.rel (%p800) target = $region132
        $region131: #{_fused_forward.1} parent=119 // pred_region
          %803 = dma.done [#allocation13], 16
        $region132: #{_fused_forward.1} parent=119 // pred_fallthru
          _
        // Predicated region
        $region133: #{_fused_forward.1} parent=119 // pred_check
          %p804 = pneg %p406
        $region134: #{_fused_forward.1} parent=119 // pred_check_branch
          %806 = sbr.rel (%p804) target = $region136
        $region135: #{_fused_forward.1} parent=119 // pred_region
          %807 = dma.done [#allocation16], 16
        $region136: #{_fused_forward.1} parent=119 // pred_fallthru
          _
        // Predicated region
        $region137: #{_fused_forward.1} parent=119 // pred_check
          %p808 = pneg %p469
        $region138: #{_fused_forward.1} parent=119 // pred_check_branch
          %810 = sbr.rel (%p808) target = $region140
        $region139: #{_fused_forward.1} parent=119 // pred_region
          %811 = dma.done [#allocation16], 64
        $region140: #{_fused_forward.1} parent=119 // pred_fallthru
          _
        // Predicated region
        $region141: #{_fused_forward.1} parent=119 // pred_check
          %p812 = pneg %p511
        $region142: #{_fused_forward.1} parent=119 // pred_check_branch
          %814 = sbr.rel (%p812) target = $region144
        $region143: #{_fused_forward.1} parent=119 // pred_region
          %815 = dma.done [#allocation19], 16
        $region144: #{_fused_forward.1} parent=119 // pred_fallthru
          _
        %p816 = pneg %p70
        %p817 = pneg %p67
        %p818 = pneg %p91
        %p819 = pneg %p88
        %p820 = pneg %p112
        %p821 = pneg %p109
        %p822 = pneg %p133
        %p823 = pneg %p130
        %p824 = pneg %p154
        %p825 = pneg %p151
        %p826 = pneg %p175
        %p827 = pneg %p172
        %p828 = pneg %p196
        %p829 = pneg %p193
        %p830 = pneg %p217
        %p831 = pneg %p214
        %p832 = pneg %p238
        %p833 = pneg %p235
        %p834 = pneg %p259
        %p835 = pneg %p256
        %p836 = pneg %p280
        %p837 = pneg %p277
        %p838 = pneg %p301
        %p839 = pneg %p298
        %p840 = pneg %p322
        %p841 = pneg %p319
        %p842 = pneg %p343
        %p843 = pneg %p340
        %p844 = pneg %p364
        %p845 = pneg %p361
        %p846 = pneg %p385
        %p847 = pneg %p382
        %p848 = pneg %p406
        %p849 = pneg %p403
        %p850 = pneg %p427
        %p851 = pneg %p424
        %p852 = pneg %p448
        %p853 = pneg %p445
        %p854 = pneg %p469
        %p855 = pneg %p466
        %p856 = pneg %p490
        %p857 = pneg %p487
        %p858 = pneg %p511
        %p859 = pneg %p508
        %p860 = scmp.lt.s32.totalorder %s54, 3
        %s861 = scalar_select %p860, %s54, 3
        %s862 = smul.addr %s861, 8
        %s863 = scalar_lea.vmem %s24, %s862
        %p864 = pneg %p537
        %p865 = pneg %p534
        %p866 = scmp.lt.s32.totalorder %s54, 3
        %s867 = scalar_select %p866, %s54, 3
        %s868 = smul.addr %s867, 8
        %s869 = scalar_lea.vmem %s25, %s868
        %p870 = pneg %p563
        %p871 = pneg %p560
        %p872 = scmp.lt.s32.totalorder %s54, 3
        %s873 = scalar_select %p872, %s54, 3
        %s874 = smul.addr %s873, 8
        %s875 = scalar_lea.vmem %s26, %s874
        %p876 = pneg %p589
        %p877 = pneg %p586
        %p878 = pneg %p610
        %p879 = pneg %p607
        %p880 = pneg %p631
        %p881 = pneg %p628
        %p882 = scmp.lt.s32.totalorder %s54, 3
        %s883 = scalar_select %p882, %s54, 3
        %s884 = smul.addr %s883, 8
        %s885 = scalar_lea.vmem %s24, %s884
        %p886 = scmp.lt.s32.totalorder %s54, 3
        %s887 = scalar_select %p886, %s54, 3
        %s888 = smul.addr %s887, 8
        %s889 = scalar_lea.vmem %s25, %s888
        %p890 = scmp.lt.s32.totalorder %s54, 3
        %s891 = scalar_select %p890, %s54, 3
        %s892 = smul.addr %s891, 8
        %s893 = scalar_lea.vmem %s26, %s892
        %p894 = scmp.eq.s32.totalorder %s54, 0
        // Predicated region
        $region145: #{_fused_forward.1} parent=119 // pred_check
          %p895 = pneg %p894
        $region146: #{_fused_forward.1} parent=119 // pred_check_branch
          %897 = sbr.rel (%p895) target = $region148
        $region147: #{_fused_forward.1} parent=119 // pred_region
          %v898 = vld [vmem:[%s2] sm:$0xff]
          %v899 = vld [vmem:[%s3] sm:$0x1f]
          %v900 = vld [vmem:[#allocation8] sm:$0x1]
          %v902 = vlaneseq
          %v903 = vshrl.u32 %v902, 7
          %v904 = vsub.s32 0, %v903
          %v905 = vrot.slane %v900, %v904
          %vm907 = vcmask 39936
          %v909 = vsel %vm907, %v898, 0
          %vm911 = vcmask 1044480
          %v913 = vsel %vm911, %v899, 0
          %915 = vmatprep.subr.mxu0 0.0
          %916 = vmatpush1.msra.mxu0 %v913
          %917 = vmatprep.subr.mxu0 0.0
          %918 = vmatpush1.msra.mxu0 0.0
          %919 = vmatprep.subr.mxu0 0.0
          %920 = vmatpush1.msra.mxu0 0.0
          %921 = vmatprep.subr.mxu0 0.0
          %922 = vmatpush1.msra.mxu0 0.0
          %923 = vmatprep.subr.mxu0 0.0
          %924 = vmatpush1.msra.mxu0 0.0
          %925 = vmatprep.subr.mxu0 0.0
          %926 = vmatpush1.msra.mxu0 0.0
          %927 = vmatprep.subr.mxu0 0.0
          %928 = vmatpush1.msra.mxu0 0.0
          %929 = vmatprep.subr.mxu0 0.0
          %930 = vmatpush1.msra.mxu0 0.0
          %931 = vmatprep.subr.mxu0 0.0
          %932 = vmatpush1.msra.mxu0 0.0
          %933 = vmatprep.subr.mxu0 0.0
          %934 = vmatpush1.msra.mxu0 0.0
          %935 = vmatprep.subr.mxu0 0.0
          %936 = vmatpush1.msra.mxu0 0.0
          %937 = vmatprep.subr.mxu0 0.0
          %938 = vmatpush1.msra.mxu0 0.0
          %939 = vmatprep.subr.mxu0 0.0
          %940 = vmatpush1.msra.mxu0 0.0
          %941 = vmatprep.subr.mxu0 0.0
          %942 = vmatpush1.msra.mxu0 0.0
          %943 = vmatprep.subr.mxu0 0.0
          %944 = vmatpush1.msra.mxu0 0.0
          %945 = vmatprep.subr.mxu0 0.0
          %946 = vmatpush1.msra.mxu0 0.0
          %947 = vmatprep.subr.mxu0 0.0
          %948 = vmatpush1.msra.mxu0 0.0
          %949 = vmatprep.subr.mxu0 0.0
          %950 = vmatpush1.msra.mxu0 0.0
          %951 = vmatprep.subr.mxu0 0.0
          %952 = vmatpush1.msra.mxu0 0.0
          %953 = vmatprep.subr.mxu0 0.0
          %954 = vmatpush1.msra.mxu0 0.0
          %955 = vmatprep.subr.mxu0 0.0
          %956 = vmatpush1.msra.mxu0 0.0
          %957 = vmatprep.subr.mxu0 0.0
          %958 = vmatpush1.msra.mxu0 0.0
          %959 = vmatprep.subr.mxu0 0.0
          %960 = vmatpush1.msra.mxu0 0.0
          %961 = vmatprep.subr.mxu0 0.0
          %962 = vmatpush1.msra.mxu0 0.0
          %963 = vmatprep.subr.mxu0 0.0
          %964 = vmatpush1.msra.mxu0 0.0
          %965 = vmatprep.subr.mxu0 0.0
          %966 = vmatpush1.msra.mxu0 0.0
          %967 = vmatprep.subr.mxu0 0.0
          %968 = vmatpush1.msra.mxu0 0.0
          %969 = vmatprep.subr.mxu0 0.0
          %970 = vmatpush1.msra.mxu0 0.0
          %971 = vmatprep.subr.mxu0 0.0
          %972 = vmatpush1.msra.mxu0 0.0
          %973 = vmatprep.subr.mxu0 0.0
          %974 = vmatpush1.msra.mxu0 0.0
          %975 = vmatprep.subr.mxu0 0.0
          %976 = vmatpush1.msra.mxu0 0.0
          %977 = vmatprep.subr.mxu0 0.0
          %978 = vmatpush1.msra.mxu0 0.0
          %979 = vmatprep.mubr.f32.mxu0 0.0
          %980 = vmatmul.mubr.f32.gmra.mrb[0].mxu0 %v909
          %v981 = vpop.f32.mrb[0].mxu0
          %v982 = vadd.f32 %v905, %v981
          %v983 = vpop.f32.mrb[0].mxu0
          %984 = vdwg.mxu0
          %v985 = vmax.f32 %v982, 0.0
          %v986 = vld [vmem:[%s5] sm:$0xff]
          %v987 = vld [vmem:[#allocation12] sm:$0x1]
          %v989 = vlaneseq
          %v990 = vshrl.u32 %v989, 7
          %v991 = vsub.s32 0, %v990
          %v992 = vrot.slane %v987, %v991
          %vm994 = vcmask 64512
          %v996 = vsel %vm994, %v985, 0
          %998 = vmatprep.subr.mxu0 0.0
          %999 = vmatpush1.msra.mxu0 %v986
          %1000 = vmatprep.subr.mxu0 0.0
          %1001 = vmatpush1.msra.mxu0 0.0
          %1002 = vmatprep.subr.mxu0 0.0
          %1003 = vmatpush1.msra.mxu0 0.0
          %1004 = vmatprep.subr.mxu0 0.0
          %1005 = vmatpush1.msra.mxu0 0.0
          %1006 = vmatprep.subr.mxu0 0.0
          %1007 = vmatpush1.msra.mxu0 0.0
          %1008 = vmatprep.subr.mxu0 0.0
          %1009 = vmatpush1.msra.mxu0 0.0
          %1010 = vmatprep.subr.mxu0 0.0
          %1011 = vmatpush1.msra.mxu0 0.0
          %1012 = vmatprep.subr.mxu0 0.0
          %1013 = vmatpush1.msra.mxu0 0.0
          %1014 = vmatprep.subr.mxu0 0.0
          %1015 = vmatpush1.msra.mxu0 0.0
          %1016 = vmatprep.subr.mxu0 0.0
          %1017 = vmatpush1.msra.mxu0 0.0
          %1018 = vmatprep.subr.mxu0 0.0
          %1019 = vmatpush1.msra.mxu0 0.0
          %1020 = vmatprep.subr.mxu0 0.0
          %1021 = vmatpush1.msra.mxu0 0.0
          %1022 = vmatprep.subr.mxu0 0.0
          %1023 = vmatpush1.msra.mxu0 0.0
          %1024 = vmatprep.subr.mxu0 0.0
          %1025 = vmatpush1.msra.mxu0 0.0
          %1026 = vmatprep.subr.mxu0 0.0
          %1027 = vmatpush1.msra.mxu0 0.0
          %1028 = vmatprep.subr.mxu0 0.0
          %1029 = vmatpush1.msra.mxu0 0.0
          %1030 = vmatprep.subr.mxu0 0.0
          %1031 = vmatpush1.msra.mxu0 0.0
          %1032 = vmatprep.subr.mxu0 0.0
          %1033 = vmatpush1.msra.mxu0 0.0
          %1034 = vmatprep.subr.mxu0 0.0
          %1035 = vmatpush1.msra.mxu0 0.0
          %1036 = vmatprep.subr.mxu0 0.0
          %1037 = vmatpush1.msra.mxu0 0.0
          %1038 = vmatprep.subr.mxu0 0.0
          %1039 = vmatpush1.msra.mxu0 0.0
          %1040 = vmatprep.subr.mxu0 0.0
          %1041 = vmatpush1.msra.mxu0 0.0
          %1042 = vmatprep.subr.mxu0 0.0
          %1043 = vmatpush1.msra.mxu0 0.0
          %1044 = vmatprep.subr.mxu0 0.0
          %1045 = vmatpush1.msra.mxu0 0.0
          %1046 = vmatprep.subr.mxu0 0.0
          %1047 = vmatpush1.msra.mxu0 0.0
          %1048 = vmatprep.subr.mxu0 0.0
          %1049 = vmatpush1.msra.mxu0 0.0
          %1050 = vmatprep.subr.mxu0 0.0
          %1051 = vmatpush1.msra.mxu0 0.0
          %1052 = vmatprep.subr.mxu0 0.0
          %1053 = vmatpush1.msra.mxu0 0.0
          %1054 = vmatprep.subr.mxu0 0.0
          %1055 = vmatpush1.msra.mxu0 0.0
          %1056 = vmatprep.subr.mxu0 0.0
          %1057 = vmatpush1.msra.mxu0 0.0
          %1058 = vmatprep.subr.mxu0 0.0
          %1059 = vmatpush1.msra.mxu0 0.0
          %1060 = vmatprep.subr.mxu0 0.0
          %1061 = vmatpush1.msra.mxu0 0.0
          %1062 = vmatprep.mubr.f32.mxu0 0.0
          %1063 = vmatmul.mubr.f32.gmra.mrb[0].mxu0 %v996
          %v1064 = vpop.f32.mrb[0].mxu0
          %v1065 = vadd.f32 %v992, %v1064
          %v1066 = vpop.f32.mrb[0].mxu0
          %1067 = vdwg.mxu0
          %v1068 = vtanh.pop %v1065
          %vm1069 = vcmask 261120
          %1070 = vst.msk [vmem:[#allocation2] sm:$0xff] %vm1069, %v1068
          %v1071 = vld [vmem:[%s7] sm:$0xff]
          %v1072 = vld [vmem:[%s7 + $0x8] sm:$0xff]
          %v1073 = vld [vmem:[%s7 + $0x10] sm:$0xff]
          %v1074 = vld [vmem:[%s7 + $0x18] sm:$0xff]
          %v1075 = vld [vmem:[%s8] sm:$0x1]
          %v1077 = vlaneseq
          %v1078 = vshrl.u32 %v1077, 7
          %v1079 = vsub.s32 0, %v1078
          %v1080 = vrot.slane %v1075, %v1079
          %v1083 = vsel %vm1069, %v1068, 0
          %1085 = vmatprep.subr.mxu0 0.0
          %1086 = vmatpush1.msra.mxu0 %v1071
          %1087 = vmatprep.subr.mxu0 0.0
          %1088 = vmatpush1.msra.mxu0 %v1072
          %1089 = vmatprep.subr.mxu0 0.0
          %1090 = vmatpush1.msra.mxu0 %v1073
          %1091 = vmatprep.subr.mxu0 0.0
          %1092 = vmatpush1.msra.mxu0 %v1074
          %1093 = vmatprep.subr.mxu0 0.0
          %1094 = vmatpush1.msra.mxu0 0.0
          %1095 = vmatprep.subr.mxu0 0.0
          %1096 = vmatpush1.msra.mxu0 0.0
          %1097 = vmatprep.subr.mxu0 0.0
          %1098 = vmatpush1.msra.mxu0 0.0
          %1099 = vmatprep.subr.mxu0 0.0
          %1100 = vmatpush1.msra.mxu0 0.0
          %1101 = vmatprep.subr.mxu0 0.0
          %1102 = vmatpush1.msra.mxu0 0.0
          %1103 = vmatprep.subr.mxu0 0.0
          %1104 = vmatpush1.msra.mxu0 0.0
          %1105 = vmatprep.subr.mxu0 0.0
          %1106 = vmatpush1.msra.mxu0 0.0
          %1107 = vmatprep.subr.mxu0 0.0
          %1108 = vmatpush1.msra.mxu0 0.0
          %1109 = vmatprep.subr.mxu0 0.0
          %1110 = vmatpush1.msra.mxu0 0.0
          %1111 = vmatprep.subr.mxu0 0.0
          %1112 = vmatpush1.msra.mxu0 0.0
          %1113 = vmatprep.subr.mxu0 0.0
          %1114 = vmatpush1.msra.mxu0 0.0
          %1115 = vmatprep.subr.mxu0 0.0
          %1116 = vmatpush1.msra.mxu0 0.0
          %1117 = vmatprep.subr.mxu0 0.0
          %1118 = vmatpush1.msra.mxu0 0.0
          %1119 = vmatprep.subr.mxu0 0.0
          %1120 = vmatpush1.msra.mxu0 0.0
          %1121 = vmatprep.subr.mxu0 0.0
          %1122 = vmatpush1.msra.mxu0 0.0
          %1123 = vmatprep.subr.mxu0 0.0
          %1124 = vmatpush1.msra.mxu0 0.0
          %1125 = vmatprep.subr.mxu0 0.0
          %1126 = vmatpush1.msra.mxu0 0.0
          %1127 = vmatprep.subr.mxu0 0.0
          %1128 = vmatpush1.msra.mxu0 0.0
          %1129 = vmatprep.subr.mxu0 0.0
          %1130 = vmatpush1.msra.mxu0 0.0
          %1131 = vmatprep.subr.mxu0 0.0
          %1132 = vmatpush1.msra.mxu0 0.0
          %1133 = vmatprep.subr.mxu0 0.0
          %1134 = vmatpush1.msra.mxu0 0.0
          %1135 = vmatprep.subr.mxu0 0.0
          %1136 = vmatpush1.msra.mxu0 0.0
          %1137 = vmatprep.subr.mxu0 0.0
          %1138 = vmatpush1.msra.mxu0 0.0
          %1139 = vmatprep.subr.mxu0 0.0
          %1140 = vmatpush1.msra.mxu0 0.0
          %1141 = vmatprep.subr.mxu0 0.0
          %1142 = vmatpush1.msra.mxu0 0.0
          %1143 = vmatprep.subr.mxu0 0.0
          %1144 = vmatpush1.msra.mxu0 0.0
          %1145 = vmatprep.subr.mxu0 0.0
          %1146 = vmatpush1.msra.mxu0 0.0
          %1147 = vmatprep.subr.mxu0 0.0
          %1148 = vmatpush1.msra.mxu0 0.0
          %1149 = vmatprep.mubr.f32.mxu0 0.0
          %1150 = vmatmul.mubr.f32.gmra.mrb[0].mxu0 %v1083
          %v1151 = vpop.f32.mrb[0].mxu0
          %v1152 = vadd.f32 %v1080, %v1151
          %v1153 = vpop.f32.mrb[0].mxu0
          %1154 = vdwg.mxu0
          %v1155 = vmax.f32 %v1152, 0.0
          %v1156 = vld [vmem:[%s9] sm:$0xff]
          %v1157 = vld [vmem:[%s9 + $0x8] sm:$0xff]
          %v1158 = vld [vmem:[%s10] sm:$0x1]
          %v1160 = vlaneseq
          %v1161 = vshrl.u32 %v1160, 7
          %v1162 = vsub.s32 0, %v1161
          %v1163 = vrot.slane %v1158, %v1162
          %vm1165 = vcmask 130048
          %v1167 = vsel %vm1165, %v1155, 0
          %1169 = vmatprep.subr.mxu0 0.0
          %1170 = vmatpush1.msra.mxu0 %v1156
          %1171 = vmatprep.subr.mxu0 0.0
          %1172 = vmatpush1.msra.mxu0 %v1157
          %1173 = vmatprep.subr.mxu0 0.0
          %1174 = vmatpush1.msra.mxu0 0.0
          %1175 = vmatprep.subr.mxu0 0.0
          %1176 = vmatpush1.msra.mxu0 0.0
          %1177 = vmatprep.subr.mxu0 0.0
          %1178 = vmatpush1.msra.mxu0 0.0
          %1179 = vmatprep.subr.mxu0 0.0
          %1180 = vmatpush1.msra.mxu0 0.0
          %1181 = vmatprep.subr.mxu0 0.0
          %1182 = vmatpush1.msra.mxu0 0.0
          %1183 = vmatprep.subr.mxu0 0.0
          %1184 = vmatpush1.msra.mxu0 0.0
          %1185 = vmatprep.subr.mxu0 0.0
          %1186 = vmatpush1.msra.mxu0 0.0
          %1187 = vmatprep.subr.mxu0 0.0
          %1188 = vmatpush1.msra.mxu0 0.0
          %1189 = vmatprep.subr.mxu0 0.0
          %1190 = vmatpush1.msra.mxu0 0.0
          %1191 = vmatprep.subr.mxu0 0.0
          %1192 = vmatpush1.msra.mxu0 0.0
          %1193 = vmatprep.subr.mxu0 0.0
          %1194 = vmatpush1.msra.mxu0 0.0
          %1195 = vmatprep.subr.mxu0 0.0
          %1196 = vmatpush1.msra.mxu0 0.0
          %1197 = vmatprep.subr.mxu0 0.0
          %1198 = vmatpush1.msra.mxu0 0.0
          %1199 = vmatprep.subr.mxu0 0.0
          %1200 = vmatpush1.msra.mxu0 0.0
          %1201 = vmatprep.subr.mxu0 0.0
          %1202 = vmatpush1.msra.mxu0 0.0
          %1203 = vmatprep.subr.mxu0 0.0
          %1204 = vmatpush1.msra.mxu0 0.0
          %1205 = vmatprep.subr.mxu0 0.0
          %1206 = vmatpush1.msra.mxu0 0.0
          %1207 = vmatprep.subr.mxu0 0.0
          %1208 = vmatpush1.msra.mxu0 0.0
          %1209 = vmatprep.subr.mxu0 0.0
          %1210 = vmatpush1.msra.mxu0 0.0
          %1211 = vmatprep.subr.mxu0 0.0
          %1212 = vmatpush1.msra.mxu0 0.0
          %1213 = vmatprep.subr.mxu0 0.0
          %1214 = vmatpush1.msra.mxu0 0.0
          %1215 = vmatprep.subr.mxu0 0.0
          %1216 = vmatpush1.msra.mxu0 0.0
          %1217 = vmatprep.subr.mxu0 0.0
          %1218 = vmatpush1.msra.mxu0 0.0
          %1219 = vmatprep.subr.mxu0 0.0
          %1220 = vmatpush1.msra.mxu0 0.0
          %1221 = vmatprep.subr.mxu0 0.0
          %1222 = vmatpush1.msra.mxu0 0.0
          %1223 = vmatprep.subr.mxu0 0.0
          %1224 = vmatpush1.msra.mxu0 0.0
          %1225 = vmatprep.subr.mxu0 0.0
          %1226 = vmatpush1.msra.mxu0 0.0
          %1227 = vmatprep.subr.mxu0 0.0
          %1228 = vmatpush1.msra.mxu0 0.0
          %1229 = vmatprep.subr.mxu0 0.0
          %1230 = vmatpush1.msra.mxu0 0.0
          %1231 = vmatprep.subr.mxu0 0.0
          %1232 = vmatpush1.msra.mxu0 0.0
          %1233 = vmatprep.mubr.f32.mxu0 0.0
          %1234 = vmatmul.mubr.f32.gmra.mrb[0].mxu0 %v1167
          %v1235 = vpop.f32.mrb[0].mxu0
          %v1236 = vadd.f32 %v1163, %v1235
          %v1237 = vpop.f32.mrb[0].mxu0
          %1238 = vdwg.mxu0
          %vm1239 = vcmask 48128
          %1240 = vst.msk [vmem:[#allocation3] sm:$0xff] %vm1239, %v1236
          %s1241 = scalar_lea.smem [#allocation4], 0
          %1242 = sst [smem:[%s1241]] 0.0
          %s1243 = scalar_lea.smem [#allocation4], 1
          %1244 = sst [smem:[%s1243]] 0.0
          %s1245 = scalar_lea.smem [#allocation4], 2
          %1246 = sst [smem:[%s1245]] 0.0
        $region148: #{_fused_forward.1} parent=119 // pred_fallthru
          _
        %v1247 = vld [vmem:[%s12] sm:$0xff]
        %v1248 = vld [vmem:[%s12 + $0x8] sm:$0xff]
        %v1249 = vld [vmem:[%s12 + $0x10] sm:$0xff]
        %v1250 = vld [vmem:[%s12 + $0x18] sm:$0xff]
        %v1251 = vld [vmem:[#allocation14] sm:$0x1]
        %v1252 = vld [vmem:[%s7] sm:$0xff]
        %v1253 = vld [vmem:[%s7 + $0x8] sm:$0xff]
        %v1254 = vld [vmem:[%s7 + $0x10] sm:$0xff]
        %v1255 = vld [vmem:[%s7 + $0x18] sm:$0xff]
        %v1256 = vld [vmem:[%s8] sm:$0x1]
        %v1257 = vld [vmem:[%s9] sm:$0xff]
        %v1258 = vld [vmem:[%s9 + $0x8] sm:$0xff]
        %v1259 = vld [vmem:[%s10] sm:$0x1]
        %v1260 = vld [vmem:[%s11] sm:$0x3f]
        %s1261 = sld [smem:[#allocation6 + %s54]]
        %v1262 = vld [vmem:[#allocation2] sm:$0xff]
        %v1263 = vld [vmem:[#allocation3] sm:$0xff]
        // While loop
        $region149: #{_fused_forward.1} parent=119 // loop_pre_header
          _
        $region150: #{_fused_forward.1} parent=119 // loop_header
          %s1265 = sphi 0, %s1267
          %p1266 = scmp.ge.s32.totalorder %s1265, %s1261
          %v1270 = vphi %v1262, %v1467
          %v1271 = vphi %v1263, %v1618
        $region151: #{_fused_forward.1} parent=119 // loop_header_branch
          %1269 = sbr.rel (%p1266) target = $region155
        $region152: #{_fused_forward.1} parent=119 // loop_body
          %v1273 = vlaneseq
          %v1274 = vshrl.u32 %v1273, 7
          %v1275 = vsub.s32 0, %v1274
          %v1276 = vrot.slane %v1251, %v1275
          %vm1278 = vcmask 261120
          %v1280 = vsel %vm1278, %v1270, 0
          %1282 = vmatprep.subr.mxu0 0.0
          %1283 = vmatpush1.msra.mxu0 %v1247
          %1284 = vmatprep.subr.mxu0 0.0
          %1285 = vmatpush1.msra.mxu0 %v1248
          %1286 = vmatprep.subr.mxu0 0.0
          %1287 = vmatpush1.msra.mxu0 %v1249
          %1288 = vmatprep.subr.mxu0 0.0
          %1289 = vmatpush1.msra.mxu0 %v1250
          %1290 = vmatprep.subr.mxu0 0.0
          %1291 = vmatpush1.msra.mxu0 0.0
          %1292 = vmatprep.subr.mxu0 0.0
          %1293 = vmatpush1.msra.mxu0 0.0
          %1294 = vmatprep.subr.mxu0 0.0
          %1295 = vmatpush1.msra.mxu0 0.0
          %1296 = vmatprep.subr.mxu0 0.0
          %1297 = vmatpush1.msra.mxu0 0.0
          %1298 = vmatprep.subr.mxu0 0.0
          %1299 = vmatpush1.msra.mxu0 0.0
          %1300 = vmatprep.subr.mxu0 0.0
          %1301 = vmatpush1.msra.mxu0 0.0
          %1302 = vmatprep.subr.mxu0 0.0
          %1303 = vmatpush1.msra.mxu0 0.0
          %1304 = vmatprep.subr.mxu0 0.0
          %1305 = vmatpush1.msra.mxu0 0.0
          %1306 = vmatprep.subr.mxu0 0.0
          %1307 = vmatpush1.msra.mxu0 0.0
          %1308 = vmatprep.subr.mxu0 0.0
          %1309 = vmatpush1.msra.mxu0 0.0
          %1310 = vmatprep.subr.mxu0 0.0
          %1311 = vmatpush1.msra.mxu0 0.0
          %1312 = vmatprep.subr.mxu0 0.0
          %1313 = vmatpush1.msra.mxu0 0.0
          %1314 = vmatprep.subr.mxu0 0.0
          %1315 = vmatpush1.msra.mxu0 0.0
          %1316 = vmatprep.subr.mxu0 0.0
          %1317 = vmatpush1.msra.mxu0 0.0
          %1318 = vmatprep.subr.mxu0 0.0
          %1319 = vmatpush1.msra.mxu0 0.0
          %1320 = vmatprep.subr.mxu0 0.0
          %1321 = vmatpush1.msra.mxu0 0.0
          %1322 = vmatprep.subr.mxu0 0.0
          %1323 = vmatpush1.msra.mxu0 0.0
          %1324 = vmatprep.subr.mxu0 0.0
          %1325 = vmatpush1.msra.mxu0 0.0
          %1326 = vmatprep.subr.mxu0 0.0
          %1327 = vmatpush1.msra.mxu0 0.0
          %1328 = vmatprep.subr.mxu0 0.0
          %1329 = vmatpush1.msra.mxu0 0.0
          %1330 = vmatprep.subr.mxu0 0.0
          %1331 = vmatpush1.msra.mxu0 0.0
          %1332 = vmatprep.subr.mxu0 0.0
          %1333 = vmatpush1.msra.mxu0 0.0
          %1334 = vmatprep.subr.mxu0 0.0
          %1335 = vmatpush1.msra.mxu0 0.0
          %1336 = vmatprep.subr.mxu0 0.0
          %1337 = vmatpush1.msra.mxu0 0.0
          %1338 = vmatprep.subr.mxu0 0.0
          %1339 = vmatpush1.msra.mxu0 0.0
          %1340 = vmatprep.subr.mxu0 0.0
          %1341 = vmatpush1.msra.mxu0 0.0
          %1342 = vmatprep.subr.mxu0 0.0
          %1343 = vmatpush1.msra.mxu0 0.0
          %1344 = vmatprep.subr.mxu0 0.0
          %1345 = vmatpush1.msra.mxu0 0.0
          %1346 = vmatprep.mubr.f32.mxu0 0.0
          %1347 = vmatmul.mubr.f32.gmra.mrb[0].mxu0 %v1280
          %v1348 = vpop.f32.mrb[0].mxu0
          %v1349 = vadd.f32 %v1276, %v1348
          %v1350 = vpop.f32.mrb[0].mxu0
          %1351 = vdwg.mxu0
          %vm1352 = vcmask 48128
          %v1354 = vsel %vm1352, %v1271, 0
          %vm1356 = vcmask 1045504
          %v1358 = vsel %vm1356, %v1260, 0
          %1360 = vmatprep.subr.mxu0 0.0
          %1361 = vmatpush1.msra.mxu0 %v1358
          %1362 = vmatprep.subr.mxu0 0.0
          %1363 = vmatpush1.msra.mxu0 0.0
          %1364 = vmatprep.subr.mxu0 0.0
          %1365 = vmatpush1.msra.mxu0 0.0
          %1366 = vmatprep.subr.mxu0 0.0
          %1367 = vmatpush1.msra.mxu0 0.0
          %1368 = vmatprep.subr.mxu0 0.0
          %1369 = vmatpush1.msra.mxu0 0.0
          %1370 = vmatprep.subr.mxu0 0.0
          %1371 = vmatpush1.msra.mxu0 0.0
          %1372 = vmatprep.subr.mxu0 0.0
          %1373 = vmatpush1.msra.mxu0 0.0
          %1374 = vmatprep.subr.mxu0 0.0
          %1375 = vmatpush1.msra.mxu0 0.0
          %1376 = vmatprep.subr.mxu0 0.0
          %1377 = vmatpush1.msra.mxu0 0.0
          %1378 = vmatprep.subr.mxu0 0.0
          %1379 = vmatpush1.msra.mxu0 0.0
          %1380 = vmatprep.subr.mxu0 0.0
          %1381 = vmatpush1.msra.mxu0 0.0
          %1382 = vmatprep.subr.mxu0 0.0
          %1383 = vmatpush1.msra.mxu0 0.0
          %1384 = vmatprep.subr.mxu0 0.0
          %1385 = vmatpush1.msra.mxu0 0.0
          %1386 = vmatprep.subr.mxu0 0.0
          %1387 = vmatpush1.msra.mxu0 0.0
          %1388 = vmatprep.subr.mxu0 0.0
          %1389 = vmatpush1.msra.mxu0 0.0
          %1390 = vmatprep.subr.mxu0 0.0
          %1391 = vmatpush1.msra.mxu0 0.0
          %1392 = vmatprep.subr.mxu0 0.0
          %1393 = vmatpush1.msra.mxu0 0.0
          %1394 = vmatprep.subr.mxu0 0.0
          %1395 = vmatpush1.msra.mxu0 0.0
          %1396 = vmatprep.subr.mxu0 0.0
          %1397 = vmatpush1.msra.mxu0 0.0
          %1398 = vmatprep.subr.mxu0 0.0
          %1399 = vmatpush1.msra.mxu0 0.0
          %1400 = vmatprep.subr.mxu0 0.0
          %1401 = vmatpush1.msra.mxu0 0.0
          %1402 = vmatprep.subr.mxu0 0.0
          %1403 = vmatpush1.msra.mxu0 0.0
          %1404 = vmatprep.subr.mxu0 0.0
          %1405 = vmatpush1.msra.mxu0 0.0
          %1406 = vmatprep.subr.mxu0 0.0
          %1407 = vmatpush1.msra.mxu0 0.0
          %1408 = vmatprep.subr.mxu0 0.0
          %1409 = vmatpush1.msra.mxu0 0.0
          %1410 = vmatprep.subr.mxu0 0.0
          %1411 = vmatpush1.msra.mxu0 0.0
          %1412 = vmatprep.subr.mxu0 0.0
          %1413 = vmatpush1.msra.mxu0 0.0
          %1414 = vmatprep.subr.mxu0 0.0
          %1415 = vmatpush1.msra.mxu0 0.0
          %1416 = vmatprep.subr.mxu0 0.0
          %1417 = vmatpush1.msra.mxu0 0.0
          %1418 = vmatprep.subr.mxu0 0.0
          %1419 = vmatpush1.msra.mxu0 0.0
          %1420 = vmatprep.subr.mxu0 0.0
          %1421 = vmatpush1.msra.mxu0 0.0
          %1422 = vmatprep.subr.mxu0 0.0
          %1423 = vmatpush1.msra.mxu0 0.0
          %1424 = vmatprep.mubr.f32.mxu0 0.0
          %1425 = vmatmul.mubr.f32.gmra.mrb[0].mxu0 %v1354
          %v1426 = vpop.f32.mrb[0].mxu0
          %v1427 = vadd.f32 0.0, %v1426
          %v1428 = vpop.f32.mrb[0].mxu0
          %1429 = vdwg.mxu0
          %v1430 = vadd.f32 %v1349, %v1427
          %v1431 = vxor.u32 %v1430, 2147483648
          %v1432 = vmul.f32 %v1431, 1.442695
          %v1433 = vpow.pop %v1432
          %v1434 = vadd.f32 %v1433, 1.0
          %v1435 = vrcp.pop %v1434
          %v1436 = vmul.f32 1.0, %v1435
          %1438 = vrot.lane.b32.xlu0 %v1430, 32
          %v1439 = vpop.permute.xlu0 %1438
          %v1441 = vmul.f32 %v1436, %v1439
          %1443 = vrot.lane.b32.xlu0 %v1441, 64
          %v1444 = vpop.permute.xlu0 %1443
          %v1446 = vadd.f32 %v1430, %v1444
          %v1447 = vtanh.pop %v1446
          %v1448 = vsub.f32 1.0, %v1436
          %1450 = vrot.lane.b32.xlu0 %v1447, 96
          %v1451 = vpop.permute.xlu0 %1450
          %v1453 = vmul.f32 %v1448, %v1451
          %1454 = vrot.lane.b32.xlu0 %v1270, 32
          %v1455 = vpop.permute.xlu0 %1454
          %v1457 = vmul.f32 %v1436, %v1455
          %v1458 = vadd.f32 %v1453, %v1457
          %v1460 = vlaneseq
          %v1461 = vshrl.u32 %v1460, 7
          %v1462 = vsub.s32 0, %v1461
          %v1463 = vrot.slane %v1256, %v1462
          %1466 = vrot.lane.b32.xlu0 %v1458, 96
          %v1467 = vpop.permute.xlu0 %1466
          %v1468 = vsel %vm1278, %v1467, 0
          %1470 = vmatprep.subr.mxu0 0.0
          %1471 = vmatpush1.msra.mxu0 %v1252
          %1472 = vmatprep.subr.mxu0 0.0
          %1473 = vmatpush1.msra.mxu0 %v1253
          %1474 = vmatprep.subr.mxu0 0.0
          %1475 = vmatpush1.msra.mxu0 %v1254
          %1476 = vmatprep.subr.mxu0 0.0
          %1477 = vmatpush1.msra.mxu0 %v1255
          %1478 = vmatprep.subr.mxu0 0.0
          %1479 = vmatpush1.msra.mxu0 0.0
          %1480 = vmatprep.subr.mxu0 0.0
          %1481 = vmatpush1.msra.mxu0 0.0
          %1482 = vmatprep.subr.mxu0 0.0
          %1483 = vmatpush1.msra.mxu0 0.0
          %1484 = vmatprep.subr.mxu0 0.0
          %1485 = vmatpush1.msra.mxu0 0.0
          %1486 = vmatprep.subr.mxu0 0.0
          %1487 = vmatpush1.msra.mxu0 0.0
          %1488 = vmatprep.subr.mxu0 0.0
          %1489 = vmatpush1.msra.mxu0 0.0
          %1490 = vmatprep.subr.mxu0 0.0
          %1491 = vmatpush1.msra.mxu0 0.0
          %1492 = vmatprep.subr.mxu0 0.0
          %1493 = vmatpush1.msra.mxu0 0.0
          %1494 = vmatprep.subr.mxu0 0.0
          %1495 = vmatpush1.msra.mxu0 0.0
          %1496 = vmatprep.subr.mxu0 0.0
          %1497 = vmatpush1.msra.mxu0 0.0
          %1498 = vmatprep.subr.mxu0 0.0
          %1499 = vmatpush1.msra.mxu0 0.0
          %1500 = vmatprep.subr.mxu0 0.0
          %1501 = vmatpush1.msra.mxu0 0.0
          %1502 = vmatprep.subr.mxu0 0.0
          %1503 = vmatpush1.msra.mxu0 0.0
          %1504 = vmatprep.subr.mxu0 0.0
          %1505 = vmatpush1.msra.mxu0 0.0
          %1506 = vmatprep.subr.mxu0 0.0
          %1507 = vmatpush1.msra.mxu0 0.0
          %1508 = vmatprep.subr.mxu0 0.0
          %1509 = vmatpush1.msra.mxu0 0.0
          %1510 = vmatprep.subr.mxu0 0.0
          %1511 = vmatpush1.msra.mxu0 0.0
          %1512 = vmatprep.subr.mxu0 0.0
          %1513 = vmatpush1.msra.mxu0 0.0
          %1514 = vmatprep.subr.mxu0 0.0
          %1515 = vmatpush1.msra.mxu0 0.0
          %1516 = vmatprep.subr.mxu0 0.0
          %1517 = vmatpush1.msra.mxu0 0.0
          %1518 = vmatprep.subr.mxu0 0.0
          %1519 = vmatpush1.msra.mxu0 0.0
          %1520 = vmatprep.subr.mxu0 0.0
          %1521 = vmatpush1.msra.mxu0 0.0
          %1522 = vmatprep.subr.mxu0 0.0
          %1523 = vmatpush1.msra.mxu0 0.0
          %1524 = vmatprep.subr.mxu0 0.0
          %1525 = vmatpush1.msra.mxu0 0.0
          %1526 = vmatprep.subr.mxu0 0.0
          %1527 = vmatpush1.msra.mxu0 0.0
          %1528 = vmatprep.subr.mxu0 0.0
          %1529 = vmatpush1.msra.mxu0 0.0
          %1530 = vmatprep.subr.mxu0 0.0
          %1531 = vmatpush1.msra.mxu0 0.0
          %1532 = vmatprep.subr.mxu0 0.0
          %1533 = vmatpush1.msra.mxu0 0.0
          %1534 = vmatprep.mubr.f32.mxu0 0.0
          %1535 = vmatmul.mubr.f32.gmra.mrb[0].mxu0 %v1468
          %v1536 = vpop.f32.mrb[0].mxu0
          %v1537 = vadd.f32 %v1463, %v1536
          %v1538 = vpop.f32.mrb[0].mxu0
          %1539 = vdwg.mxu0
          %v1540 = vmax.f32 %v1537, 0.0
          %v1542 = vlaneseq
          %v1543 = vshrl.u32 %v1542, 7
          %v1544 = vsub.s32 0, %v1543
          %v1545 = vrot.slane %v1259, %v1544
          %vm1547 = vcmask 130048
          %v1549 = vsel %vm1547, %v1540, 0
          %1551 = vmatprep.subr.mxu0 0.0
          %1552 = vmatpush1.msra.mxu0 %v1257
          %1553 = vmatprep.subr.mxu0 0.0
          %1554 = vmatpush1.msra.mxu0 %v1258
          %1555 = vmatprep.subr.mxu0 0.0
          %1556 = vmatpush1.msra.mxu0 0.0
          %1557 = vmatprep.subr.mxu0 0.0
          %1558 = vmatpush1.msra.mxu0 0.0
          %1559 = vmatprep.subr.mxu0 0.0
          %1560 = vmatpush1.msra.mxu0 0.0
          %1561 = vmatprep.subr.mxu0 0.0
          %1562 = vmatpush1.msra.mxu0 0.0
          %1563 = vmatprep.subr.mxu0 0.0
          %1564 = vmatpush1.msra.mxu0 0.0
          %1565 = vmatprep.subr.mxu0 0.0
          %1566 = vmatpush1.msra.mxu0 0.0
          %1567 = vmatprep.subr.mxu0 0.0
          %1568 = vmatpush1.msra.mxu0 0.0
          %1569 = vmatprep.subr.mxu0 0.0
          %1570 = vmatpush1.msra.mxu0 0.0
          %1571 = vmatprep.subr.mxu0 0.0
          %1572 = vmatpush1.msra.mxu0 0.0
          %1573 = vmatprep.subr.mxu0 0.0
          %1574 = vmatpush1.msra.mxu0 0.0
          %1575 = vmatprep.subr.mxu0 0.0
          %1576 = vmatpush1.msra.mxu0 0.0
          %1577 = vmatprep.subr.mxu0 0.0
          %1578 = vmatpush1.msra.mxu0 0.0
          %1579 = vmatprep.subr.mxu0 0.0
          %1580 = vmatpush1.msra.mxu0 0.0
          %1581 = vmatprep.subr.mxu0 0.0
          %1582 = vmatpush1.msra.mxu0 0.0
          %1583 = vmatprep.subr.mxu0 0.0
          %1584 = vmatpush1.msra.mxu0 0.0
          %1585 = vmatprep.subr.mxu0 0.0
          %1586 = vmatpush1.msra.mxu0 0.0
          %1587 = vmatprep.subr.mxu0 0.0
          %1588 = vmatpush1.msra.mxu0 0.0
          %1589 = vmatprep.subr.mxu0 0.0
          %1590 = vmatpush1.msra.mxu0 0.0
          %1591 = vmatprep.subr.mxu0 0.0
          %1592 = vmatpush1.msra.mxu0 0.0
          %1593 = vmatprep.subr.mxu0 0.0
          %1594 = vmatpush1.msra.mxu0 0.0
          %1595 = vmatprep.subr.mxu0 0.0
          %1596 = vmatpush1.msra.mxu0 0.0
          %1597 = vmatprep.subr.mxu0 0.0
          %1598 = vmatpush1.msra.mxu0 0.0
          %1599 = vmatprep.subr.mxu0 0.0
          %1600 = vmatpush1.msra.mxu0 0.0
          %1601 = vmatprep.subr.mxu0 0.0
          %1602 = vmatpush1.msra.mxu0 0.0
          %1603 = vmatprep.subr.mxu0 0.0
          %1604 = vmatpush1.msra.mxu0 0.0
          %1605 = vmatprep.subr.mxu0 0.0
          %1606 = vmatpush1.msra.mxu0 0.0
          %1607 = vmatprep.subr.mxu0 0.0
          %1608 = vmatpush1.msra.mxu0 0.0
          %1609 = vmatprep.subr.mxu0 0.0
          %1610 = vmatpush1.msra.mxu0 0.0
          %1611 = vmatprep.subr.mxu0 0.0
          %1612 = vmatpush1.msra.mxu0 0.0
          %1613 = vmatprep.subr.mxu0 0.0
          %1614 = vmatpush1.msra.mxu0 0.0
          %1615 = vmatprep.mubr.f32.mxu0 0.0
          %1616 = vmatmul.mubr.f32.gmra.mrb[0].mxu0 %v1549
          %v1617 = vpop.f32.mrb[0].mxu0
          %v1618 = vadd.f32 %v1545, %v1617
          %v1619 = vpop.f32.mrb[0].mxu0
          %1620 = vdwg.mxu0
        $region153: #{_fused_forward.1} parent=119 // loop_footer
          %s1267 = sadd.s32 %s1265, 1
        $region154: #{_fused_forward.1} parent=119 // loop_footer_branch
          %1264 = sbr.rel target = $region150
        $region155: #{_fused_forward.1} parent=119 // loop_exit
          _
        %vm1622 = vcmask 261120
        %1623 = vst.msk [vmem:[#allocation2] sm:$0xff] %vm1622, %v1270
        %vm1624 = vcmask 48128
        %1625 = vst.msk [vmem:[#allocation3] sm:$0xff] %vm1624, %v1271
        %v1626 = vld [vmem:[%s885] sm:$0xff]
        %v1627 = vld [vmem:[%s889] sm:$0xff]
        %v1628 = vld [vmem:[%s893] sm:$0xff]
        %vm1629 = vcmask 64512
        %v1631 = vsel %vm1629, %v1626, 0
        %1633 = vmatprep.subr.mxu0 0.0
        %1634 = vmatpush1.msra.mxu0 %v1271
        %1635 = vmatprep.subr.mxu0 0.0
        %1636 = vmatpush1.msra.mxu0 0.0
        %1637 = vmatprep.subr.mxu0 0.0
        %1638 = vmatpush1.msra.mxu0 0.0
        %1639 = vmatprep.subr.mxu0 0.0
        %1640 = vmatpush1.msra.mxu0 0.0
        %1641 = vmatprep.subr.mxu0 0.0
        %1642 = vmatpush1.msra.mxu0 0.0
        %1643 = vmatprep.subr.mxu0 0.0
        %1644 = vmatpush1.msra.mxu0 0.0
        %1645 = vmatprep.subr.mxu0 0.0
        %1646 = vmatpush1.msra.mxu0 0.0
        %1647 = vmatprep.subr.mxu0 0.0
        %1648 = vmatpush1.msra.mxu0 0.0
        %1649 = vmatprep.subr.mxu0 0.0
        %1650 = vmatpush1.msra.mxu0 0.0
        %1651 = vmatprep.subr.mxu0 0.0
        %1652 = vmatpush1.msra.mxu0 0.0
        %1653 = vmatprep.subr.mxu0 0.0
        %1654 = vmatpush1.msra.mxu0 0.0
        %1655 = vmatprep.subr.mxu0 0.0
        %1656 = vmatpush1.msra.mxu0 0.0
        %1657 = vmatprep.subr.mxu0 0.0
        %1658 = vmatpush1.msra.mxu0 0.0
        %1659 = vmatprep.subr.mxu0 0.0
        %1660 = vmatpush1.msra.mxu0 0.0
        %1661 = vmatprep.subr.mxu0 0.0
        %1662 = vmatpush1.msra.mxu0 0.0
        %1663 = vmatprep.subr.mxu0 0.0
        %1664 = vmatpush1.msra.mxu0 0.0
        %1665 = vmatprep.subr.mxu0 0.0
        %1666 = vmatpush1.msra.mxu0 0.0
        %1667 = vmatprep.subr.mxu0 0.0
        %1668 = vmatpush1.msra.mxu0 0.0
        %1669 = vmatprep.subr.mxu0 0.0
        %1670 = vmatpush1.msra.mxu0 0.0
        %1671 = vmatprep.subr.mxu0 0.0
        %1672 = vmatpush1.msra.mxu0 0.0
        %1673 = vmatprep.subr.mxu0 0.0
        %1674 = vmatpush1.msra.mxu0 0.0
        %1675 = vmatprep.subr.mxu0 0.0
        %1676 = vmatpush1.msra.mxu0 0.0
        %1677 = vmatprep.subr.mxu0 0.0
        %1678 = vmatpush1.msra.mxu0 0.0
        %1679 = vmatprep.subr.mxu0 0.0
        %1680 = vmatpush1.msra.mxu0 0.0
        %1681 = vmatprep.subr.mxu0 0.0
        %1682 = vmatpush1.msra.mxu0 0.0
        %1683 = vmatprep.subr.mxu0 0.0
        %1684 = vmatpush1.msra.mxu0 0.0
        %1685 = vmatprep.subr.mxu0 0.0
        %1686 = vmatpush1.msra.mxu0 0.0
        %1687 = vmatprep.subr.mxu0 0.0
        %1688 = vmatpush1.msra.mxu0 0.0
        %1689 = vmatprep.subr.mxu0 0.0
        %1690 = vmatpush1.msra.mxu0 0.0
        %1691 = vmatprep.subr.mxu0 0.0
        %1692 = vmatpush1.msra.mxu0 0.0
        %1693 = vmatprep.subr.mxu0 0.0
        %1694 = vmatpush1.msra.mxu0 0.0
        %1695 = vmatprep.subr.mxu0 0.0
        %1696 = vmatpush1.msra.mxu0 0.0
        %1697 = vmatprep.mubr.f32.mxu0 0.0
        %1698 = vmatmul.mubr.f32.gmra.mrb[0].mxu0 %v1631
        %v1699 = vpop.f32.mrb[0].mxu0
        %v1700 = vadd.f32 0.0, %v1699
        %v1701 = vpop.f32.mrb[0].mxu0
        %1702 = vdwg.mxu0
        %vm1703 = vcmp.ne.f32.partialorder %v1627, %v1627
        %v1704 = vsel %vm1703, %v1700, %v1627
        %v1705 = vsub.f32 %v1704, %v1700
        %v1706 = vsub.f32 0.0, %v1700
        %v1707 = vmul.f32 %v1706, 1.442695
        %v1708 = vpow.pop %v1707
        %1710 = vrot.lane.b32.xlu0 %v1708, 125
        %v1711 = vpop.permute.xlu0 %1710
        %v1713 = vmul.f32 %v1705, %v1711
        %v1714 = vmul.f32 %v1713, %v1713
        %v1715 = vmul.f32 %v1700, 2.0
        %1717 = vrot.lane.b32.xlu0 %v1715, 125
        %v1718 = vpop.permute.xlu0 %1717
        %v1720 = vadd.f32 %v1714, %v1718
        %v1721 = vmul.f32 %v1720, %v1628
        %vm1722 = vcmask 23552
        %v1723 = vsel %vm1722, %v1721, 0.0
        %1724 = vadd.xlane.f32.xlu0 %v1723
        %v1725 = vpop.xlane.xlu0 %1724
        %v1726 = vrot.slane %v1725, 4
        %v1727 = vadd.f32 %v1725, %v1726
        %v1728 = vrot.slane %v1727, 2
        %v1729 = vadd.f32 %v1727, %v1728
        %v1730 = vrot.slane %v1729, 1
        %v1731 = vadd.f32 %v1729, %v1730
        %s1732 = vtos %v1731
        %s1733 = smul.f32 %s1732, 0.5
        %s1734 = sld [smem:[#allocation7 + %s54]]
        %p1735 = scmp.ne.s32.totalorder %s1734, 0
        %p1736 = scmp.eq.s32.totalorder %s1734, 0
        // Predicated region
        $region156: #{_fused_forward.1} parent=119 // pred_check
          %p1737 = pneg %p1736
        $region157: #{_fused_forward.1} parent=119 // pred_check_branch
          %1739 = sbr.rel (%p1737) target = $region159
        $region158: #{_fused_forward.1} parent=119 // pred_region
          %s1740 = sld [smem:[#allocation4 + $0x1]]
          %s1741 = sadd.f32 %s1740, %s1733
          %s1742 = scalar_lea.smem [#allocation4], 1
          %1743 = sst [smem:[%s1742]] %s1741
        $region159: #{_fused_forward.1} parent=119 // pred_fallthru
          _
        // Predicated region
        $region160: #{_fused_forward.1} parent=119 // pred_check
          %p1744 = pneg %p1735
        $region161: #{_fused_forward.1} parent=119 // pred_check_branch
          %1746 = sbr.rel (%p1744) target = $region163
        $region162: #{_fused_forward.1} parent=119 // pred_region
          %s1747 = sld [smem:[#allocation4]]
          %s1748 = sadd.f32 %s1747, %s1733
          %s1749 = scalar_lea.smem [#allocation4], 0
          %1750 = sst [smem:[%s1749]] %s1748
          %v1751 = vld [vmem:[%s14] sm:$0x7]
          %v1752 = vld [vmem:[%s15] sm:$0x7]
          %1754 = vrot.lane.b32.xlu0 %v1700, 125
          %v1755 = vpop.permute.xlu0 %1754
          %v1756 = vsel %vm1722, %v1755, 0
          %vm1758 = vcmask 1042432
          %v1760 = vsel %vm1758, %v1752, 0
          %1762 = vmatprep.subr.mxu0 0.0
          %1763 = vmatpush1.msra.mxu0 %v1760
          %1764 = vmatprep.subr.mxu0 0.0
          %1765 = vmatpush1.msra.mxu0 0.0
          %1766 = vmatprep.subr.mxu0 0.0
          %1767 = vmatpush1.msra.mxu0 0.0
          %1768 = vmatprep.subr.mxu0 0.0
          %1769 = vmatpush1.msra.mxu0 0.0
          %1770 = vmatprep.subr.mxu0 0.0
          %1771 = vmatpush1.msra.mxu0 0.0
          %1772 = vmatprep.subr.mxu0 0.0
          %1773 = vmatpush1.msra.mxu0 0.0
          %1774 = vmatprep.subr.mxu0 0.0
          %1775 = vmatpush1.msra.mxu0 0.0
          %1776 = vmatprep.subr.mxu0 0.0
          %1777 = vmatpush1.msra.mxu0 0.0
          %1778 = vmatprep.subr.mxu0 0.0
          %1779 = vmatpush1.msra.mxu0 0.0
          %1780 = vmatprep.subr.mxu0 0.0
          %1781 = vmatpush1.msra.mxu0 0.0
          %1782 = vmatprep.subr.mxu0 0.0
          %1783 = vmatpush1.msra.mxu0 0.0
          %1784 = vmatprep.subr.mxu0 0.0
          %1785 = vmatpush1.msra.mxu0 0.0
          %1786 = vmatprep.subr.mxu0 0.0
          %1787 = vmatpush1.msra.mxu0 0.0
          %1788 = vmatprep.subr.mxu0 0.0
          %1789 = vmatpush1.msra.mxu0 0.0
          %1790 = vmatprep.subr.mxu0 0.0
          %1791 = vmatpush1.msra.mxu0 0.0
          %1792 = vmatprep.subr.mxu0 0.0
          %1793 = vmatpush1.msra.mxu0 0.0
          %1794 = vmatprep.subr.mxu0 0.0
          %1795 = vmatpush1.msra.mxu0 0.0
          %1796 = vmatprep.subr.mxu0 0.0
          %1797 = vmatpush1.msra.mxu0 0.0
          %1798 = vmatprep.subr.mxu0 0.0
          %1799 = vmatpush1.msra.mxu0 0.0
          %1800 = vmatprep.subr.mxu0 0.0
          %1801 = vmatpush1.msra.mxu0 0.0
          %1802 = vmatprep.subr.mxu0 0.0
          %1803 = vmatpush1.msra.mxu0 0.0
          %1804 = vmatprep.subr.mxu0 0.0
          %1805 = vmatpush1.msra.mxu0 0.0
          %1806 = vmatprep.subr.mxu0 0.0
          %1807 = vmatpush1.msra.mxu0 0.0
          %1808 = vmatprep.subr.mxu0 0.0
          %1809 = vmatpush1.msra.mxu0 0.0
          %1810 = vmatprep.subr.mxu0 0.0
          %1811 = vmatpush1.msra.mxu0 0.0
          %1812 = vmatprep.subr.mxu0 0.0
          %1813 = vmatpush1.msra.mxu0 0.0
          %1814 = vmatprep.subr.mxu0 0.0
          %1815 = vmatpush1.msra.mxu0 0.0
          %1816 = vmatprep.subr.mxu0 0.0
          %1817 = vmatpush1.msra.mxu0 0.0
          %1818 = vmatprep.subr.mxu0 0.0
          %1819 = vmatpush1.msra.mxu0 0.0
          %1820 = vmatprep.subr.mxu0 0.0
          %1821 = vmatpush1.msra.mxu0 0.0
          %1822 = vmatprep.subr.mxu0 0.0
          %1823 = vmatpush1.msra.mxu0 0.0
          %1824 = vmatprep.subr.mxu0 0.0
          %1825 = vmatpush1.msra.mxu0 0.0
          %1826 = vmatprep.mubr.f32.mxu0 0.0
          %1827 = vmatmul.mubr.f32.gmra.mrb[0].mxu0 %v1756
          %v1828 = vpop.f32.mrb[0].mxu0
          %v1829 = vadd.f32 0.0, %v1828
          %v1830 = vpop.f32.mrb[0].mxu0
          %1831 = vdwg.mxu0
          %v1832 = vsel %vm1722, %v1700, 0
          %v1835 = vsel %vm1758, %v1751, 0
          %1837 = vmatprep.subr.mxu0 0.0
          %1838 = vmatpush1.msra.mxu0 %v1835
          %1839 = vmatprep.subr.mxu0 0.0
          %1840 = vmatpush1.msra.mxu0 0.0
          %1841 = vmatprep.subr.mxu0 0.0
          %1842 = vmatpush1.msra.mxu0 0.0
          %1843 = vmatprep.subr.mxu0 0.0
          %1844 = vmatpush1.msra.mxu0 0.0
          %1845 = vmatprep.subr.mxu0 0.0
          %1846 = vmatpush1.msra.mxu0 0.0
          %1847 = vmatprep.subr.mxu0 0.0
          %1848 = vmatpush1.msra.mxu0 0.0
          %1849 = vmatprep.subr.mxu0 0.0
          %1850 = vmatpush1.msra.mxu0 0.0
          %1851 = vmatprep.subr.mxu0 0.0
          %1852 = vmatpush1.msra.mxu0 0.0
          %1853 = vmatprep.subr.mxu0 0.0
          %1854 = vmatpush1.msra.mxu0 0.0
          %1855 = vmatprep.subr.mxu0 0.0
          %1856 = vmatpush1.msra.mxu0 0.0
          %1857 = vmatprep.subr.mxu0 0.0
          %1858 = vmatpush1.msra.mxu0 0.0
          %1859 = vmatprep.subr.mxu0 0.0
          %1860 = vmatpush1.msra.mxu0 0.0
          %1861 = vmatprep.subr.mxu0 0.0
          %1862 = vmatpush1.msra.mxu0 0.0
          %1863 = vmatprep.subr.mxu0 0.0
          %1864 = vmatpush1.msra.mxu0 0.0
          %1865 = vmatprep.subr.mxu0 0.0
          %1866 = vmatpush1.msra.mxu0 0.0
          %1867 = vmatprep.subr.mxu0 0.0
          %1868 = vmatpush1.msra.mxu0 0.0
          %1869 = vmatprep.subr.mxu0 0.0
          %1870 = vmatpush1.msra.mxu0 0.0
          %1871 = vmatprep.subr.mxu0 0.0
          %1872 = vmatpush1.msra.mxu0 0.0
          %1873 = vmatprep.subr.mxu0 0.0
          %1874 = vmatpush1.msra.mxu0 0.0
          %1875 = vmatprep.subr.mxu0 0.0
          %1876 = vmatpush1.msra.mxu0 0.0
          %1877 = vmatprep.subr.mxu0 0.0
          %1878 = vmatpush1.msra.mxu0 0.0
          %1879 = vmatprep.subr.mxu0 0.0
          %1880 = vmatpush1.msra.mxu0 0.0
          %1881 = vmatprep.subr.mxu0 0.0
          %1882 = vmatpush1.msra.mxu0 0.0
          %1883 = vmatprep.subr.mxu0 0.0
          %1884 = vmatpush1.msra.mxu0 0.0
          %1885 = vmatprep.subr.mxu0 0.0
          %1886 = vmatpush1.msra.mxu0 0.0
          %1887 = vmatprep.subr.mxu0 0.0
          %1888 = vmatpush1.msra.mxu0 0.0
          %1889 = vmatprep.subr.mxu0 0.0
          %1890 = vmatpush1.msra.mxu0 0.0
          %1891 = vmatprep.subr.mxu0 0.0
          %1892 = vmatpush1.msra.mxu0 0.0
          %1893 = vmatprep.subr.mxu0 0.0
          %1894 = vmatpush1.msra.mxu0 0.0
          %1895 = vmatprep.subr.mxu0 0.0
          %1896 = vmatpush1.msra.mxu0 0.0
          %1897 = vmatprep.subr.mxu0 0.0
          %1898 = vmatpush1.msra.mxu0 0.0
          %1899 = vmatprep.subr.mxu0 0.0
          %1900 = vmatpush1.msra.mxu0 0.0
          %1901 = vmatprep.mubr.f32.mxu0 0.0
          %1902 = vmatmul.mubr.f32.gmra.mrb[0].mxu0 %v1832
          %v1903 = vpop.f32.mrb[0].mxu0
          %v1904 = vadd.f32 %v1829, %v1903
          %v1905 = vpop.f32.mrb[0].mxu0
          %1906 = vdwg.mxu0
          %v1907 = vld [vmem:[%s16] sm:$0x7]
          %v1909 = vsel %vm1722, %v1705, 0
          %v1912 = vsel %vm1758, %v1907, 0
          %1914 = vmatprep.subr.mxu0 0.0
          %1915 = vmatpush1.msra.mxu0 %v1912
          %1916 = vmatprep.subr.mxu0 0.0
          %1917 = vmatpush1.msra.mxu0 0.0
          %1918 = vmatprep.subr.mxu0 0.0
          %1919 = vmatpush1.msra.mxu0 0.0
          %1920 = vmatprep.subr.mxu0 0.0
          %1921 = vmatpush1.msra.mxu0 0.0
          %1922 = vmatprep.subr.mxu0 0.0
          %1923 = vmatpush1.msra.mxu0 0.0
          %1924 = vmatprep.subr.mxu0 0.0
          %1925 = vmatpush1.msra.mxu0 0.0
          %1926 = vmatprep.subr.mxu0 0.0
          %1927 = vmatpush1.msra.mxu0 0.0
          %1928 = vmatprep.subr.mxu0 0.0
          %1929 = vmatpush1.msra.mxu0 0.0
          %1930 = vmatprep.subr.mxu0 0.0
          %1931 = vmatpush1.msra.mxu0 0.0
          %1932 = vmatprep.subr.mxu0 0.0
          %1933 = vmatpush1.msra.mxu0 0.0
          %1934 = vmatprep.subr.mxu0 0.0
          %1935 = vmatpush1.msra.mxu0 0.0
          %1936 = vmatprep.subr.mxu0 0.0
          %1937 = vmatpush1.msra.mxu0 0.0
          %1938 = vmatprep.subr.mxu0 0.0
          %1939 = vmatpush1.msra.mxu0 0.0
          %1940 = vmatprep.subr.mxu0 0.0
          %1941 = vmatpush1.msra.mxu0 0.0
          %1942 = vmatprep.subr.mxu0 0.0
          %1943 = vmatpush1.msra.mxu0 0.0
          %1944 = vmatprep.subr.mxu0 0.0
          %1945 = vmatpush1.msra.mxu0 0.0
          %1946 = vmatprep.subr.mxu0 0.0
          %1947 = vmatpush1.msra.mxu0 0.0
          %1948 = vmatprep.subr.mxu0 0.0
          %1949 = vmatpush1.msra.mxu0 0.0
          %1950 = vmatprep.subr.mxu0 0.0
          %1951 = vmatpush1.msra.mxu0 0.0
          %1952 = vmatprep.subr.mxu0 0.0
          %1953 = vmatpush1.msra.mxu0 0.0
          %1954 = vmatprep.subr.mxu0 0.0
          %1955 = vmatpush1.msra.mxu0 0.0
          %1956 = vmatprep.subr.mxu0 0.0
          %1957 = vmatpush1.msra.mxu0 0.0
          %1958 = vmatprep.subr.mxu0 0.0
          %1959 = vmatpush1.msra.mxu0 0.0
          %1960 = vmatprep.subr.mxu0 0.0
          %1961 = vmatpush1.msra.mxu0 0.0
          %1962 = vmatprep.subr.mxu0 0.0
          %1963 = vmatpush1.msra.mxu0 0.0
          %1964 = vmatprep.subr.mxu0 0.0
          %1965 = vmatpush1.msra.mxu0 0.0
          %1966 = vmatprep.subr.mxu0 0.0
          %1967 = vmatpush1.msra.mxu0 0.0
          %1968 = vmatprep.subr.mxu0 0.0
          %1969 = vmatpush1.msra.mxu0 0.0
          %1970 = vmatprep.subr.mxu0 0.0
          %1971 = vmatpush1.msra.mxu0 0.0
          %1972 = vmatprep.subr.mxu0 0.0
          %1973 = vmatpush1.msra.mxu0 0.0
          %1974 = vmatprep.subr.mxu0 0.0
          %1975 = vmatpush1.msra.mxu0 0.0
          %1976 = vmatprep.subr.mxu0 0.0
          %1977 = vmatpush1.msra.mxu0 0.0
          %1978 = vmatprep.mubr.f32.mxu0 0.0
          %1979 = vmatmul.mubr.f32.gmra.mrb[0].mxu0 %v1909
          %v1980 = vpop.f32.mrb[0].mxu0
          %v1981 = vadd.f32 0.0, %v1980
          %v1982 = vpop.f32.mrb[0].mxu0
          %1983 = vdwg.mxu0
          %v1984 = vadd.f32 %v1904, %v1981
          %v1985 = vld [vmem:[%s17] sm:$0x7]
          %v1987 = vsel %vm1722, %v1713, 0
          %v1990 = vsel %vm1758, %v1985, 0
          %1992 = vmatprep.subr.mxu0 0.0
          %1993 = vmatpush1.msra.mxu0 %v1990
          %1994 = vmatprep.subr.mxu0 0.0
          %1995 = vmatpush1.msra.mxu0 0.0
          %1996 = vmatprep.subr.mxu0 0.0
          %1997 = vmatpush1.msra.mxu0 0.0
          %1998 = vmatprep.subr.mxu0 0.0
          %1999 = vmatpush1.msra.mxu0 0.0
          %2000 = vmatprep.subr.mxu0 0.0
          %2001 = vmatpush1.msra.mxu0 0.0
          %2002 = vmatprep.subr.mxu0 0.0
          %2003 = vmatpush1.msra.mxu0 0.0
          %2004 = vmatprep.subr.mxu0 0.0
          %2005 = vmatpush1.msra.mxu0 0.0
          %2006 = vmatprep.subr.mxu0 0.0
          %2007 = vmatpush1.msra.mxu0 0.0
          %2008 = vmatprep.subr.mxu0 0.0
          %2009 = vmatpush1.msra.mxu0 0.0
          %2010 = vmatprep.subr.mxu0 0.0
          %2011 = vmatpush1.msra.mxu0 0.0
          %2012 = vmatprep.subr.mxu0 0.0
          %2013 = vmatpush1.msra.mxu0 0.0
          %2014 = vmatprep.subr.mxu0 0.0
          %2015 = vmatpush1.msra.mxu0 0.0
          %2016 = vmatprep.subr.mxu0 0.0
          %2017 = vmatpush1.msra.mxu0 0.0
          %2018 = vmatprep.subr.mxu0 0.0
          %2019 = vmatpush1.msra.mxu0 0.0
          %2020 = vmatprep.subr.mxu0 0.0
          %2021 = vmatpush1.msra.mxu0 0.0
          %2022 = vmatprep.subr.mxu0 0.0
          %2023 = vmatpush1.msra.mxu0 0.0
          %2024 = vmatprep.subr.mxu0 0.0
          %2025 = vmatpush1.msra.mxu0 0.0
          %2026 = vmatprep.subr.mxu0 0.0
          %2027 = vmatpush1.msra.mxu0 0.0
          %2028 = vmatprep.subr.mxu0 0.0
          %2029 = vmatpush1.msra.mxu0 0.0
          %2030 = vmatprep.subr.mxu0 0.0
          %2031 = vmatpush1.msra.mxu0 0.0
          %2032 = vmatprep.subr.mxu0 0.0
          %2033 = vmatpush1.msra.mxu0 0.0
          %2034 = vmatprep.subr.mxu0 0.0
          %2035 = vmatpush1.msra.mxu0 0.0
          %2036 = vmatprep.subr.mxu0 0.0
          %2037 = vmatpush1.msra.mxu0 0.0
          %2038 = vmatprep.subr.mxu0 0.0
          %2039 = vmatpush1.msra.mxu0 0.0
          %2040 = vmatprep.subr.mxu0 0.0
          %2041 = vmatpush1.msra.mxu0 0.0
          %2042 = vmatprep.subr.mxu0 0.0
          %2043 = vmatpush1.msra.mxu0 0.0
          %2044 = vmatprep.subr.mxu0 0.0
          %2045 = vmatpush1.msra.mxu0 0.0
          %2046 = vmatprep.subr.mxu0 0.0
          %2047 = vmatpush1.msra.mxu0 0.0
          %2048 = vmatprep.subr.mxu0 0.0
          %2049 = vmatpush1.msra.mxu0 0.0
          %2050 = vmatprep.subr.mxu0 0.0
          %2051 = vmatpush1.msra.mxu0 0.0
          %2052 = vmatprep.subr.mxu0 0.0
          %2053 = vmatpush1.msra.mxu0 0.0
          %2054 = vmatprep.subr.mxu0 0.0
          %2055 = vmatpush1.msra.mxu0 0.0
          %2056 = vmatprep.mubr.f32.mxu0 0.0
          %2057 = vmatmul.mubr.f32.gmra.mrb[0].mxu0 %v1987
          %v2058 = vpop.f32.mrb[0].mxu0
          %v2059 = vadd.f32 0.0, %v2058
          %v2060 = vpop.f32.mrb[0].mxu0
          %2061 = vdwg.mxu0
          %v2062 = vadd.f32 %v1984, %v2059
          %v2063 = vld [vmem:[#allocation15] sm:$0x1]
          %v2065 = vlaneseq
          %v2066 = vshrl.u32 %v2065, 7
          %v2067 = vsub.s32 0, %v2066
          %v2068 = vrot.slane %v2063, %v2067
          %v2070 = vadd.f32 %v2062, %v2068
          %v2071 = vmax.f32 %v2070, 0.0
          %v2072 = vld [vmem:[%s19] sm:$0x7]
          %v2074 = vsel %vm1722, %v1628, 0
          %v2077 = vsel %vm1758, %v2072, 0
          %2079 = vmatprep.subr.mxu0 0.0
          %2080 = vmatpush1.msra.mxu0 %v2077
          %2081 = vmatprep.subr.mxu0 0.0
          %2082 = vmatpush1.msra.mxu0 0.0
          %2083 = vmatprep.subr.mxu0 0.0
          %2084 = vmatpush1.msra.mxu0 0.0
          %2085 = vmatprep.subr.mxu0 0.0
          %2086 = vmatpush1.msra.mxu0 0.0
          %2087 = vmatprep.subr.mxu0 0.0
          %2088 = vmatpush1.msra.mxu0 0.0
          %2089 = vmatprep.subr.mxu0 0.0
          %2090 = vmatpush1.msra.mxu0 0.0
          %2091 = vmatprep.subr.mxu0 0.0
          %2092 = vmatpush1.msra.mxu0 0.0
          %2093 = vmatprep.subr.mxu0 0.0
          %2094 = vmatpush1.msra.mxu0 0.0
          %2095 = vmatprep.subr.mxu0 0.0
          %2096 = vmatpush1.msra.mxu0 0.0
          %2097 = vmatprep.subr.mxu0 0.0
          %2098 = vmatpush1.msra.mxu0 0.0
          %2099 = vmatprep.subr.mxu0 0.0
          %2100 = vmatpush1.msra.mxu0 0.0
          %2101 = vmatprep.subr.mxu0 0.0
          %2102 = vmatpush1.msra.mxu0 0.0
          %2103 = vmatprep.subr.mxu0 0.0
          %2104 = vmatpush1.msra.mxu0 0.0
          %2105 = vmatprep.subr.mxu0 0.0
          %2106 = vmatpush1.msra.mxu0 0.0
          %2107 = vmatprep.subr.mxu0 0.0
          %2108 = vmatpush1.msra.mxu0 0.0
          %2109 = vmatprep.subr.mxu0 0.0
          %2110 = vmatpush1.msra.mxu0 0.0
          %2111 = vmatprep.subr.mxu0 0.0
          %2112 = vmatpush1.msra.mxu0 0.0
          %2113 = vmatprep.subr.mxu0 0.0
          %2114 = vmatpush1.msra.mxu0 0.0
          %2115 = vmatprep.subr.mxu0 0.0
          %2116 = vmatpush1.msra.mxu0 0.0
          %2117 = vmatprep.subr.mxu0 0.0
          %2118 = vmatpush1.msra.mxu0 0.0
          %2119 = vmatprep.subr.mxu0 0.0
          %2120 = vmatpush1.msra.mxu0 0.0
          %2121 = vmatprep.subr.mxu0 0.0
          %2122 = vmatpush1.msra.mxu0 0.0
          %2123 = vmatprep.subr.mxu0 0.0
          %2124 = vmatpush1.msra.mxu0 0.0
          %2125 = vmatprep.subr.mxu0 0.0
          %2126 = vmatpush1.msra.mxu0 0.0
          %2127 = vmatprep.subr.mxu0 0.0
          %2128 = vmatpush1.msra.mxu0 0.0
          %2129 = vmatprep.subr.mxu0 0.0
          %2130 = vmatpush1.msra.mxu0 0.0
          %2131 = vmatprep.subr.mxu0 0.0
          %2132 = vmatpush1.msra.mxu0 0.0
          %2133 = vmatprep.subr.mxu0 0.0
          %2134 = vmatpush1.msra.mxu0 0.0
          %2135 = vmatprep.subr.mxu0 0.0
          %2136 = vmatpush1.msra.mxu0 0.0
          %2137 = vmatprep.subr.mxu0 0.0
          %2138 = vmatpush1.msra.mxu0 0.0
          %2139 = vmatprep.subr.mxu0 0.0
          %2140 = vmatpush1.msra.mxu0 0.0
          %2141 = vmatprep.subr.mxu0 0.0
          %2142 = vmatpush1.msra.mxu0 0.0
          %2143 = vmatprep.mubr.f32.mxu0 0.0
          %2144 = vmatmul.mubr.f32.gmra.mrb[0].mxu0 %v2074
          %v2145 = vpop.f32.mrb[0].mxu0
          %v2146 = vadd.f32 0.0, %v2145
          %v2147 = vpop.f32.mrb[0].mxu0
          %2148 = vdwg.mxu0
          %v2149 = vmul.f32 %v2071, %v2146
          %2150 = vmatprep.subr.mxu0 0.0
          %2151 = vmatpush1.msra.mxu0 %v1270
          %2152 = vmatprep.subr.mxu0 0.0
          %2153 = vmatpush1.msra.mxu0 0.0
          %2154 = vmatprep.subr.mxu0 0.0
          %2155 = vmatpush1.msra.mxu0 0.0
          %2156 = vmatprep.subr.mxu0 0.0
          %2157 = vmatpush1.msra.mxu0 0.0
          %2158 = vmatprep.subr.mxu0 0.0
          %2159 = vmatpush1.msra.mxu0 0.0
          %2160 = vmatprep.subr.mxu0 0.0
          %2161 = vmatpush1.msra.mxu0 0.0
          %2162 = vmatprep.subr.mxu0 0.0
          %2163 = vmatpush1.msra.mxu0 0.0
          %2164 = vmatprep.subr.mxu0 0.0
          %2165 = vmatpush1.msra.mxu0 0.0
          %2166 = vmatprep.subr.mxu0 0.0
          %2167 = vmatpush1.msra.mxu0 0.0
          %2168 = vmatprep.subr.mxu0 0.0
          %2169 = vmatpush1.msra.mxu0 0.0
          %2170 = vmatprep.subr.mxu0 0.0
          %2171 = vmatpush1.msra.mxu0 0.0
          %2172 = vmatprep.subr.mxu0 0.0
          %2173 = vmatpush1.msra.mxu0 0.0
          %2174 = vmatprep.subr.mxu0 0.0
          %2175 = vmatpush1.msra.mxu0 0.0
          %2176 = vmatprep.subr.mxu0 0.0
          %2177 = vmatpush1.msra.mxu0 0.0
          %2178 = vmatprep.subr.mxu0 0.0
          %2179 = vmatpush1.msra.mxu0 0.0
          %2180 = vmatprep.subr.mxu0 0.0
          %2181 = vmatpush1.msra.mxu0 0.0
          %2182 = vmatprep.subr.mxu0 0.0
          %2183 = vmatpush1.msra.mxu0 0.0
          %2184 = vmatprep.subr.mxu0 0.0
          %2185 = vmatpush1.msra.mxu0 0.0
          %2186 = vmatprep.subr.mxu0 0.0
          %2187 = vmatpush1.msra.mxu0 0.0
          %2188 = vmatprep.subr.mxu0 0.0
          %2189 = vmatpush1.msra.mxu0 0.0
          %2190 = vmatprep.subr.mxu0 0.0
          %2191 = vmatpush1.msra.mxu0 0.0
          %2192 = vmatprep.subr.mxu0 0.0
          %2193 = vmatpush1.msra.mxu0 0.0
          %2194 = vmatprep.subr.mxu0 0.0
          %2195 = vmatpush1.msra.mxu0 0.0
          %2196 = vmatprep.subr.mxu0 0.0
          %2197 = vmatpush1.msra.mxu0 0.0
          %2198 = vmatprep.subr.mxu0 0.0
          %2199 = vmatpush1.msra.mxu0 0.0
          %2200 = vmatprep.subr.mxu0 0.0
          %2201 = vmatpush1.msra.mxu0 0.0
          %2202 = vmatprep.subr.mxu0 0.0
          %2203 = vmatpush1.msra.mxu0 0.0
          %2204 = vmatprep.subr.mxu0 0.0
          %2205 = vmatpush1.msra.mxu0 0.0
          %2206 = vmatprep.subr.mxu0 0.0
          %2207 = vmatpush1.msra.mxu0 0.0
          %2208 = vmatprep.subr.mxu0 0.0
          %2209 = vmatpush1.msra.mxu0 0.0
          %2210 = vmatprep.subr.mxu0 0.0
          %2211 = vmatpush1.msra.mxu0 0.0
          %2212 = vmatprep.subr.mxu0 0.0
          %2213 = vmatpush1.msra.mxu0 0.0
          %2214 = vmatprep.mubr.f32.mxu0 0.0
          %2215 = vmatmul.mubr.f32.gmra.mrb[0].mxu0 %v1631
          %v2216 = vpop.f32.mrb[0].mxu0
          %v2217 = vadd.f32 0.0, %v2216
          %v2218 = vpop.f32.mrb[0].mxu0
          %2219 = vdwg.mxu0
          %v2220 = vld [vmem:[%s20] sm:$0xff]
          %v2221 = vld [vmem:[%s20 + $0x8] sm:$0xf]
          %v2222 = vld [vmem:[#allocation17] sm:$0x7]
          %v2224 = vsel %vm1758, %v2222, 0
          %2226 = vmatprep.subr.mxu0 0.0
          %2227 = vmatpush1.msra.mxu0 %v2224
          %2228 = vmatprep.subr.mxu0 0.0
          %2229 = vmatpush1.msra.mxu0 0.0
          %2230 = vmatprep.subr.mxu0 0.0
          %2231 = vmatpush1.msra.mxu0 0.0
          %2232 = vmatprep.subr.mxu0 0.0
          %2233 = vmatpush1.msra.mxu0 0.0
          %2234 = vmatprep.subr.mxu0 0.0
          %2235 = vmatpush1.msra.mxu0 0.0
          %2236 = vmatprep.subr.mxu0 0.0
          %2237 = vmatpush1.msra.mxu0 0.0
          %2238 = vmatprep.subr.mxu0 0.0
          %2239 = vmatpush1.msra.mxu0 0.0
          %2240 = vmatprep.subr.mxu0 0.0
          %2241 = vmatpush1.msra.mxu0 0.0
          %2242 = vmatprep.subr.mxu0 0.0
          %2243 = vmatpush1.msra.mxu0 0.0
          %2244 = vmatprep.subr.mxu0 0.0
          %2245 = vmatpush1.msra.mxu0 0.0
          %2246 = vmatprep.subr.mxu0 0.0
          %2247 = vmatpush1.msra.mxu0 0.0
          %2248 = vmatprep.subr.mxu0 0.0
          %2249 = vmatpush1.msra.mxu0 0.0
          %2250 = vmatprep.subr.mxu0 0.0
          %2251 = vmatpush1.msra.mxu0 0.0
          %2252 = vmatprep.subr.mxu0 0.0
          %2253 = vmatpush1.msra.mxu0 0.0
          %2254 = vmatprep.subr.mxu0 0.0
          %2255 = vmatpush1.msra.mxu0 0.0
          %2256 = vmatprep.subr.mxu0 0.0
          %2257 = vmatpush1.msra.mxu0 0.0
          %2258 = vmatprep.subr.mxu0 0.0
          %2259 = vmatpush1.msra.mxu0 0.0
          %2260 = vmatprep.subr.mxu0 0.0
          %2261 = vmatpush1.msra.mxu0 0.0
          %2262 = vmatprep.subr.mxu0 0.0
          %2263 = vmatpush1.msra.mxu0 0.0
          %2264 = vmatprep.subr.mxu0 0.0
          %2265 = vmatpush1.msra.mxu0 0.0
          %2266 = vmatprep.subr.mxu0 0.0
          %2267 = vmatpush1.msra.mxu0 0.0
          %2268 = vmatprep.subr.mxu0 0.0
          %2269 = vmatpush1.msra.mxu0 0.0
          %2270 = vmatprep.subr.mxu0 0.0
          %2271 = vmatpush1.msra.mxu0 0.0
          %2272 = vmatprep.subr.mxu0 0.0
          %2273 = vmatpush1.msra.mxu0 0.0
          %2274 = vmatprep.subr.mxu0 0.0
          %2275 = vmatpush1.msra.mxu0 0.0
          %2276 = vmatprep.subr.mxu0 0.0
          %2277 = vmatpush1.msra.mxu0 0.0
          %2278 = vmatprep.subr.mxu0 0.0
          %2279 = vmatpush1.msra.mxu0 0.0
          %2280 = vmatprep.subr.mxu0 0.0
          %2281 = vmatpush1.msra.mxu0 0.0
          %2282 = vmatprep.subr.mxu0 0.0
          %2283 = vmatpush1.msra.mxu0 0.0
          %2284 = vmatprep.subr.mxu0 0.0
          %2285 = vmatpush1.msra.mxu0 0.0
          %2286 = vmatprep.subr.mxu0 0.0
          %2287 = vmatpush1.msra.mxu0 0.0
          %2288 = vmatprep.subr.mxu0 0.0
          %2289 = vmatpush1.msra.mxu0 0.0
          %2290 = vmatprep.mubr.f32.mxu0 0.0
          %2291 = vmatmul.mubr.f32.gmra.mrb[0].mxu0 %v2074
          %v2292 = vpop.f32.mrb[0].mxu0
          %v2293 = vadd.f32 0.0, %v2292
          %v2294 = vpop.f32.mrb[0].mxu0
          %2295 = vdwg.mxu0
          %vm2296 = vcmask 97280
          %v2298 = vsel %vm2296, %v2149, 0
          %vm2300 = vcmask 1043456
          %v2302 = vsel %vm2300, %v2221, 0
          %2304 = vmatprep.subr.mxu0 0.0
          %2305 = vmatpush1.msra.mxu0 %v2220
          %2306 = vmatprep.subr.mxu0 0.0
          %2307 = vmatpush1.msra.mxu0 %v2302
          %2308 = vmatprep.subr.mxu0 0.0
          %2309 = vmatpush1.msra.mxu0 0.0
          %2310 = vmatprep.subr.mxu0 0.0
          %2311 = vmatpush1.msra.mxu0 0.0
          %2312 = vmatprep.subr.mxu0 0.0
          %2313 = vmatpush1.msra.mxu0 0.0
          %2314 = vmatprep.subr.mxu0 0.0
          %2315 = vmatpush1.msra.mxu0 0.0
          %2316 = vmatprep.subr.mxu0 0.0
          %2317 = vmatpush1.msra.mxu0 0.0
          %2318 = vmatprep.subr.mxu0 0.0
          %2319 = vmatpush1.msra.mxu0 0.0
          %2320 = vmatprep.subr.mxu0 0.0
          %2321 = vmatpush1.msra.mxu0 0.0
          %2322 = vmatprep.subr.mxu0 0.0
          %2323 = vmatpush1.msra.mxu0 0.0
          %2324 = vmatprep.subr.mxu0 0.0
          %2325 = vmatpush1.msra.mxu0 0.0
          %2326 = vmatprep.subr.mxu0 0.0
          %2327 = vmatpush1.msra.mxu0 0.0
          %2328 = vmatprep.subr.mxu0 0.0
          %2329 = vmatpush1.msra.mxu0 0.0
          %2330 = vmatprep.subr.mxu0 0.0
          %2331 = vmatpush1.msra.mxu0 0.0
          %2332 = vmatprep.subr.mxu0 0.0
          %2333 = vmatpush1.msra.mxu0 0.0
          %2334 = vmatprep.subr.mxu0 0.0
          %2335 = vmatpush1.msra.mxu0 0.0
          %2336 = vmatprep.subr.mxu0 0.0
          %2337 = vmatpush1.msra.mxu0 0.0
          %2338 = vmatprep.subr.mxu0 0.0
          %2339 = vmatpush1.msra.mxu0 0.0
          %2340 = vmatprep.subr.mxu0 0.0
          %2341 = vmatpush1.msra.mxu0 0.0
          %2342 = vmatprep.subr.mxu0 0.0
          %2343 = vmatpush1.msra.mxu0 0.0
          %2344 = vmatprep.subr.mxu0 0.0
          %2345 = vmatpush1.msra.mxu0 0.0
          %2346 = vmatprep.subr.mxu0 0.0
          %2347 = vmatpush1.msra.mxu0 0.0
          %2348 = vmatprep.subr.mxu0 0.0
          %2349 = vmatpush1.msra.mxu0 0.0
          %2350 = vmatprep.subr.mxu0 0.0
          %2351 = vmatpush1.msra.mxu0 0.0
          %2352 = vmatprep.subr.mxu0 0.0
          %2353 = vmatpush1.msra.mxu0 0.0
          %2354 = vmatprep.subr.mxu0 0.0
          %2355 = vmatpush1.msra.mxu0 0.0
          %2356 = vmatprep.subr.mxu0 0.0
          %2357 = vmatpush1.msra.mxu0 0.0
          %2358 = vmatprep.subr.mxu0 0.0
          %2359 = vmatpush1.msra.mxu0 0.0
          %2360 = vmatprep.subr.mxu0 0.0
          %2361 = vmatpush1.msra.mxu0 0.0
          %2362 = vmatprep.subr.mxu0 0.0
          %2363 = vmatpush1.msra.mxu0 0.0
          %2364 = vmatprep.subr.mxu0 0.0
          %2365 = vmatpush1.msra.mxu0 0.0
          %2366 = vmatprep.subr.mxu0 0.0
          %2367 = vmatpush1.msra.mxu0 0.0
          %2368 = vmatprep.mubr.f32.mxu0 0.0
          %2369 = vmatmul.mubr.f32.gmra.mrb[0].mxu0 %v2298
          %v2370 = vpop.f32.mrb[0].mxu0
          %v2371 = vadd.f32 %v2293, %v2370
          %v2372 = vpop.f32.mrb[0].mxu0
          %2373 = vdwg.mxu0
          %v2374 = vld [vmem:[%s22] sm:$0xff]
          %v2375 = vld [vmem:[%s22 + $0x8] sm:$0xff]
          %v2376 = vld [vmem:[%s22 + $0x10] sm:$0xff]
          %v2377 = vld [vmem:[%s22 + $0x18] sm:$0xff]
          %v2379 = vsel %vm1622, %v2217, 0
          %2381 = vmatprep.subr.mxu0 0.0
          %2382 = vmatpush1.msra.mxu0 %v2374
          %2383 = vmatprep.subr.mxu0 0.0
          %2384 = vmatpush1.msra.mxu0 %v2375
          %2385 = vmatprep.subr.mxu0 0.0
          %2386 = vmatpush1.msra.mxu0 %v2376
          %2387 = vmatprep.subr.mxu0 0.0
          %2388 = vmatpush1.msra.mxu0 %v2377
          %2389 = vmatprep.subr.mxu0 0.0
          %2390 = vmatpush1.msra.mxu0 0.0
          %2391 = vmatprep.subr.mxu0 0.0
          %2392 = vmatpush1.msra.mxu0 0.0
          %2393 = vmatprep.subr.mxu0 0.0
          %2394 = vmatpush1.msra.mxu0 0.0
          %2395 = vmatprep.subr.mxu0 0.0
          %2396 = vmatpush1.msra.mxu0 0.0
          %2397 = vmatprep.subr.mxu0 0.0
          %2398 = vmatpush1.msra.mxu0 0.0
          %2399 = vmatprep.subr.mxu0 0.0
          %2400 = vmatpush1.msra.mxu0 0.0
          %2401 = vmatprep.subr.mxu0 0.0
          %2402 = vmatpush1.msra.mxu0 0.0
          %2403 = vmatprep.subr.mxu0 0.0
          %2404 = vmatpush1.msra.mxu0 0.0
          %2405 = vmatprep.subr.mxu0 0.0
          %2406 = vmatpush1.msra.mxu0 0.0
          %2407 = vmatprep.subr.mxu0 0.0
          %2408 = vmatpush1.msra.mxu0 0.0
          %2409 = vmatprep.subr.mxu0 0.0
          %2410 = vmatpush1.msra.mxu0 0.0
          %2411 = vmatprep.subr.mxu0 0.0
          %2412 = vmatpush1.msra.mxu0 0.0
          %2413 = vmatprep.subr.mxu0 0.0
          %2414 = vmatpush1.msra.mxu0 0.0
          %2415 = vmatprep.subr.mxu0 0.0
          %2416 = vmatpush1.msra.mxu0 0.0
          %2417 = vmatprep.subr.mxu0 0.0
          %2418 = vmatpush1.msra.mxu0 0.0
          %2419 = vmatprep.subr.mxu0 0.0
          %2420 = vmatpush1.msra.mxu0 0.0
          %2421 = vmatprep.subr.mxu0 0.0
          %2422 = vmatpush1.msra.mxu0 0.0
          %2423 = vmatprep.subr.mxu0 0.0
          %2424 = vmatpush1.msra.mxu0 0.0
          %2425 = vmatprep.subr.mxu0 0.0
          %2426 = vmatpush1.msra.mxu0 0.0
          %2427 = vmatprep.subr.mxu0 0.0
          %2428 = vmatpush1.msra.mxu0 0.0
          %2429 = vmatprep.subr.mxu0 0.0
          %2430 = vmatpush1.msra.mxu0 0.0
          %2431 = vmatprep.subr.mxu0 0.0
          %2432 = vmatpush1.msra.mxu0 0.0
          %2433 = vmatprep.subr.mxu0 0.0
          %2434 = vmatpush1.msra.mxu0 0.0
          %2435 = vmatprep.subr.mxu0 0.0
          %2436 = vmatpush1.msra.mxu0 0.0
          %2437 = vmatprep.subr.mxu0 0.0
          %2438 = vmatpush1.msra.mxu0 0.0
          %2439 = vmatprep.subr.mxu0 0.0
          %2440 = vmatpush1.msra.mxu0 0.0
          %2441 = vmatprep.subr.mxu0 0.0
          %2442 = vmatpush1.msra.mxu0 0.0
          %2443 = vmatprep.subr.mxu0 0.0
          %2444 = vmatpush1.msra.mxu0 0.0
          %2445 = vmatprep.mubr.f32.mxu0 0.0
          %2446 = vmatmul.mubr.f32.gmra.mrb[0].mxu0 %v2379
          %v2447 = vpop.f32.mrb[0].mxu0
          %v2448 = vadd.f32 0.0, %v2447
          %v2449 = vpop.f32.mrb[0].mxu0
          %2450 = vdwg.mxu0
          %v2451 = vadd.f32 %v2371, %v2448
          %v2452 = vld [vmem:[#allocation18] sm:$0x1]
          %v2454 = vlaneseq
          %v2455 = vshrl.u32 %v2454, 7
          %v2456 = vsub.s32 0, %v2455
          %v2457 = vrot.slane %v2452, %v2456
          %v2459 = vadd.f32 %v2451, %v2457
          %v2460 = vxor.u32 %v2459, 2147483648
          %v2461 = vmul.f32 %v2460, 1.442695
          %v2462 = vpow.pop %v2461
          %v2463 = vadd.f32 %v2462, 1.0
          %v2464 = vrcp.pop %v2463
          %v2465 = vmul.f32 1.0, %v2464
          %2467 = vrot.lane.b32.xlu0 %v2459, 32
          %v2468 = vpop.permute.xlu0 %2467
          %v2470 = vmul.f32 %v2465, %v2468
          %2472 = vrot.lane.b32.xlu0 %v2470, 64
          %v2473 = vpop.permute.xlu0 %2472
          %v2475 = vadd.f32 %v2459, %v2473
          %v2476 = vtanh.pop %v2475
          %v2477 = vsub.f32 1.0, %v2465
          %2479 = vrot.lane.b32.xlu0 %v2476, 96
          %v2480 = vpop.permute.xlu0 %2479
          %v2482 = vmul.f32 %v2477, %v2480
          %2483 = vrot.lane.b32.xlu0 %v2217, 32
          %v2484 = vpop.permute.xlu0 %2483
          %v2486 = vmul.f32 %v2465, %v2484
          %v2487 = vadd.f32 %v2482, %v2486
          %2488 = vxpose.xlu0.b32.start [1/16] %v1626, 128
          %2489 = vxpose.xlu0.b32.cont [2/16] 0.0, 128
          %2490 = vxpose.xlu0.b32.cont [3/16] 0.0, 128
          %2491 = vxpose.xlu0.b32.cont [4/16] 0.0, 128
          %2492 = vxpose.xlu0.b32.cont [5/16] 0.0, 128
          %2493 = vxpose.xlu0.b32.cont [6/16] 0.0, 128
          %2494 = vxpose.xlu0.b32.cont [7/16] 0.0, 128
          %2495 = vxpose.xlu0.b32.cont [8/16] 0.0, 128
          %2496 = vxpose.xlu0.b32.cont [9/16] 0.0, 128
          %2497 = vxpose.xlu0.b32.cont [10/16] 0.0, 128
          %2498 = vxpose.xlu0.b32.cont [11/16] 0.0, 128
          %2499 = vxpose.xlu0.b32.cont [12/16] 0.0, 128
          %2500 = vxpose.xlu0.b32.cont [13/16] 0.0, 128
          %2501 = vxpose.xlu0.b32.cont [14/16] 0.0, 128
          %2502 = vxpose.xlu0.b32.cont [15/16] 0.0, 128
          %2503 = vxpose.xlu0.b32.end [16/16] 0.0, 128
          %v2504 = vpop.trf.xlu0
          %v2505 = vpop.trf.xlu0
          %v2506 = vpop.trf.xlu0
          %v2507 = vpop.trf.xlu0
          %v2508 = vpop.trf.xlu0
          %v2509 = vpop.trf.xlu0
          %v2510 = vpop.trf.xlu0
          %v2511 = vpop.trf.xlu0
          %v2512 = vpop.trf.xlu0
          %v2513 = vpop.trf.xlu0
          %v2514 = vpop.trf.xlu0
          %v2515 = vpop.trf.xlu0
          %v2516 = vpop.trf.xlu0
          %v2517 = vpop.trf.xlu0
          %v2518 = vpop.trf.xlu0
          %v2519 = vpop.trf.xlu0
          %2521 = vrot.lane.b32.xlu0 %v2487, 96
          %v2522 = vpop.permute.xlu0 %2521
          %v2525 = vsel %vm1629, %v2504, 0
          %2527 = vmatprep.subr.mxu0 0.0
          %2528 = vmatpush1.msra.mxu0 %v2522
          %2529 = vmatprep.subr.mxu0 0.0
          %2530 = vmatpush1.msra.mxu0 0.0
          %2531 = vmatprep.subr.mxu0 0.0
          %2532 = vmatpush1.msra.mxu0 0.0
          %2533 = vmatprep.subr.mxu0 0.0
          %2534 = vmatpush1.msra.mxu0 0.0
          %2535 = vmatprep.subr.mxu0 0.0
          %2536 = vmatpush1.msra.mxu0 0.0
          %2537 = vmatprep.subr.mxu0 0.0
          %2538 = vmatpush1.msra.mxu0 0.0
          %2539 = vmatprep.subr.mxu0 0.0
          %2540 = vmatpush1.msra.mxu0 0.0
          %2541 = vmatprep.subr.mxu0 0.0
          %2542 = vmatpush1.msra.mxu0 0.0
          %2543 = vmatprep.subr.mxu0 0.0
          %2544 = vmatpush1.msra.mxu0 0.0
          %2545 = vmatprep.subr.mxu0 0.0
          %2546 = vmatpush1.msra.mxu0 0.0
          %2547 = vmatprep.subr.mxu0 0.0
          %2548 = vmatpush1.msra.mxu0 0.0
          %2549 = vmatprep.subr.mxu0 0.0
          %2550 = vmatpush1.msra.mxu0 0.0
          %2551 = vmatprep.subr.mxu0 0.0
          %2552 = vmatpush1.msra.mxu0 0.0
          %2553 = vmatprep.subr.mxu0 0.0
          %2554 = vmatpush1.msra.mxu0 0.0
          %2555 = vmatprep.subr.mxu0 0.0
          %2556 = vmatpush1.msra.mxu0 0.0
          %2557 = vmatprep.subr.mxu0 0.0
          %2558 = vmatpush1.msra.mxu0 0.0
          %2559 = vmatprep.subr.mxu0 0.0
          %2560 = vmatpush1.msra.mxu0 0.0
          %2561 = vmatprep.subr.mxu0 0.0
          %2562 = vmatpush1.msra.mxu0 0.0
          %2563 = vmatprep.subr.mxu0 0.0
          %2564 = vmatpush1.msra.mxu0 0.0
          %2565 = vmatprep.subr.mxu0 0.0
          %2566 = vmatpush1.msra.mxu0 0.0
          %2567 = vmatprep.subr.mxu0 0.0
          %2568 = vmatpush1.msra.mxu0 0.0
          %2569 = vmatprep.subr.mxu0 0.0
          %2570 = vmatpush1.msra.mxu0 0.0
          %2571 = vmatprep.subr.mxu0 0.0
          %2572 = vmatpush1.msra.mxu0 0.0
          %2573 = vmatprep.subr.mxu0 0.0
          %2574 = vmatpush1.msra.mxu0 0.0
          %2575 = vmatprep.subr.mxu0 0.0
          %2576 = vmatpush1.msra.mxu0 0.0
          %2577 = vmatprep.subr.mxu0 0.0
          %2578 = vmatpush1.msra.mxu0 0.0
          %2579 = vmatprep.subr.mxu0 0.0
          %2580 = vmatpush1.msra.mxu0 0.0
          %2581 = vmatprep.subr.mxu0 0.0
          %2582 = vmatpush1.msra.mxu0 0.0
          %2583 = vmatprep.subr.mxu0 0.0
          %2584 = vmatpush1.msra.mxu0 0.0
          %2585 = vmatprep.subr.mxu0 0.0
          %2586 = vmatpush1.msra.mxu0 0.0
          %2587 = vmatprep.subr.mxu0 0.0
          %2588 = vmatpush1.msra.mxu0 0.0
          %2589 = vmatprep.subr.mxu0 0.0
          %2590 = vmatpush1.msra.mxu0 0.0
          %2591 = vmatprep.mubr.f32.mxu0 0.0
          %2592 = vmatmul.mubr.f32.gmra.mrb[0].mxu0 %v2525
          %v2593 = vpop.f32.mrb[0].mxu0
          %v2594 = vadd.f32 0.0, %v2593
          %v2595 = vpop.f32.mrb[0].mxu0
          %2596 = vdwg.mxu0
          %2597 = vmatprep.subr.mxu0 0.0
          %2598 = vmatpush1.msra.mxu0 1.0
          %2599 = vmatprep.subr.mxu0 0.0
          %2600 = vmatpush1.msra.mxu0 0.0
          %2601 = vmatprep.subr.mxu0 0.0
          %2602 = vmatpush1.msra.mxu0 0.0
          %2603 = vmatprep.subr.mxu0 0.0
          %2604 = vmatpush1.msra.mxu0 0.0
          %2605 = vmatprep.subr.mxu0 0.0
          %2606 = vmatpush1.msra.mxu0 0.0
          %2607 = vmatprep.subr.mxu0 0.0
          %2608 = vmatpush1.msra.mxu0 0.0
          %2609 = vmatprep.subr.mxu0 0.0
          %2610 = vmatpush1.msra.mxu0 0.0
          %2611 = vmatprep.subr.mxu0 0.0
          %2612 = vmatpush1.msra.mxu0 0.0
          %2613 = vmatprep.subr.mxu0 0.0
          %2614 = vmatpush1.msra.mxu0 0.0
          %2615 = vmatprep.subr.mxu0 0.0
          %2616 = vmatpush1.msra.mxu0 0.0
          %2617 = vmatprep.subr.mxu0 0.0
          %2618 = vmatpush1.msra.mxu0 0.0
          %2619 = vmatprep.subr.mxu0 0.0
          %2620 = vmatpush1.msra.mxu0 0.0
          %2621 = vmatprep.subr.mxu0 0.0
          %2622 = vmatpush1.msra.mxu0 0.0
          %2623 = vmatprep.subr.mxu0 0.0
          %2624 = vmatpush1.msra.mxu0 0.0
          %2625 = vmatprep.subr.mxu0 0.0
          %2626 = vmatpush1.msra.mxu0 0.0
          %2627 = vmatprep.subr.mxu0 0.0
          %2628 = vmatpush1.msra.mxu0 0.0
          %2629 = vmatprep.subr.mxu0 0.0
          %2630 = vmatpush1.msra.mxu0 0.0
          %2631 = vmatprep.subr.mxu0 0.0
          %2632 = vmatpush1.msra.mxu0 0.0
          %2633 = vmatprep.subr.mxu0 0.0
          %2634 = vmatpush1.msra.mxu0 0.0
          %2635 = vmatprep.subr.mxu0 0.0
          %2636 = vmatpush1.msra.mxu0 0.0
          %2637 = vmatprep.subr.mxu0 0.0
          %2638 = vmatpush1.msra.mxu0 0.0
          %2639 = vmatprep.subr.mxu0 0.0
          %2640 = vmatpush1.msra.mxu0 0.0
          %2641 = vmatprep.subr.mxu0 0.0
          %2642 = vmatpush1.msra.mxu0 0.0
          %2643 = vmatprep.subr.mxu0 0.0
          %2644 = vmatpush1.msra.mxu0 0.0
          %2645 = vmatprep.subr.mxu0 0.0
          %2646 = vmatpush1.msra.mxu0 0.0
          %2647 = vmatprep.subr.mxu0 0.0
          %2648 = vmatpush1.msra.mxu0 0.0
          %2649 = vmatprep.subr.mxu0 0.0
          %2650 = vmatpush1.msra.mxu0 0.0
          %2651 = vmatprep.subr.mxu0 0.0
          %2652 = vmatpush1.msra.mxu0 0.0
          %2653 = vmatprep.subr.mxu0 0.0
          %2654 = vmatpush1.msra.mxu0 0.0
          %2655 = vmatprep.subr.mxu0 0.0
          %2656 = vmatpush1.msra.mxu0 0.0
          %2657 = vmatprep.subr.mxu0 0.0
          %2658 = vmatpush1.msra.mxu0 0.0
          %2659 = vmatprep.subr.mxu0 0.0
          %2660 = vmatpush1.msra.mxu0 0.0
          %2661 = vmatprep.mubr.f32.mxu0 0.0
          %2662 = vmatmul.mubr.f32.gmra.mrb[0].mxu0 %v2525
          %v2663 = vpop.f32.mrb[0].mxu0
          %v2664 = vadd.f32 0.0, %v2663
          %v2665 = vpop.f32.mrb[0].mxu0
          %2666 = vdwg.mxu0
          %v2667 = vsub.f32 1.0, %v2664
          %2669 = vset.pattern.permute.xlu0 0
          %2670 = vperm.xlu0 %2669, %v2667
          %v2671 = vpop.permute.xlu0 %2670
          %v2673 = vmul.f32 %v1270, %v2671
          %v2674 = vadd.f32 %v2673, %v2594
          %v2675 = vld [vmem:[%s7] sm:$0xff]
          %v2676 = vld [vmem:[%s7 + $0x8] sm:$0xff]
          %v2677 = vld [vmem:[%s7 + $0x10] sm:$0xff]
          %v2678 = vld [vmem:[%s7 + $0x18] sm:$0xff]
          %v2679 = vld [vmem:[%s8] sm:$0x1]
          %v2681 = vlaneseq
          %v2682 = vshrl.u32 %v2681, 7
          %v2683 = vsub.s32 0, %v2682
          %v2684 = vrot.slane %v2679, %v2683
          %v2687 = vsel %vm1622, %v2674, 0
          %2689 = vmatprep.subr.mxu0 0.0
          %2690 = vmatpush1.msra.mxu0 %v2675
          %2691 = vmatprep.subr.mxu0 0.0
          %2692 = vmatpush1.msra.mxu0 %v2676
          %2693 = vmatprep.subr.mxu0 0.0
          %2694 = vmatpush1.msra.mxu0 %v2677
          %2695 = vmatprep.subr.mxu0 0.0
          %2696 = vmatpush1.msra.mxu0 %v2678
          %2697 = vmatprep.subr.mxu0 0.0
          %2698 = vmatpush1.msra.mxu0 0.0
          %2699 = vmatprep.subr.mxu0 0.0
          %2700 = vmatpush1.msra.mxu0 0.0
          %2701 = vmatprep.subr.mxu0 0.0
          %2702 = vmatpush1.msra.mxu0 0.0
          %2703 = vmatprep.subr.mxu0 0.0
          %2704 = vmatpush1.msra.mxu0 0.0
          %2705 = vmatprep.subr.mxu0 0.0
          %2706 = vmatpush1.msra.mxu0 0.0
          %2707 = vmatprep.subr.mxu0 0.0
          %2708 = vmatpush1.msra.mxu0 0.0
          %2709 = vmatprep.subr.mxu0 0.0
          %2710 = vmatpush1.msra.mxu0 0.0
          %2711 = vmatprep.subr.mxu0 0.0
          %2712 = vmatpush1.msra.mxu0 0.0
          %2713 = vmatprep.subr.mxu0 0.0
          %2714 = vmatpush1.msra.mxu0 0.0
          %2715 = vmatprep.subr.mxu0 0.0
          %2716 = vmatpush1.msra.mxu0 0.0
          %2717 = vmatprep.subr.mxu0 0.0
          %2718 = vmatpush1.msra.mxu0 0.0
          %2719 = vmatprep.subr.mxu0 0.0
          %2720 = vmatpush1.msra.mxu0 0.0
          %2721 = vmatprep.subr.mxu0 0.0
          %2722 = vmatpush1.msra.mxu0 0.0
          %2723 = vmatprep.subr.mxu0 0.0
          %2724 = vmatpush1.msra.mxu0 0.0
          %2725 = vmatprep.subr.mxu0 0.0
          %2726 = vmatpush1.msra.mxu0 0.0
          %2727 = vmatprep.subr.mxu0 0.0
          %2728 = vmatpush1.msra.mxu0 0.0
          %2729 = vmatprep.subr.mxu0 0.0
          %2730 = vmatpush1.msra.mxu0 0.0
          %2731 = vmatprep.subr.mxu0 0.0
          %2732 = vmatpush1.msra.mxu0 0.0
          %2733 = vmatprep.subr.mxu0 0.0
          %2734 = vmatpush1.msra.mxu0 0.0
          %2735 = vmatprep.subr.mxu0 0.0
          %2736 = vmatpush1.msra.mxu0 0.0
          %2737 = vmatprep.subr.mxu0 0.0
          %2738 = vmatpush1.msra.mxu0 0.0
          %2739 = vmatprep.subr.mxu0 0.0
          %2740 = vmatpush1.msra.mxu0 0.0
          %2741 = vmatprep.subr.mxu0 0.0
          %2742 = vmatpush1.msra.mxu0 0.0
          %2743 = vmatprep.subr.mxu0 0.0
          %2744 = vmatpush1.msra.mxu0 0.0
          %2745 = vmatprep.subr.mxu0 0.0
          %2746 = vmatpush1.msra.mxu0 0.0
          %2747 = vmatprep.subr.mxu0 0.0
          %2748 = vmatpush1.msra.mxu0 0.0
          %2749 = vmatprep.subr.mxu0 0.0
          %2750 = vmatpush1.msra.mxu0 0.0
          %2751 = vmatprep.subr.mxu0 0.0
          %2752 = vmatpush1.msra.mxu0 0.0
          %2753 = vmatprep.mubr.f32.mxu0 0.0
          %2754 = vmatmul.mubr.f32.gmra.mrb[0].mxu0 %v2687
          %v2755 = vpop.f32.mrb[0].mxu0
          %v2756 = vadd.f32 %v2684, %v2755
          %v2757 = vpop.f32.mrb[0].mxu0
          %2758 = vdwg.mxu0
          %v2759 = vmax.f32 %v2756, 0.0
          %v2760 = vld [vmem:[%s9] sm:$0xff]
          %v2761 = vld [vmem:[%s9 + $0x8] sm:$0xff]
          %v2762 = vld [vmem:[%s10] sm:$0x1]
          %v2764 = vlaneseq
          %v2765 = vshrl.u32 %v2764, 7
          %v2766 = vsub.s32 0, %v2765
          %v2767 = vrot.slane %v2762, %v2766
          %vm2769 = vcmask 130048
          %v2771 = vsel %vm2769, %v2759, 0
          %2773 = vmatprep.subr.mxu0 0.0
          %2774 = vmatpush1.msra.mxu0 %v2760
          %2775 = vmatprep.subr.mxu0 0.0
          %2776 = vmatpush1.msra.mxu0 %v2761
          %2777 = vmatprep.subr.mxu0 0.0
          %2778 = vmatpush1.msra.mxu0 0.0
          %2779 = vmatprep.subr.mxu0 0.0
          %2780 = vmatpush1.msra.mxu0 0.0
          %2781 = vmatprep.subr.mxu0 0.0
          %2782 = vmatpush1.msra.mxu0 0.0
          %2783 = vmatprep.subr.mxu0 0.0
          %2784 = vmatpush1.msra.mxu0 0.0
          %2785 = vmatprep.subr.mxu0 0.0
          %2786 = vmatpush1.msra.mxu0 0.0
          %2787 = vmatprep.subr.mxu0 0.0
          %2788 = vmatpush1.msra.mxu0 0.0
          %2789 = vmatprep.subr.mxu0 0.0
          %2790 = vmatpush1.msra.mxu0 0.0
          %2791 = vmatprep.subr.mxu0 0.0
          %2792 = vmatpush1.msra.mxu0 0.0
          %2793 = vmatprep.subr.mxu0 0.0
          %2794 = vmatpush1.msra.mxu0 0.0
          %2795 = vmatprep.subr.mxu0 0.0
          %2796 = vmatpush1.msra.mxu0 0.0
          %2797 = vmatprep.subr.mxu0 0.0
          %2798 = vmatpush1.msra.mxu0 0.0
          %2799 = vmatprep.subr.mxu0 0.0
          %2800 = vmatpush1.msra.mxu0 0.0
          %2801 = vmatprep.subr.mxu0 0.0
          %2802 = vmatpush1.msra.mxu0 0.0
          %2803 = vmatprep.subr.mxu0 0.0
          %2804 = vmatpush1.msra.mxu0 0.0
          %2805 = vmatprep.subr.mxu0 0.0
          %2806 = vmatpush1.msra.mxu0 0.0
          %2807 = vmatprep.subr.mxu0 0.0
          %2808 = vmatpush1.msra.mxu0 0.0
          %2809 = vmatprep.subr.mxu0 0.0
          %2810 = vmatpush1.msra.mxu0 0.0
          %2811 = vmatprep.subr.mxu0 0.0
          %2812 = vmatpush1.msra.mxu0 0.0
          %2813 = vmatprep.subr.mxu0 0.0
          %2814 = vmatpush1.msra.mxu0 0.0
          %2815 = vmatprep.subr.mxu0 0.0
          %2816 = vmatpush1.msra.mxu0 0.0
          %2817 = vmatprep.subr.mxu0 0.0
          %2818 = vmatpush1.msra.mxu0 0.0
          %2819 = vmatprep.subr.mxu0 0.0
          %2820 = vmatpush1.msra.mxu0 0.0
          %2821 = vmatprep.subr.mxu0 0.0
          %2822 = vmatpush1.msra.mxu0 0.0
          %2823 = vmatprep.subr.mxu0 0.0
          %2824 = vmatpush1.msra.mxu0 0.0
          %2825 = vmatprep.subr.mxu0 0.0
          %2826 = vmatpush1.msra.mxu0 0.0
          %2827 = vmatprep.subr.mxu0 0.0
          %2828 = vmatpush1.msra.mxu0 0.0
          %2829 = vmatprep.subr.mxu0 0.0
          %2830 = vmatpush1.msra.mxu0 0.0
          %2831 = vmatprep.subr.mxu0 0.0
          %2832 = vmatpush1.msra.mxu0 0.0
          %2833 = vmatprep.subr.mxu0 0.0
          %2834 = vmatpush1.msra.mxu0 0.0
          %2835 = vmatprep.subr.mxu0 0.0
          %2836 = vmatpush1.msra.mxu0 0.0
          %2837 = vmatprep.mubr.f32.mxu0 0.0
          %2838 = vmatmul.mubr.f32.gmra.mrb[0].mxu0 %v2771
          %v2839 = vpop.f32.mrb[0].mxu0
          %v2840 = vadd.f32 %v2767, %v2839
          %v2841 = vpop.f32.mrb[0].mxu0
          %2842 = vdwg.mxu0
          %2843 = vst.msk [vmem:[#allocation2] sm:$0xff] %vm1622, %v2674
          %2844 = vst.msk [vmem:[#allocation3] sm:$0xff] %vm1624, %v2840
          %2845 = vmatprep.subr.mxu0 0.0
          %2846 = vmatpush1.msra.mxu0 %v2840
          %2847 = vmatprep.subr.mxu0 0.0
          %2848 = vmatpush1.msra.mxu0 0.0
          %2849 = vmatprep.subr.mxu0 0.0
          %2850 = vmatpush1.msra.mxu0 0.0
          %2851 = vmatprep.subr.mxu0 0.0
          %2852 = vmatpush1.msra.mxu0 0.0
          %2853 = vmatprep.subr.mxu0 0.0
          %2854 = vmatpush1.msra.mxu0 0.0
          %2855 = vmatprep.subr.mxu0 0.0
          %2856 = vmatpush1.msra.mxu0 0.0
          %2857 = vmatprep.subr.mxu0 0.0
          %2858 = vmatpush1.msra.mxu0 0.0
          %2859 = vmatprep.subr.mxu0 0.0
          %2860 = vmatpush1.msra.mxu0 0.0
          %2861 = vmatprep.subr.mxu0 0.0
          %2862 = vmatpush1.msra.mxu0 0.0
          %2863 = vmatprep.subr.mxu0 0.0
          %2864 = vmatpush1.msra.mxu0 0.0
          %2865 = vmatprep.subr.mxu0 0.0
          %2866 = vmatpush1.msra.mxu0 0.0
          %2867 = vmatprep.subr.mxu0 0.0
          %2868 = vmatpush1.msra.mxu0 0.0
          %2869 = vmatprep.subr.mxu0 0.0
          %2870 = vmatpush1.msra.mxu0 0.0
          %2871 = vmatprep.subr.mxu0 0.0
          %2872 = vmatpush1.msra.mxu0 0.0
          %2873 = vmatprep.subr.mxu0 0.0
          %2874 = vmatpush1.msra.mxu0 0.0
          %2875 = vmatprep.subr.mxu0 0.0
          %2876 = vmatpush1.msra.mxu0 0.0
          %2877 = vmatprep.subr.mxu0 0.0
          %2878 = vmatpush1.msra.mxu0 0.0
          %2879 = vmatprep.subr.mxu0 0.0
          %2880 = vmatpush1.msra.mxu0 0.0
          %2881 = vmatprep.subr.mxu0 0.0
          %2882 = vmatpush1.msra.mxu0 0.0
          %2883 = vmatprep.subr.mxu0 0.0
          %2884 = vmatpush1.msra.mxu0 0.0
          %2885 = vmatprep.subr.mxu0 0.0
          %2886 = vmatpush1.msra.mxu0 0.0
          %2887 = vmatprep.subr.mxu0 0.0
          %2888 = vmatpush1.msra.mxu0 0.0
          %2889 = vmatprep.subr.mxu0 0.0
          %2890 = vmatpush1.msra.mxu0 0.0
          %2891 = vmatprep.subr.mxu0 0.0
          %2892 = vmatpush1.msra.mxu0 0.0
          %2893 = vmatprep.subr.mxu0 0.0
          %2894 = vmatpush1.msra.mxu0 0.0
          %2895 = vmatprep.subr.mxu0 0.0
          %2896 = vmatpush1.msra.mxu0 0.0
          %2897 = vmatprep.subr.mxu0 0.0
          %2898 = vmatpush1.msra.mxu0 0.0
          %2899 = vmatprep.subr.mxu0 0.0
          %2900 = vmatpush1.msra.mxu0 0.0
          %2901 = vmatprep.subr.mxu0 0.0
          %2902 = vmatpush1.msra.mxu0 0.0
          %2903 = vmatprep.subr.mxu0 0.0
          %2904 = vmatpush1.msra.mxu0 0.0
          %2905 = vmatprep.subr.mxu0 0.0
          %2906 = vmatpush1.msra.mxu0 0.0
          %2907 = vmatprep.subr.mxu0 0.0
          %2908 = vmatpush1.msra.mxu0 0.0
          %2909 = vmatprep.mubr.f32.mxu0 0.0
          %2910 = vmatmul.mubr.f32.gmra.mrb[0].mxu0 %v1631
          %v2911 = vpop.f32.mrb[0].mxu0
          %v2912 = vadd.f32 0.0, %v2911
          %v2913 = vpop.f32.mrb[0].mxu0
          %2914 = vdwg.mxu0
          %v2915 = vsub.f32 %v2912, -4.6051702
          %v2916 = vsub.f32 %v1704, %v2912
          %v2917 = vmul.f32 %v2916, %v2916
          %v2918 = vadd.f32 %v2917, 0.0001
          %v2919 = vmul.f32 %v2918, 0.5
          %v2920 = vmul.f32 %v2912, -2.0
          %v2921 = vmul.f32 %v2920, 1.442695
          %v2922 = vpow.pop %v2921
          %2924 = vrot.lane.b32.xlu0 %v2922, 125
          %v2925 = vpop.permute.xlu0 %2924
          %v2927 = vmul.f32 %v2919, %v2925
          %2929 = vrot.lane.b32.xlu0 %v2927, 3
          %v2930 = vpop.permute.xlu0 %2929
          %v2932 = vadd.f32 %v2915, %v2930
          %s2933 = sld [smem:[#allocation4 + $0x2]]
          %2934 = vrot.lane.b32.xlu0 %v1628, 3
          %v2935 = vpop.permute.xlu0 %2934
          %v2937 = vmul.f32 %v2932, %v2935
          %2939 = vrot.lane.b32.xlu0 %v2937, 125
          %v2940 = vpop.permute.xlu0 %2939
          %v2942 = vsel %vm1722, %v2940, 0.0
          %2943 = vadd.xlane.f32.xlu0 %v2942
          %v2944 = vpop.xlane.xlu0 %2943
          %v2945 = vrot.slane %v2944, 4
          %v2946 = vadd.f32 %v2944, %v2945
          %v2947 = vrot.slane %v2946, 2
          %v2948 = vadd.f32 %v2946, %v2947
          %v2949 = vrot.slane %v2948, 1
          %v2950 = vadd.f32 %v2948, %v2949
          %s2951 = vtos %v2950
          %s2952 = sadd.f32 %s2933, %s2951
          %s2953 = scalar_lea.smem [#allocation4], 2
          %2954 = sst [smem:[%s2953]] %s2952
        $region163: #{_fused_forward.1} parent=119 // pred_fallthru
          _
        %p2955 = scmp.eq.s32.totalorder %s54, 3
        // Predicated region
        $region164: #{_fused_forward.1} parent=119 // pred_check
          %p2956 = pneg %p2955
        $region165: #{_fused_forward.1} parent=119 // pred_check_branch
          %2958 = sbr.rel (%p2956) target = $region167
        $region166: #{_fused_forward.1} parent=119 // pred_region
          %v2959 = vld [vmem:[#allocation2] sm:$0xff]
          %2960 = vst.msk [vmem:[#allocation20] sm:$0xff] %vm1622, %v2959
          %s2961 = sld [smem:[#allocation4]]
          %s2962 = sld [smem:[#allocation4 + $0x1]]
          %s2963 = sld [smem:[#allocation4 + $0x2]]
          %s2964 = scalar_lea.smem [#allocation21], 0
          %2965 = sst [smem:[%s2964]] %s2961
          %s2966 = scalar_lea.smem [#allocation21], 1
          %2967 = sst [smem:[%s2966]] %s2962
          %s2968 = scalar_lea.smem [#allocation21], 2
          %2969 = sst [smem:[%s2968]] %s2963
          %s2970 = smul.f32 %s2963, 0.1
          %s2971 = sadd.f32 %s2961, %s2970
          %s2972 = sadd.f32 %s2971, %s2962
          %s2973 = scalar_lea.smem [#allocation21], 3
          %2974 = sst [smem:[%s2973]] %s2972
        $region167: #{_fused_forward.1} parent=119 // pred_fallthru
          _
        // Predicated region
        $region168: #{_fused_forward.1} parent=119 // pred_check
          %p2975 = pneg %p607
        $region169: #{_fused_forward.1} parent=119 // pred_check_branch
          %2977 = sbr.rel (%p2975) target = $region171
        $region170: #{_fused_forward.1} parent=119 // pred_region
          %s2979 = ssub.s32 128, 128
          %2980 = vsyncadd [#allocation10], %s2979
          %s2982 = sshll.u32 [#allocation20], 4
          %s2983 = int_to_ptr.vmem [resolvable:$true] %s2982
          %2985 = dma.vmem_to_hbm [thread:$0]  %s2983, 128, %s27, [#allocation10]
        $region171: #{_fused_forward.1} parent=119 // pred_fallthru
          _
        // Predicated region
        $region172: #{_fused_forward.1} parent=119 // pred_check
          %p2986 = pneg %p628
        $region173: #{_fused_forward.1} parent=119 // pred_check_branch
          %2988 = sbr.rel (%p2986) target = $region175
        $region174: #{_fused_forward.1} parent=119 // pred_region
          %s2990 = ssub.s32 16, 16
          %2991 = vsyncadd [#allocation11], %s2990
          %2994 = dma.smem_to_hbm [#allocation21], 16, %s28, [#allocation11]
        $region175: #{_fused_forward.1} parent=119 // pred_fallthru
          _
        // Predicated region
        $region176: #{_fused_forward.1} parent=119 // pred_check
          %p2995 = pneg %p607
        $region177: #{_fused_forward.1} parent=119 // pred_check_branch
          %2997 = sbr.rel (%p2995) target = $region179
        $region178: #{_fused_forward.1} parent=119 // pred_region
          %2998 = dma.done [#allocation10], 128
        $region179: #{_fused_forward.1} parent=119 // pred_fallthru
          _
        // Predicated region
        $region180: #{_fused_forward.1} parent=119 // pred_check
          %p2999 = pneg %p628
        $region181: #{_fused_forward.1} parent=119 // pred_check_branch
          %3001 = sbr.rel (%p2999) target = $region183
        $region182: #{_fused_forward.1} parent=119 // pred_region
          %3002 = dma.done [#allocation11], 16
        $region183: #{_fused_forward.1} parent=119 // pred_fallthru
          _
        %3003 = sfence
      $region120: #{_fused_forward.1} parent=5 // pred_fallthru
        _
      %p3004 = scmp.le.s32.totalorder 2, %s49
      // Predicated region
      $region184: #{_fused_forward.1} parent=5 // pred_check
        %p3005 = pneg %p3004
      $region185: #{_fused_forward.1} parent=5 // pred_check_branch
        %3007 = sbr.rel (%p3005) target = $region187
      $region186: #{_fused_forward.1} parent=5 // pred_region
        %s3008 = ssub.s32 %s49, 2
      $region187: #{_fused_forward.1} parent=5 // pred_fallthru
        _
    $region6: #{_fused_forward.1} parent=1 // loop_footer
      %s53 = sadd.s32 1, %s49
    $region7: #{_fused_forward.1} parent=1 // loop_footer_branch
      %48 = sbr.rel target = $region3
    $region8: #{_fused_forward.1} parent=1 // loop_exit
      _
    %3009 = vsyncpa [#allocation9], 1
    %s3010 = scalar_lea.sflag [#allocation9], 1
    %3011 = vsyncpa %s3010, 1
    %3012 = vsyncpa [#allocation13], 1
    %3013 = vsyncpa [#allocation16], 1
    %3014 = vsyncpa [#allocation19], 1
    %3015 = vsyncpa [#allocation10], 1
    %s3016 = scalar_lea.sflag [#allocation10], 1
    %3017 = vsyncpa %s3016, 1
    %3018 = vsyncpa [#allocation11], 1
    %s3019 = scalar_lea.sflag [#allocation11], 1
    %3020 = vsyncpa %s3019, 1

</llo_original>
